<compile_context>
chip_gen: v7x
topology: tpu7x:2x2x1
jax: 0.10.0
libtpu: 0.0.40
codegen_flags: <defaults>
</compile_context>

<pallas_src>
import functools
import math

import jax
import jax.numpy as jnp
from jax.experimental import pallas as pl
from jax.experimental.pallas import tpu as pltpu


# ----------------------------- in-kernel helpers -----------------------------

def _layernorm(x, gamma, beta, eps):
    # one-pass: sum and sum-of-squares, then mean/var.
    # NOTE: eps=1e-6 matches the module's explicit nn.LayerNorm(d_model, eps=1e-06).
    d = x.shape[-1]
    inv_d = 1.0 / d
    s1 = jnp.sum(x, axis=-1, keepdims=True)
    s2 = jnp.sum(x * x, axis=-1, keepdims=True)
    mu = s1 * inv_d
    var = s2 * inv_d - mu * mu
    return (x - mu) * jax.lax.rsqrt(var + eps) * gamma + beta


def _attn_tail(q, k, v, bias, o_scr, wo, bo, x_resid, g, b,
               *, n_head, d_k, d_v, B, Lq, Lk, eps):
    """Scaled-dot-product attention (scale already folded into q) over all heads,
    fused output projection, residual add and post-LayerNorm.

    q: (B*Lq, H*dk) f32 (pre-scaled), k: (B*Lk, H*dk) f32, v: (B*Lk, H*dv) f32,
    bias: (B, Lq, Lk) additive f32 (0 / -1e9).
    """
    q3 = q.reshape(B, Lq, n_head * d_k)
    k3 = k.reshape(B, Lk, n_head * d_k)
    v3 = v.reshape(B, Lk, n_head * d_v)

    for h in range(n_head):  # static unroll; each step is batched over B
        qh = q3[:, :, h * d_k:(h + 1) * d_k]                         # (B, Lq, dk)
        kh = k3[:, :, h * d_k:(h + 1) * d_k]                         # (B, Lk, dk)
        vh = v3[:, :, h * d_v:(h + 1) * d_v].astype(jnp.bfloat16)    # (B, Lk, dv)
        s = jnp.einsum('bqd,bkd->bqk', qh, kh,
                       preferred_element_type=jnp.float32) + bias
        m = jnp.max(s, axis=-1, keepdims=True)
        p = jnp.exp(s - m)
        denom = jnp.sum(p, axis=-1, keepdims=True)
        p = p * pl.reciprocal(denom, approx=True)                    # EUP, not VALU
        oh = jnp.einsum('bqk,bkd->bqd', p.astype(jnp.bfloat16), vh,
                        preferred_element_type=jnp.float32)          # (B, Lq, dv)
        o_scr[:, h * d_v:(h + 1) * d_v] = oh.reshape(B * Lq, d_v)

    # single fused output projection over all heads
    out = jnp.dot(o_scr[...].astype(jnp.bfloat16), wo,
                  preferred_element_type=jnp.float32) + bo
    out = out + x_resid                                              # residual
    return _layernorm(out, g, b, eps)


def _ffn(x, w1, b1, w2, b2, g, b, eps):
    h = jnp.dot(x.astype(jnp.bfloat16), w1, preferred_element_type=jnp.float32) + b1
    h = jnp.maximum(h, 0.0)
    y = jnp.dot(h.astype(jnp.bfloat16), w2, preferred_element_type=jnp.float32) + b2
    return _layernorm(y + x, g, b, eps)


# ----------------------------- fused decoder kernel ---------------------------

def decoder_kernel(emb_ref, pos_ref, enc_ref, sbias_ref, cbias_ref,
                   s_wqkv, s_bqkv, s_wo, s_bo, s_g, s_b,
                   c_wq, c_bq, c_wkv, c_bkv, c_wo, c_bo, c_g, c_b,
                   f_w1, f_b1, f_w2, f_b2, f_g, f_b,
                   lng_ref, lnb_ref,
                   o_ref, x_scr, o_scr,
                   *, n_head, d_k, d_v, B, Lt, Ls, eps):
    l = pl.program_id(0)
    D = emb_ref.shape[-1]
    hdk = n_head * d_k

    # step 0: fused embedding add (word + positional); seed carried activation
    @pl.when(l == 0)
    def _():
        x0 = emb_ref[...] + pos_ref[...]            # (B, Lt, D) + (1, Lt, D)
        x_scr[...] = x0.reshape(B * Lt, D)

    x = x_scr[...]                                   # (B*Lt, D) f32, carried
    enc = enc_ref[...]                               # (B*Ls, D) f32 (pre-flattened)
    sbias = sbias_ref[...]                           # (B, Lt, Lt)
    cbias = cbias_ref[...]                           # (B, Lt, Ls)

    scale = 1.0 / math.sqrt(d_k)

    # ---- masked self-attention: ONE fused QKV projection ----
    xb = x.astype(jnp.bfloat16)
    qkv = jnp.dot(xb, s_wqkv[0], preferred_element_type=jnp.float32) + s_bqkv[0]
    q = qkv[:, :hdk] * scale
    k = qkv[:, hdk:2 * hdk]
    v = qkv[:, 2 * hdk:]
    x = _attn_tail(q, k, v, sbias, o_scr, s_wo[0], s_bo[0], x, s_g[0], s_b[0],
                   n_head=n_head, d_k=d_k, d_v=d_v, B=B, Lq=Lt, Lk=Lt, eps=eps)

    # ---- cross-attention: Q from x, ONE fused KV projection from enc ----
    xb = x.astype(jnp.bfloat16)
    encb = enc.astype(jnp.bfloat16)
    q = (jnp.dot(xb, c_wq[0], preferred_element_type=jnp.float32) + c_bq[0]) * scale
    kv = jnp.dot(encb, c_wkv[0], preferred_element_type=jnp.float32) + c_bkv[0]
    k = kv[:, :hdk]
    v = kv[:, hdk:]
    x = _attn_tail(q, k, v, cbias, o_scr, c_wo[0], c_bo[0], x, c_g[0], c_b[0],
                   n_head=n_head, d_k=d_k, d_v=d_v, B=B, Lq=Lt, Lk=Ls, eps=eps)

    # ---- position-wise FFN + residual + LN ----
    x = _ffn(x, f_w1[0], f_b1[0], f_w2[0], f_b2[0], f_g[0], f_b[0], eps)

    x_scr[...] = x

    # final LayerNorm folded into the last layer step; single HBM store of the output
    @pl.when(l == pl.num_programs(0) - 1)
    def _():
        y = _layernorm(x, lng_ref[...], lnb_ref[...], eps)
        o_ref[...] = y.reshape(B, Lt, D).astype(o_ref.dtype)


# ----------------------------- pallas_call wrapper ----------------------------

def _const_spec(shape):
    n = len(shape)
    return pl.BlockSpec(tuple(shape), lambda l, n=n: (0,) * n)


def _layer_spec(shape):
    rest = tuple(shape[1:])
    n = len(rest)
    return pl.BlockSpec((1,) + rest, lambda l, n=n: (l,) + (0,) * n)


def decoder_forward(params, trg_seq, trg_attn_mask, enc_output, dec_enc_attn_mask):
    B, Lt = trg_seq.shape
    Ls = enc_output.shape[1]
    D = params["tgt_emb"].shape[1]
    n_layer = params["slf"]["wq"].shape[0]
    n_head, d_k, d_v = params["n_head"], params["d_k"], params["d_v"]

    # embedding gathers are plain-JAX glue; everything else runs inside the kernel
    emb_word = jnp.take(params["tgt_emb"], trg_seq, axis=0).astype(jnp.float32)  # (B,Lt,D)
    pos = params["pos_emb"][:Lt][None, :, :].astype(jnp.float32)                 # (1,Lt,D)
    enc_flat = enc_output.astype(jnp.float32).reshape(B * Ls, D)                 # (B*Ls,D)
    # mask -> additive bias, computed once (hoisted out of the kernel layer/head loops)
    sbias = jnp.where(trg_attn_mask > 0, 0.0, -1e9).astype(jnp.float32)          # (B,Lt,Lt)
    cbias = jnp.where(dec_enc_attn_mask > 0, 0.0, -1e9).astype(jnp.float32)      # (B,Lt,Ls)
    # TODO(synk): nn.Dropout is identity in eval mode; not applied.

    data_args = [emb_word, pos, enc_flat, sbias, cbias]

    bf16 = jnp.bfloat16
    slf, enc_p, ffn = params["slf"], params["enc"], params["ffn"]

    # fused QKV (self-attn) / fused KV (cross-attn) weight concatenation (wrapper-side,
    # once) -> wider MXU operands, fewer matmul pushes per layer step.
    s_wqkv = jnp.concatenate([slf["wq"], slf["wk"], slf["wv"]], axis=-1).astype(bf16)
    s_bqkv = jnp.concatenate([slf["bq"], slf["bk"], slf["bv"]], axis=-1)
    c_wkv = jnp.concatenate([enc_p["wk"], enc_p["wv"]], axis=-1).astype(bf16)
    c_bkv = jnp.concatenate([enc_p["bk"], enc_p["bv"]], axis=-1)

    layer_args = [
        # self-attention
        s_wqkv, s_bqkv, slf["wo"].astype(bf16), slf["bo"], slf["g"], slf["b"],
        # cross-attention
        enc_p["wq"].astype(bf16), enc_p["bq"], c_wkv, c_bkv,
        enc_p["wo"].astype(bf16), enc_p["bo"], enc_p["g"], enc_p["b"],
        # FFN
        ffn["w1"].astype(bf16), ffn["b1"], ffn["w2"].astype(bf16), ffn["b2"],
        ffn["g"], ffn["b"],
    ]

    final_args = [params["ln_g"], params["ln_b"]]

    in_specs = ([_const_spec(a.shape) for a in data_args]
                + [_layer_spec(a.shape) for a in layer_args]
                + [_const_spec(a.shape) for a in final_args])

    kernel = functools.partial(decoder_kernel, n_head=n_head, d_k=d_k, d_v=d_v,
                               B=B, Lt=Lt, Ls=Ls, eps=1e-6)

    out = pl.pallas_call(
        kernel,
        out_shape=jax.ShapeDtypeStruct((B, Lt, D), jnp.float32),
        grid_spec=pltpu.PrefetchScalarGridSpec(
            num_scalar_prefetch=0,
            grid=(n_layer,),
            in_specs=in_specs,
            out_specs=pl.BlockSpec((B, Lt, D), lambda l: (0, 0, 0)),
            scratch_shapes=[pltpu.VMEM((B * Lt, D), jnp.float32),              # carried x
                            pltpu.VMEM((B * Lt, n_head * d_v), jnp.float32)],  # head concat
        ),
        compiler_params=pltpu.CompilerParams(dimension_semantics=("arbitrary",)),
    )(*data_args, *layer_args, *final_args)
    return out, []


# ----------------------------- parameter init --------------------------------

def init_params(key, *, n_trg_vocab, d_word_vec, n_layer, n_head, d_model,
                d_inner, pad_idx, max_seq_len):
    d_k = d_v = d_model // n_head
    ks = iter(jax.random.split(key, 16))

    def lin(kin, kout):
        w = jax.random.normal(next(ks), (n_layer, kin, kout), jnp.float32) * 0.02
        b = jnp.zeros((n_layer, 1, kout), jnp.float32)
        return w, b

    def mha_params():
        wq, bq = lin(d_model, n_head * d_k)
        wk, bk = lin(d_model, n_head * d_k)
        wv, bv = lin(d_model, n_head * d_v)
        wo, bo = lin(n_head * d_v, d_model)
        return dict(wq=wq, bq=bq, wk=wk, bk=bk, wv=wv, bv=bv, wo=wo, bo=bo,
                    g=jnp.ones((n_layer, 1, d_model), jnp.float32),
                    b=jnp.zeros((n_layer, 1, d_model), jnp.float32))

    def ffn_params():
        w1, b1 = lin(d_model, d_inner)
        w2, b2 = lin(d_inner, d_model)
        return dict(w1=w1, b1=b1, w2=w2, b2=b2,
                    g=jnp.ones((n_layer, 1, d_model), jnp.float32),
                    b=jnp.zeros((n_layer, 1, d_model), jnp.float32))

    tgt_emb = jax.random.normal(next(ks), (n_trg_vocab, d_word_vec), jnp.float32) * 0.02
    tgt_emb = tgt_emb.at[pad_idx].set(0.0)   # padding_idx row is zero
    pos_emb = jax.random.normal(next(ks), (max_seq_len, d_word_vec), jnp.float32) * 0.02

    return dict(tgt_emb=tgt_emb, pos_emb=pos_emb,
                slf=mha_params(), enc=mha_params(), ffn=ffn_params(),
                ln_g=jnp.ones((1, d_model), jnp.float32),
                ln_b=jnp.zeros((1, d_model), jnp.float32),
                n_head=n_head, d_k=d_k, d_v=d_v)


# ----------------------------- main -------------------------------------------

if __name__ == "__main__":
    n_trg_vocab, d_model, d_inner = 50, 32, 64
    n_layer, n_head = 2, 4
    pad_idx, max_seq_len = 0, 32
    B, Lt, Ls = 2, 8, 8

    key = jax.random.PRNGKey(0)
    kp, k1, k2 = jax.random.split(key, 3)

    params = init_params(kp, n_trg_vocab=n_trg_vocab, d_word_vec=d_model,
                         n_layer=n_layer, n_head=n_head, d_model=d_model,
                         d_inner=d_inner, pad_idx=pad_idx, max_seq_len=max_seq_len)

    trg_seq = jax.random.randint(k1, (B, Lt), 0, n_trg_vocab, dtype=jnp.int32)
    enc_output = jax.random.normal(k2, (B, Ls, d_model), jnp.float32)

    # causal self-attention mask (1 = attend), full cross-attention mask
    trg_attn_mask = jnp.tril(jnp.ones((Lt, Lt), jnp.float32))[None].repeat(B, axis=0)
    dec_enc_attn_mask = jnp.ones((B, Lt, Ls), jnp.float32)

    dec_output, _ = decoder_forward(params, trg_seq, trg_attn_mask,
                                    enc_output, dec_enc_attn_mask)
    dec_output = jax.block_until_ready(dec_output)
    assert dec_output.shape == (B, Lt, d_model)
    assert bool(jnp.all(jnp.isfinite(dec_output)))
    print("KERNEL_OK")
</pallas_src>

<mosaic_0001>
module attributes {stable_mosaic.version = 11 : i64} {
  func.func @decoder_kernel(%arg0: i32, %arg1: memref<2x8x32xf32, #tpu.memory_space<vmem>>, %arg2: memref<1x8x32xf32, #tpu.memory_space<vmem>>, %arg3: memref<16x32xf32, #tpu.memory_space<vmem>>, %arg4: memref<2x8x8xf32, #tpu.memory_space<vmem>>, %arg5: memref<2x8x8xf32, #tpu.memory_space<vmem>>, %arg6: memref<1x32x96xbf16, #tpu.memory_space<vmem>>, %arg7: memref<1x1x96xf32, #tpu.memory_space<vmem>>, %arg8: memref<1x32x32xbf16, #tpu.memory_space<vmem>>, %arg9: memref<1x1x32xf32, #tpu.memory_space<vmem>>, %arg10: memref<1x1x32xf32, #tpu.memory_space<vmem>>, %arg11: memref<1x1x32xf32, #tpu.memory_space<vmem>>, %arg12: memref<1x32x32xbf16, #tpu.memory_space<vmem>>, %arg13: memref<1x1x32xf32, #tpu.memory_space<vmem>>, %arg14: memref<1x32x64xbf16, #tpu.memory_space<vmem>>, %arg15: memref<1x1x64xf32, #tpu.memory_space<vmem>>, %arg16: memref<1x32x32xbf16, #tpu.memory_space<vmem>>, %arg17: memref<1x1x32xf32, #tpu.memory_space<vmem>>, %arg18: memref<1x1x32xf32, #tpu.memory_space<vmem>>, %arg19: memref<1x1x32xf32, #tpu.memory_space<vmem>>, %arg20: memref<1x32x64xbf16, #tpu.memory_space<vmem>>, %arg21: memref<1x1x64xf32, #tpu.memory_space<vmem>>, %arg22: memref<1x64x32xbf16, #tpu.memory_space<vmem>>, %arg23: memref<1x1x32xf32, #tpu.memory_space<vmem>>, %arg24: memref<1x1x32xf32, #tpu.memory_space<vmem>>, %arg25: memref<1x1x32xf32, #tpu.memory_space<vmem>>, %arg26: memref<1x32xf32, #tpu.memory_space<vmem>>, %arg27: memref<1x32xf32, #tpu.memory_space<vmem>>, %arg28: memref<2x8x32xf32, #tpu.memory_space<vmem>>, %arg29: memref<16x32xf32, #tpu.memory_space<vmem>>, %arg30: memref<16x32xf32, #tpu.memory_space<vmem>>) attributes {dimension_semantics = [#tpu.dimension_semantics<arbitrary>], iteration_bounds = array<i64: 2>, scalar_prefetch = 0 : i64, scratch_operands = 2 : i64, tpu.core_type = #tpu.core_type<tc>, window_params = [{pipeline_mode = #tpu.pipeline_mode<synchronous>, transform_indices = @transform_0, window_bounds = array<i64: 2, 8, 32>}, {pipeline_mode = #tpu.pipeline_mode<synchronous>, transform_indices = @transform_1, window_bounds = array<i64: 1, 8, 32>}, {pipeline_mode = #tpu.pipeline_mode<synchronous>, transform_indices = @transform_2, window_bounds = array<i64: 16, 32>}, {pipeline_mode = #tpu.pipeline_mode<synchronous>, transform_indices = @transform_3, window_bounds = array<i64: 2, 8, 8>}, {pipeline_mode = #tpu.pipeline_mode<synchronous>, transform_indices = @transform_4, window_bounds = array<i64: 2, 8, 8>}, {transform_indices = @transform_5, window_bounds = array<i64: 1, 32, 96>}, {transform_indices = @transform_6, window_bounds = array<i64: 1, 1, 96>}, {transform_indices = @transform_7, window_bounds = array<i64: 1, 32, 32>}, {transform_indices = @transform_8, window_bounds = array<i64: 1, 1, 32>}, {transform_indices = @transform_9, window_bounds = array<i64: 1, 1, 32>}, {transform_indices = @transform_10, window_bounds = array<i64: 1, 1, 32>}, {transform_indices = @transform_11, window_bounds = array<i64: 1, 32, 32>}, {transform_indices = @transform_12, window_bounds = array<i64: 1, 1, 32>}, {transform_indices = @transform_13, window_bounds = array<i64: 1, 32, 64>}, {transform_indices = @transform_14, window_bounds = array<i64: 1, 1, 64>}, {transform_indices = @transform_15, window_bounds = array<i64: 1, 32, 32>}, {transform_indices = @transform_16, window_bounds = array<i64: 1, 1, 32>}, {transform_indices = @transform_17, window_bounds = array<i64: 1, 1, 32>}, {transform_indices = @transform_18, window_bounds = array<i64: 1, 1, 32>}, {transform_indices = @transform_19, window_bounds = array<i64: 1, 32, 64>}, {transform_indices = @transform_20, window_bounds = array<i64: 1, 1, 64>}, {transform_indices = @transform_21, window_bounds = array<i64: 1, 64, 32>}, {transform_indices = @transform_22, window_bounds = array<i64: 1, 1, 32>}, {transform_indices = @transform_23, window_bounds = array<i64: 1, 1, 32>}, {transform_indices = @transform_24, window_bounds = array<i64: 1, 1, 32>}, {pipeline_mode = #tpu.pipeline_mode<synchronous>, transform_indices = @transform_25, window_bounds = array<i64: 1, 32>}, {pipeline_mode = #tpu.pipeline_mode<synchronous>, transform_indices = @transform_26, window_bounds = array<i64: 1, 32>}, {pipeline_mode = #tpu.pipeline_mode<synchronous>, transform_indices = @transform_27, window_bounds = array<i64: 2, 8, 32>}]} {
    %c0_i32 = arith.constant 0 : i32
    %0 = arith.cmpi eq, %arg0, %c0_i32 : i32
    %1 = arith.extui %0 : i1 to i32
    %c0_i32_0 = arith.constant 0 : i32
    %2 = arith.cmpi ne, %1, %c0_i32_0 : i32
    scf.if %2 {
      %c0_146 = arith.constant 0 : index
      %c0_147 = arith.constant 0 : index
      %c0_148 = arith.constant 0 : index
      %327 = vector.load %arg1[%c0_146, %c0_147, %c0_148] : memref<2x8x32xf32, #tpu.memory_space<vmem>>, vector<2x8x32xf32>
      %c0_149 = arith.constant 0 : index
      %c0_150 = arith.constant 0 : index
      %c0_151 = arith.constant 0 : index
      %328 = vector.load %arg2[%c0_149, %c0_150, %c0_151] : memref<1x8x32xf32, #tpu.memory_space<vmem>>, vector<1x8x32xf32>
      %329 = vector.broadcast %328 : vector<1x8x32xf32> to vector<2x8x32xf32>
      %330 = arith.addf %327, %329 : vector<2x8x32xf32>
      %331 = vector.shape_cast %330 : vector<2x8x32xf32> to vector<16x32xf32>
      %c0_152 = arith.constant 0 : index
      %c0_153 = arith.constant 0 : index
      %332 = vector.load %arg29[%c0_152, %c0_153] : memref<16x32xf32, #tpu.memory_space<vmem>>, vector<16x32xf32>
      tpu.vector_store %arg29[%c0_152, %c0_153], %331 {strides = array<i32>} : memref<16x32xf32, #tpu.memory_space<vmem>>, vector<16x32xf32>,
    } else {
    }
    %c0 = arith.constant 0 : index
    %c0_1 = arith.constant 0 : index
    %3 = vector.load %arg29[%c0, %c0_1] : memref<16x32xf32, #tpu.memory_space<vmem>>, vector<16x32xf32>
    %c0_2 = arith.constant 0 : index
    %c0_3 = arith.constant 0 : index
    %4 = vector.load %arg3[%c0_2, %c0_3] : memref<16x32xf32, #tpu.memory_space<vmem>>, vector<16x32xf32>
    %c0_4 = arith.constant 0 : index
    %c0_5 = arith.constant 0 : index
    %c0_6 = arith.constant 0 : index
    %5 = vector.load %arg4[%c0_4, %c0_5, %c0_6] : memref<2x8x8xf32, #tpu.memory_space<vmem>>, vector<2x8x8xf32>
    %c0_7 = arith.constant 0 : index
    %c0_8 = arith.constant 0 : index
    %c0_9 = arith.constant 0 : index
    %6 = vector.load %arg5[%c0_7, %c0_8, %c0_9] : memref<2x8x8xf32, #tpu.memory_space<vmem>>, vector<2x8x8xf32>
    %7 = arith.truncf %3 : vector<16x32xf32> to vector<16x32xbf16>
    %c0_10 = arith.constant 0 : index
    %c0_11 = arith.constant 0 : index
    %c0_12 = arith.constant 0 : index
    %8 = vector.load %arg6[%c0_10, %c0_11, %c0_12] : memref<1x32x96xbf16, #tpu.memory_space<vmem>>, vector<1x32x96xbf16>
    %9 = vector.shape_cast %8 : vector<1x32x96xbf16> to vector<32x96xbf16>
    %cst = arith.constant dense<0.000000e+00> : vector<16x96xf32>
    %10 = tpu.matmul %7, %9, %cst {dimension_numbers = #tpu.dot_dimension_numbers<[1], [0], [0], [1], [0, 0, 1, 1], [], []>} : vector<16x32xbf16>, vector<32x96xbf16>, vector<16x96xf32> -> vector<16x96xf32>
    %c0_13 = arith.constant 0 : index
    %c0_14 = arith.constant 0 : index
    %c0_15 = arith.constant 0 : index
    %11 = vector.load %arg7[%c0_13, %c0_14, %c0_15] : memref<1x1x96xf32, #tpu.memory_space<vmem>>, vector<1x1x96xf32>
    %12 = vector.shape_cast %11 : vector<1x1x96xf32> to vector<1x96xf32>
    %13 = vector.broadcast %12 : vector<1x96xf32> to vector<16x96xf32>
    %14 = arith.addf %10, %13 : vector<16x96xf32>
    %15 = vector.extract_strided_slice %14 {offsets = [0, 0], sizes = [16, 32], strides = [1, 1]} : vector<16x96xf32> to vector<16x32xf32>
    %cst_16 = arith.constant 0.353553385 : f32
    %16 = vector.broadcast %cst_16 : f32 to vector<16x32xf32>
    %17 = arith.mulf %15, %16 : vector<16x32xf32>
    %18 = vector.extract_strided_slice %14 {offsets = [0, 32], sizes = [16, 32], strides = [1, 1]} : vector<16x96xf32> to vector<16x32xf32>
    %19 = vector.extract_strided_slice %14 {offsets = [0, 64], sizes = [16, 32], strides = [1, 1]} : vector<16x96xf32> to vector<16x32xf32>
    %c0_17 = arith.constant 0 : index
    %c0_18 = arith.constant 0 : index
    %c0_19 = arith.constant 0 : index
    %20 = vector.load %arg8[%c0_17, %c0_18, %c0_19] : memref<1x32x32xbf16, #tpu.memory_space<vmem>>, vector<1x32x32xbf16>
    %21 = vector.shape_cast %20 : vector<1x32x32xbf16> to vector<32x32xbf16>
    %c0_20 = arith.constant 0 : index
    %c0_21 = arith.constant 0 : index
    %c0_22 = arith.constant 0 : index
    %22 = vector.load %arg9[%c0_20, %c0_21, %c0_22] : memref<1x1x32xf32, #tpu.memory_space<vmem>>, vector<1x1x32xf32>
    %23 = vector.shape_cast %22 : vector<1x1x32xf32> to vector<1x32xf32>
    %c0_23 = arith.constant 0 : index
    %c0_24 = arith.constant 0 : index
    %c0_25 = arith.constant 0 : index
    %24 = vector.load %arg10[%c0_23, %c0_24, %c0_25] : memref<1x1x32xf32, #tpu.memory_space<vmem>>, vector<1x1x32xf32>
    %25 = vector.shape_cast %24 : vector<1x1x32xf32> to vector<1x32xf32>
    %c0_26 = arith.constant 0 : index
    %c0_27 = arith.constant 0 : index
    %c0_28 = arith.constant 0 : index
    %26 = vector.load %arg11[%c0_26, %c0_27, %c0_28] : memref<1x1x32xf32, #tpu.memory_space<vmem>>, vector<1x1x32xf32>
    %27 = vector.shape_cast %26 : vector<1x1x32xf32> to vector<1x32xf32>
    %28 = vector.shape_cast %17 : vector<16x32xf32> to vector<2x8x32xf32>
    %29 = vector.shape_cast %18 : vector<16x32xf32> to vector<2x8x32xf32>
    %30 = vector.shape_cast %19 : vector<16x32xf32> to vector<2x8x32xf32>
    %31 = vector.extract_strided_slice %28 {offsets = [0, 0, 0], sizes = [2, 8, 8], strides = [1, 1, 1]} : vector<2x8x32xf32> to vector<2x8x8xf32>
    %32 = vector.extract_strided_slice %29 {offsets = [0, 0, 0], sizes = [2, 8, 8], strides = [1, 1, 1]} : vector<2x8x32xf32> to vector<2x8x8xf32>
    %33 = vector.extract_strided_slice %30 {offsets = [0, 0, 0], sizes = [2, 8, 8], strides = [1, 1, 1]} : vector<2x8x32xf32> to vector<2x8x8xf32>
    %34 = arith.truncf %33 : vector<2x8x8xf32> to vector<2x8x8xbf16>
    "tpu.trace_start"() <{level = 10 : i32, message = "bqd,bkd->bqk"}> : () -> ()
    %cst_29 = arith.constant dense<0.000000e+00> : vector<2x8x8xf32>
    %35 = tpu.matmul %31, %32, %cst_29 {dimension_numbers = #tpu.dot_dimension_numbers<[2], [2], [1], [1], [0, 0, 0, 1, 1, 1], [0], [0]>} : vector<2x8x8xf32>, vector<2x8x8xf32>, vector<2x8x8xf32> -> vector<2x8x8xf32>
    "tpu.trace_stop"() : () -> ()
    %36 = arith.addf %35, %5 : vector<2x8x8xf32>
    %cst_30 = arith.constant dense<0xFF800000> : vector<2x8xf32>
    %37 = vector.multi_reduction <maximumf>, %36, %cst_30 [2] : vector<2x8x8xf32> to vector<2x8xf32>
    %38 = vector.shape_cast %37 : vector<2x8xf32> to vector<2x8x1xf32>
    %39 = vector.broadcast %38 : vector<2x8x1xf32> to vector<2x8x8xf32>
    %40 = arith.subf %36, %39 : vector<2x8x8xf32>
    %41 = math.exp %40 : vector<2x8x8xf32>
    %cst_31 = arith.constant dense<0.000000e+00> : vector<2x8xf32>
    %42 = vector.multi_reduction <add>, %41, %cst_31 [2] : vector<2x8x8xf32> to vector<2x8xf32>
    %43 = vector.shape_cast %42 : vector<2x8xf32> to vector<2x8x1xf32>
    %44 = tpu.reciprocal %43 {approx = true} : vector<2x8x1xf32> -> vector<2x8x1xf32>
    %45 = vector.broadcast %44 : vector<2x8x1xf32> to vector<2x8x8xf32>
    %46 = arith.mulf %41, %45 : vector<2x8x8xf32>
    %47 = arith.truncf %46 : vector<2x8x8xf32> to vector<2x8x8xbf16>
    "tpu.trace_start"() <{level = 10 : i32, message = "bqk,bkd->bqd"}> : () -> ()
    %cst_32 = arith.constant dense<0.000000e+00> : vector<2x8x8xf32>
    %48 = tpu.matmul %47, %34, %cst_32 {dimension_numbers = #tpu.dot_dimension_numbers<[2], [1], [1], [2], [0, 0, 0, 1, 1, 2], [0], [0]>} : vector<2x8x8xbf16>, vector<2x8x8xbf16>, vector<2x8x8xf32> -> vector<2x8x8xf32>
    "tpu.trace_stop"() : () -> ()
    %49 = vector.shape_cast %48 : vector<2x8x8xf32> to vector<16x8xf32>
    %c0_33 = arith.constant 0 : index
    %c0_34 = arith.constant 0 : index
    %50 = vector.load %arg30[%c0_33, %c0_34] : memref<16x32xf32, #tpu.memory_space<vmem>>, vector<16x8xf32>
    tpu.vector_store %arg30[%c0_33, %c0_34], %49 {strides = array<i32>} : memref<16x32xf32, #tpu.memory_space<vmem>>, vector<16x8xf32>,
    %51 = vector.extract_strided_slice %28 {offsets = [0, 0, 8], sizes = [2, 8, 8], strides = [1, 1, 1]} : vector<2x8x32xf32> to vector<2x8x8xf32>
    %52 = vector.extract_strided_slice %29 {offsets = [0, 0, 8], sizes = [2, 8, 8], strides = [1, 1, 1]} : vector<2x8x32xf32> to vector<2x8x8xf32>
    %53 = vector.extract_strided_slice %30 {offsets = [0, 0, 8], sizes = [2, 8, 8], strides = [1, 1, 1]} : vector<2x8x32xf32> to vector<2x8x8xf32>
    %54 = arith.truncf %53 : vector<2x8x8xf32> to vector<2x8x8xbf16>
    "tpu.trace_start"() <{level = 10 : i32, message = "bqd,bkd->bqk"}> : () -> ()
    %cst_35 = arith.constant dense<0.000000e+00> : vector<2x8x8xf32>
    %55 = tpu.matmul %51, %52, %cst_35 {dimension_numbers = #tpu.dot_dimension_numbers<[2], [2], [1], [1], [0, 0, 0, 1, 1, 1], [0], [0]>} : vector<2x8x8xf32>, vector<2x8x8xf32>, vector<2x8x8xf32> -> vector<2x8x8xf32>
    "tpu.trace_stop"() : () -> ()
    %56 = arith.addf %55, %5 : vector<2x8x8xf32>
    %cst_36 = arith.constant dense<0xFF800000> : vector<2x8xf32>
    %57 = vector.multi_reduction <maximumf>, %56, %cst_36 [2] : vector<2x8x8xf32> to vector<2x8xf32>
    %58 = vector.shape_cast %57 : vector<2x8xf32> to vector<2x8x1xf32>
    %59 = vector.broadcast %58 : vector<2x8x1xf32> to vector<2x8x8xf32>
    %60 = arith.subf %56, %59 : vector<2x8x8xf32>
    %61 = math.exp %60 : vector<2x8x8xf32>
    %cst_37 = arith.constant dense<0.000000e+00> : vector<2x8xf32>
    %62 = vector.multi_reduction <add>, %61, %cst_37 [2] : vector<2x8x8xf32> to vector<2x8xf32>
    %63 = vector.shape_cast %62 : vector<2x8xf32> to vector<2x8x1xf32>
    %64 = tpu.reciprocal %63 {approx = true} : vector<2x8x1xf32> -> vector<2x8x1xf32>
    %65 = vector.broadcast %64 : vector<2x8x1xf32> to vector<2x8x8xf32>
    %66 = arith.mulf %61, %65 : vector<2x8x8xf32>
    %67 = arith.truncf %66 : vector<2x8x8xf32> to vector<2x8x8xbf16>
    "tpu.trace_start"() <{level = 10 : i32, message = "bqk,bkd->bqd"}> : () -> ()
    %cst_38 = arith.constant dense<0.000000e+00> : vector<2x8x8xf32>
    %68 = tpu.matmul %67, %54, %cst_38 {dimension_numbers = #tpu.dot_dimension_numbers<[2], [1], [1], [2], [0, 0, 0, 1, 1, 2], [0], [0]>} : vector<2x8x8xbf16>, vector<2x8x8xbf16>, vector<2x8x8xf32> -> vector<2x8x8xf32>
    "tpu.trace_stop"() : () -> ()
    %69 = vector.shape_cast %68 : vector<2x8x8xf32> to vector<16x8xf32>
    %c0_39 = arith.constant 0 : index
    %c8 = arith.constant 8 : index
    %70 = vector.load %arg30[%c0_39, %c8] : memref<16x32xf32, #tpu.memory_space<vmem>>, vector<16x8xf32>
    tpu.vector_store %arg30[%c0_39, %c8], %69 {strides = array<i32>} : memref<16x32xf32, #tpu.memory_space<vmem>>, vector<16x8xf32>,
    %71 = vector.extract_strided_slice %28 {offsets = [0, 0, 16], sizes = [2, 8, 8], strides = [1, 1, 1]} : vector<2x8x32xf32> to vector<2x8x8xf32>
    %72 = vector.extract_strided_slice %29 {offsets = [0, 0, 16], sizes = [2, 8, 8], strides = [1, 1, 1]} : vector<2x8x32xf32> to vector<2x8x8xf32>
    %73 = vector.extract_strided_slice %30 {offsets = [0, 0, 16], sizes = [2, 8, 8], strides = [1, 1, 1]} : vector<2x8x32xf32> to vector<2x8x8xf32>
    %74 = arith.truncf %73 : vector<2x8x8xf32> to vector<2x8x8xbf16>
    "tpu.trace_start"() <{level = 10 : i32, message = "bqd,bkd->bqk"}> : () -> ()
    %cst_40 = arith.constant dense<0.000000e+00> : vector<2x8x8xf32>
    %75 = tpu.matmul %71, %72, %cst_40 {dimension_numbers = #tpu.dot_dimension_numbers<[2], [2], [1], [1], [0, 0, 0, 1, 1, 1], [0], [0]>} : vector<2x8x8xf32>, vector<2x8x8xf32>, vector<2x8x8xf32> -> vector<2x8x8xf32>
    "tpu.trace_stop"() : () -> ()
    %76 = arith.addf %75, %5 : vector<2x8x8xf32>
    %cst_41 = arith.constant dense<0xFF800000> : vector<2x8xf32>
    %77 = vector.multi_reduction <maximumf>, %76, %cst_41 [2] : vector<2x8x8xf32> to vector<2x8xf32>
    %78 = vector.shape_cast %77 : vector<2x8xf32> to vector<2x8x1xf32>
    %79 = vector.broadcast %78 : vector<2x8x1xf32> to vector<2x8x8xf32>
    %80 = arith.subf %76, %79 : vector<2x8x8xf32>
    %81 = math.exp %80 : vector<2x8x8xf32>
    %cst_42 = arith.constant dense<0.000000e+00> : vector<2x8xf32>
    %82 = vector.multi_reduction <add>, %81, %cst_42 [2] : vector<2x8x8xf32> to vector<2x8xf32>
    %83 = vector.shape_cast %82 : vector<2x8xf32> to vector<2x8x1xf32>
    %84 = tpu.reciprocal %83 {approx = true} : vector<2x8x1xf32> -> vector<2x8x1xf32>
    %85 = vector.broadcast %84 : vector<2x8x1xf32> to vector<2x8x8xf32>
    %86 = arith.mulf %81, %85 : vector<2x8x8xf32>
    %87 = arith.truncf %86 : vector<2x8x8xf32> to vector<2x8x8xbf16>
    "tpu.trace_start"() <{level = 10 : i32, message = "bqk,bkd->bqd"}> : () -> ()
    %cst_43 = arith.constant dense<0.000000e+00> : vector<2x8x8xf32>
    %88 = tpu.matmul %87, %74, %cst_43 {dimension_numbers = #tpu.dot_dimension_numbers<[2], [1], [1], [2], [0, 0, 0, 1, 1, 2], [0], [0]>} : vector<2x8x8xbf16>, vector<2x8x8xbf16>, vector<2x8x8xf32> -> vector<2x8x8xf32>
    "tpu.trace_stop"() : () -> ()
    %89 = vector.shape_cast %88 : vector<2x8x8xf32> to vector<16x8xf32>
    %c0_44 = arith.constant 0 : index
    %c16 = arith.constant 16 : index
    %90 = vector.load %arg30[%c0_44, %c16] : memref<16x32xf32, #tpu.memory_space<vmem>>, vector<16x8xf32>
    tpu.vector_store %arg30[%c0_44, %c16], %89 {strides = array<i32>} : memref<16x32xf32, #tpu.memory_space<vmem>>, vector<16x8xf32>,
    %91 = vector.extract_strided_slice %28 {offsets = [0, 0, 24], sizes = [2, 8, 8], strides = [1, 1, 1]} : vector<2x8x32xf32> to vector<2x8x8xf32>
    %92 = vector.extract_strided_slice %29 {offsets = [0, 0, 24], sizes = [2, 8, 8], strides = [1, 1, 1]} : vector<2x8x32xf32> to vector<2x8x8xf32>
    %93 = vector.extract_strided_slice %30 {offsets = [0, 0, 24], sizes = [2, 8, 8], strides = [1, 1, 1]} : vector<2x8x32xf32> to vector<2x8x8xf32>
    %94 = arith.truncf %93 : vector<2x8x8xf32> to vector<2x8x8xbf16>
    "tpu.trace_start"() <{level = 10 : i32, message = "bqd,bkd->bqk"}> : () -> ()
    %cst_45 = arith.constant dense<0.000000e+00> : vector<2x8x8xf32>
    %95 = tpu.matmul %91, %92, %cst_45 {dimension_numbers = #tpu.dot_dimension_numbers<[2], [2], [1], [1], [0, 0, 0, 1, 1, 1], [0], [0]>} : vector<2x8x8xf32>, vector<2x8x8xf32>, vector<2x8x8xf32> -> vector<2x8x8xf32>
    "tpu.trace_stop"() : () -> ()
    %96 = arith.addf %95, %5 : vector<2x8x8xf32>
    %cst_46 = arith.constant dense<0xFF800000> : vector<2x8xf32>
    %97 = vector.multi_reduction <maximumf>, %96, %cst_46 [2] : vector<2x8x8xf32> to vector<2x8xf32>
    %98 = vector.shape_cast %97 : vector<2x8xf32> to vector<2x8x1xf32>
    %99 = vector.broadcast %98 : vector<2x8x1xf32> to vector<2x8x8xf32>
    %100 = arith.subf %96, %99 : vector<2x8x8xf32>
    %101 = math.exp %100 : vector<2x8x8xf32>
    %cst_47 = arith.constant dense<0.000000e+00> : vector<2x8xf32>
    %102 = vector.multi_reduction <add>, %101, %cst_47 [2] : vector<2x8x8xf32> to vector<2x8xf32>
    %103 = vector.shape_cast %102 : vector<2x8xf32> to vector<2x8x1xf32>
    %104 = tpu.reciprocal %103 {approx = true} : vector<2x8x1xf32> -> vector<2x8x1xf32>
    %105 = vector.broadcast %104 : vector<2x8x1xf32> to vector<2x8x8xf32>
    %106 = arith.mulf %101, %105 : vector<2x8x8xf32>
    %107 = arith.truncf %106 : vector<2x8x8xf32> to vector<2x8x8xbf16>
    "tpu.trace_start"() <{level = 10 : i32, message = "bqk,bkd->bqd"}> : () -> ()
    %cst_48 = arith.constant dense<0.000000e+00> : vector<2x8x8xf32>
    %108 = tpu.matmul %107, %94, %cst_48 {dimension_numbers = #tpu.dot_dimension_numbers<[2], [1], [1], [2], [0, 0, 0, 1, 1, 2], [0], [0]>} : vector<2x8x8xbf16>, vector<2x8x8xbf16>, vector<2x8x8xf32> -> vector<2x8x8xf32>
    "tpu.trace_stop"() : () -> ()
    %109 = vector.shape_cast %108 : vector<2x8x8xf32> to vector<16x8xf32>
    %c0_49 = arith.constant 0 : index
    %c24 = arith.constant 24 : index
    %110 = vector.load %arg30[%c0_49, %c24] : memref<16x32xf32, #tpu.memory_space<vmem>>, vector<16x8xf32>
    tpu.vector_store %arg30[%c0_49, %c24], %109 {strides = array<i32>} : memref<16x32xf32, #tpu.memory_space<vmem>>, vector<16x8xf32>,
    %c0_50 = arith.constant 0 : index
    %c0_51 = arith.constant 0 : index
    %111 = vector.load %arg30[%c0_50, %c0_51] : memref<16x32xf32, #tpu.memory_space<vmem>>, vector<16x32xf32>
    %112 = arith.truncf %111 : vector<16x32xf32> to vector<16x32xbf16>
    %cst_52 = arith.constant dense<0.000000e+00> : vector<16x32xf32>
    %113 = tpu.matmul %112, %21, %cst_52 {dimension_numbers = #tpu.dot_dimension_numbers<[1], [0], [0], [1], [0, 0, 1, 1], [], []>} : vector<16x32xbf16>, vector<32x32xbf16>, vector<16x32xf32> -> vector<16x32xf32>
    %114 = vector.broadcast %23 : vector<1x32xf32> to vector<16x32xf32>
    %115 = arith.addf %113, %114 : vector<16x32xf32>
    %116 = arith.addf %115, %3 : vector<16x32xf32>
    %cst_53 = arith.constant dense<0.000000e+00> : vector<16xf32>
    %117 = vector.multi_reduction <add>, %116, %cst_53 [1] : vector<16x32xf32> to vector<16xf32>
    %118 = vector.shape_cast %117 : vector<16xf32> to vector<16x1xf32>
    %119 = arith.mulf %116, %116 : vector<16x32xf32>
    %cst_54 = arith.constant dense<0.000000e+00> : vector<16xf32>
    %120 = vector.multi_reduction <add>, %119, %cst_54 [1] : vector<16x32xf32> to vector<16xf32>
    %121 = vector.shape_cast %120 : vector<16xf32> to vector<16x1xf32>
    %cst_55 = arith.constant 3.125000e-02 : f32
    %122 = vector.broadcast %cst_55 : f32 to vector<16x1xf32>
    %123 = arith.mulf %118, %122 : vector<16x1xf32>
    %cst_56 = arith.constant 3.125000e-02 : f32
    %124 = vector.broadcast %cst_56 : f32 to vector<16x1xf32>
    %125 = arith.mulf %121, %124 : vector<16x1xf32>
    %126 = arith.mulf %123, %123 : vector<16x1xf32>
    %127 = arith.subf %125, %126 : vector<16x1xf32>
    %128 = vector.broadcast %123 : vector<16x1xf32> to vector<16x32xf32>
    %129 = arith.subf %116, %128 : vector<16x32xf32>
    %cst_57 = arith.constant 9.99999997E-7 : f32
    %130 = vector.broadcast %cst_57 : f32 to vector<16x1xf32>
    %131 = arith.addf %127, %130 : vector<16x1xf32>
    %132 = math.rsqrt %131 : vector<16x1xf32>
    %133 = vector.broadcast %132 : vector<16x1xf32> to vector<16x32xf32>
    %134 = arith.mulf %129, %133 : vector<16x32xf32>
    %135 = vector.broadcast %25 : vector<1x32xf32> to vector<16x32xf32>
    %136 = arith.mulf %134, %135 : vector<16x32xf32>
    %137 = vector.broadcast %27 : vector<1x32xf32> to vector<16x32xf32>
    %138 = arith.addf %136, %137 : vector<16x32xf32>
    %139 = arith.truncf %138 : vector<16x32xf32> to vector<16x32xbf16>
    %140 = arith.truncf %4 : vector<16x32xf32> to vector<16x32xbf16>
    %c0_58 = arith.constant 0 : index
    %c0_59 = arith.constant 0 : index
    %c0_60 = arith.constant 0 : index
    %141 = vector.load %arg12[%c0_58, %c0_59, %c0_60] : memref<1x32x32xbf16, #tpu.memory_space<vmem>>, vector<1x32x32xbf16>
    %142 = vector.shape_cast %141 : vector<1x32x32xbf16> to vector<32x32xbf16>
    %cst_61 = arith.constant dense<0.000000e+00> : vector<16x32xf32>
    %143 = tpu.matmul %139, %142, %cst_61 {dimension_numbers = #tpu.dot_dimension_numbers<[1], [0], [0], [1], [0, 0, 1, 1], [], []>} : vector<16x32xbf16>, vector<32x32xbf16>, vector<16x32xf32> -> vector<16x32xf32>
    %c0_62 = arith.constant 0 : index
    %c0_63 = arith.constant 0 : index
    %c0_64 = arith.constant 0 : index
    %144 = vector.load %arg13[%c0_62, %c0_63, %c0_64] : memref<1x1x32xf32, #tpu.memory_space<vmem>>, vector<1x1x32xf32>
    %145 = vector.shape_cast %144 : vector<1x1x32xf32> to vector<1x32xf32>
    %146 = vector.broadcast %145 : vector<1x32xf32> to vector<16x32xf32>
    %147 = arith.addf %143, %146 : vector<16x32xf32>
    %cst_65 = arith.constant 0.353553385 : f32
    %148 = vector.broadcast %cst_65 : f32 to vector<16x32xf32>
    %149 = arith.mulf %147, %148 : vector<16x32xf32>
    %c0_66 = arith.constant 0 : index
    %c0_67 = arith.constant 0 : index
    %c0_68 = arith.constant 0 : index
    %150 = vector.load %arg14[%c0_66, %c0_67, %c0_68] : memref<1x32x64xbf16, #tpu.memory_space<vmem>>, vector<1x32x64xbf16>
    %151 = vector.shape_cast %150 : vector<1x32x64xbf16> to vector<32x64xbf16>
    %cst_69 = arith.constant dense<0.000000e+00> : vector<16x64xf32>
    %152 = tpu.matmul %140, %151, %cst_69 {dimension_numbers = #tpu.dot_dimension_numbers<[1], [0], [0], [1], [0, 0, 1, 1], [], []>} : vector<16x32xbf16>, vector<32x64xbf16>, vector<16x64xf32> -> vector<16x64xf32>
    %c0_70 = arith.constant 0 : index
    %c0_71 = arith.constant 0 : index
    %c0_72 = arith.constant 0 : index
    %153 = vector.load %arg15[%c0_70, %c0_71, %c0_72] : memref<1x1x64xf32, #tpu.memory_space<vmem>>, vector<1x1x64xf32>
    %154 = vector.shape_cast %153 : vector<1x1x64xf32> to vector<1x64xf32>
    %155 = vector.broadcast %154 : vector<1x64xf32> to vector<16x64xf32>
    %156 = arith.addf %152, %155 : vector<16x64xf32>
    %157 = vector.extract_strided_slice %156 {offsets = [0, 0], sizes = [16, 32], strides = [1, 1]} : vector<16x64xf32> to vector<16x32xf32>
    %158 = vector.extract_strided_slice %156 {offsets = [0, 32], sizes = [16, 32], strides = [1, 1]} : vector<16x64xf32> to vector<16x32xf32>
    %c0_73 = arith.constant 0 : index
    %c0_74 = arith.constant 0 : index
    %c0_75 = arith.constant 0 : index
    %159 = vector.load %arg16[%c0_73, %c0_74, %c0_75] : memref<1x32x32xbf16, #tpu.memory_space<vmem>>, vector<1x32x32xbf16>
    %160 = vector.shape_cast %159 : vector<1x32x32xbf16> to vector<32x32xbf16>
    %c0_76 = arith.constant 0 : index
    %c0_77 = arith.constant 0 : index
    %c0_78 = arith.constant 0 : index
    %161 = vector.load %arg17[%c0_76, %c0_77, %c0_78] : memref<1x1x32xf32, #tpu.memory_space<vmem>>, vector<1x1x32xf32>
    %162 = vector.shape_cast %161 : vector<1x1x32xf32> to vector<1x32xf32>
    %c0_79 = arith.constant 0 : index
    %c0_80 = arith.constant 0 : index
    %c0_81 = arith.constant 0 : index
    %163 = vector.load %arg18[%c0_79, %c0_80, %c0_81] : memref<1x1x32xf32, #tpu.memory_space<vmem>>, vector<1x1x32xf32>
    %164 = vector.shape_cast %163 : vector<1x1x32xf32> to vector<1x32xf32>
    %c0_82 = arith.constant 0 : index
    %c0_83 = arith.constant 0 : index
    %c0_84 = arith.constant 0 : index
    %165 = vector.load %arg19[%c0_82, %c0_83, %c0_84] : memref<1x1x32xf32, #tpu.memory_space<vmem>>, vector<1x1x32xf32>
    %166 = vector.shape_cast %165 : vector<1x1x32xf32> to vector<1x32xf32>
    %167 = vector.shape_cast %149 : vector<16x32xf32> to vector<2x8x32xf32>
    %168 = vector.shape_cast %157 : vector<16x32xf32> to vector<2x8x32xf32>
    %169 = vector.shape_cast %158 : vector<16x32xf32> to vector<2x8x32xf32>
    %170 = vector.extract_strided_slice %167 {offsets = [0, 0, 0], sizes = [2, 8, 8], strides = [1, 1, 1]} : vector<2x8x32xf32> to vector<2x8x8xf32>
    %171 = vector.extract_strided_slice %168 {offsets = [0, 0, 0], sizes = [2, 8, 8], strides = [1, 1, 1]} : vector<2x8x32xf32> to vector<2x8x8xf32>
    %172 = vector.extract_strided_slice %169 {offsets = [0, 0, 0], sizes = [2, 8, 8], strides = [1, 1, 1]} : vector<2x8x32xf32> to vector<2x8x8xf32>
    %173 = arith.truncf %172 : vector<2x8x8xf32> to vector<2x8x8xbf16>
    "tpu.trace_start"() <{level = 10 : i32, message = "bqd,bkd->bqk"}> : () -> ()
    %cst_85 = arith.constant dense<0.000000e+00> : vector<2x8x8xf32>
    %174 = tpu.matmul %170, %171, %cst_85 {dimension_numbers = #tpu.dot_dimension_numbers<[2], [2], [1], [1], [0, 0, 0, 1, 1, 1], [0], [0]>} : vector<2x8x8xf32>, vector<2x8x8xf32>, vector<2x8x8xf32> -> vector<2x8x8xf32>
    "tpu.trace_stop"() : () -> ()
    %175 = arith.addf %174, %6 : vector<2x8x8xf32>
    %cst_86 = arith.constant dense<0xFF800000> : vector<2x8xf32>
    %176 = vector.multi_reduction <maximumf>, %175, %cst_86 [2] : vector<2x8x8xf32> to vector<2x8xf32>
    %177 = vector.shape_cast %176 : vector<2x8xf32> to vector<2x8x1xf32>
    %178 = vector.broadcast %177 : vector<2x8x1xf32> to vector<2x8x8xf32>
    %179 = arith.subf %175, %178 : vector<2x8x8xf32>
    %180 = math.exp %179 : vector<2x8x8xf32>
    %cst_87 = arith.constant dense<0.000000e+00> : vector<2x8xf32>
    %181 = vector.multi_reduction <add>, %180, %cst_87 [2] : vector<2x8x8xf32> to vector<2x8xf32>
    %182 = vector.shape_cast %181 : vector<2x8xf32> to vector<2x8x1xf32>
    %183 = tpu.reciprocal %182 {approx = true} : vector<2x8x1xf32> -> vector<2x8x1xf32>
    %184 = vector.broadcast %183 : vector<2x8x1xf32> to vector<2x8x8xf32>
    %185 = arith.mulf %180, %184 : vector<2x8x8xf32>
    %186 = arith.truncf %185 : vector<2x8x8xf32> to vector<2x8x8xbf16>
    "tpu.trace_start"() <{level = 10 : i32, message = "bqk,bkd->bqd"}> : () -> ()
    %cst_88 = arith.constant dense<0.000000e+00> : vector<2x8x8xf32>
    %187 = tpu.matmul %186, %173, %cst_88 {dimension_numbers = #tpu.dot_dimension_numbers<[2], [1], [1], [2], [0, 0, 0, 1, 1, 2], [0], [0]>} : vector<2x8x8xbf16>, vector<2x8x8xbf16>, vector<2x8x8xf32> -> vector<2x8x8xf32>
    "tpu.trace_stop"() : () -> ()
    %188 = vector.shape_cast %187 : vector<2x8x8xf32> to vector<16x8xf32>
    %c0_89 = arith.constant 0 : index
    %c0_90 = arith.constant 0 : index
    %189 = vector.load %arg30[%c0_89, %c0_90] : memref<16x32xf32, #tpu.memory_space<vmem>>, vector<16x8xf32>
    tpu.vector_store %arg30[%c0_89, %c0_90], %188 {strides = array<i32>} : memref<16x32xf32, #tpu.memory_space<vmem>>, vector<16x8xf32>,
    %190 = vector.extract_strided_slice %167 {offsets = [0, 0, 8], sizes = [2, 8, 8], strides = [1, 1, 1]} : vector<2x8x32xf32> to vector<2x8x8xf32>
    %191 = vector.extract_strided_slice %168 {offsets = [0, 0, 8], sizes = [2, 8, 8], strides = [1, 1, 1]} : vector<2x8x32xf32> to vector<2x8x8xf32>
    %192 = vector.extract_strided_slice %169 {offsets = [0, 0, 8], sizes = [2, 8, 8], strides = [1, 1, 1]} : vector<2x8x32xf32> to vector<2x8x8xf32>
    %193 = arith.truncf %192 : vector<2x8x8xf32> to vector<2x8x8xbf16>
    "tpu.trace_start"() <{level = 10 : i32, message = "bqd,bkd->bqk"}> : () -> ()
    %cst_91 = arith.constant dense<0.000000e+00> : vector<2x8x8xf32>
    %194 = tpu.matmul %190, %191, %cst_91 {dimension_numbers = #tpu.dot_dimension_numbers<[2], [2], [1], [1], [0, 0, 0, 1, 1, 1], [0], [0]>} : vector<2x8x8xf32>, vector<2x8x8xf32>, vector<2x8x8xf32> -> vector<2x8x8xf32>
    "tpu.trace_stop"() : () -> ()
    %195 = arith.addf %194, %6 : vector<2x8x8xf32>
    %cst_92 = arith.constant dense<0xFF800000> : vector<2x8xf32>
    %196 = vector.multi_reduction <maximumf>, %195, %cst_92 [2] : vector<2x8x8xf32> to vector<2x8xf32>
    %197 = vector.shape_cast %196 : vector<2x8xf32> to vector<2x8x1xf32>
    %198 = vector.broadcast %197 : vector<2x8x1xf32> to vector<2x8x8xf32>
    %199 = arith.subf %195, %198 : vector<2x8x8xf32>
    %200 = math.exp %199 : vector<2x8x8xf32>
    %cst_93 = arith.constant dense<0.000000e+00> : vector<2x8xf32>
    %201 = vector.multi_reduction <add>, %200, %cst_93 [2] : vector<2x8x8xf32> to vector<2x8xf32>
    %202 = vector.shape_cast %201 : vector<2x8xf32> to vector<2x8x1xf32>
    %203 = tpu.reciprocal %202 {approx = true} : vector<2x8x1xf32> -> vector<2x8x1xf32>
    %204 = vector.broadcast %203 : vector<2x8x1xf32> to vector<2x8x8xf32>
    %205 = arith.mulf %200, %204 : vector<2x8x8xf32>
    %206 = arith.truncf %205 : vector<2x8x8xf32> to vector<2x8x8xbf16>
    "tpu.trace_start"() <{level = 10 : i32, message = "bqk,bkd->bqd"}> : () -> ()
    %cst_94 = arith.constant dense<0.000000e+00> : vector<2x8x8xf32>
    %207 = tpu.matmul %206, %193, %cst_94 {dimension_numbers = #tpu.dot_dimension_numbers<[2], [1], [1], [2], [0, 0, 0, 1, 1, 2], [0], [0]>} : vector<2x8x8xbf16>, vector<2x8x8xbf16>, vector<2x8x8xf32> -> vector<2x8x8xf32>
    "tpu.trace_stop"() : () -> ()
    %208 = vector.shape_cast %207 : vector<2x8x8xf32> to vector<16x8xf32>
    %c0_95 = arith.constant 0 : index
    %c8_96 = arith.constant 8 : index
    %209 = vector.load %arg30[%c0_95, %c8_96] : memref<16x32xf32, #tpu.memory_space<vmem>>, vector<16x8xf32>
    tpu.vector_store %arg30[%c0_95, %c8_96], %208 {strides = array<i32>} : memref<16x32xf32, #tpu.memory_space<vmem>>, vector<16x8xf32>,
    %210 = vector.extract_strided_slice %167 {offsets = [0, 0, 16], sizes = [2, 8, 8], strides = [1, 1, 1]} : vector<2x8x32xf32> to vector<2x8x8xf32>
    %211 = vector.extract_strided_slice %168 {offsets = [0, 0, 16], sizes = [2, 8, 8], strides = [1, 1, 1]} : vector<2x8x32xf32> to vector<2x8x8xf32>
    %212 = vector.extract_strided_slice %169 {offsets = [0, 0, 16], sizes = [2, 8, 8], strides = [1, 1, 1]} : vector<2x8x32xf32> to vector<2x8x8xf32>
    %213 = arith.truncf %212 : vector<2x8x8xf32> to vector<2x8x8xbf16>
    "tpu.trace_start"() <{level = 10 : i32, message = "bqd,bkd->bqk"}> : () -> ()
    %cst_97 = arith.constant dense<0.000000e+00> : vector<2x8x8xf32>
    %214 = tpu.matmul %210, %211, %cst_97 {dimension_numbers = #tpu.dot_dimension_numbers<[2], [2], [1], [1], [0, 0, 0, 1, 1, 1], [0], [0]>} : vector<2x8x8xf32>, vector<2x8x8xf32>, vector<2x8x8xf32> -> vector<2x8x8xf32>
    "tpu.trace_stop"() : () -> ()
    %215 = arith.addf %214, %6 : vector<2x8x8xf32>
    %cst_98 = arith.constant dense<0xFF800000> : vector<2x8xf32>
    %216 = vector.multi_reduction <maximumf>, %215, %cst_98 [2] : vector<2x8x8xf32> to vector<2x8xf32>
    %217 = vector.shape_cast %216 : vector<2x8xf32> to vector<2x8x1xf32>
    %218 = vector.broadcast %217 : vector<2x8x1xf32> to vector<2x8x8xf32>
    %219 = arith.subf %215, %218 : vector<2x8x8xf32>
    %220 = math.exp %219 : vector<2x8x8xf32>
    %cst_99 = arith.constant dense<0.000000e+00> : vector<2x8xf32>
    %221 = vector.multi_reduction <add>, %220, %cst_99 [2] : vector<2x8x8xf32> to vector<2x8xf32>
    %222 = vector.shape_cast %221 : vector<2x8xf32> to vector<2x8x1xf32>
    %223 = tpu.reciprocal %222 {approx = true} : vector<2x8x1xf32> -> vector<2x8x1xf32>
    %224 = vector.broadcast %223 : vector<2x8x1xf32> to vector<2x8x8xf32>
    %225 = arith.mulf %220, %224 : vector<2x8x8xf32>
    %226 = arith.truncf %225 : vector<2x8x8xf32> to vector<2x8x8xbf16>
    "tpu.trace_start"() <{level = 10 : i32, message = "bqk,bkd->bqd"}> : () -> ()
    %cst_100 = arith.constant dense<0.000000e+00> : vector<2x8x8xf32>
    %227 = tpu.matmul %226, %213, %cst_100 {dimension_numbers = #tpu.dot_dimension_numbers<[2], [1], [1], [2], [0, 0, 0, 1, 1, 2], [0], [0]>} : vector<2x8x8xbf16>, vector<2x8x8xbf16>, vector<2x8x8xf32> -> vector<2x8x8xf32>
    "tpu.trace_stop"() : () -> ()
    %228 = vector.shape_cast %227 : vector<2x8x8xf32> to vector<16x8xf32>
    %c0_101 = arith.constant 0 : index
    %c16_102 = arith.constant 16 : index
    %229 = vector.load %arg30[%c0_101, %c16_102] : memref<16x32xf32, #tpu.memory_space<vmem>>, vector<16x8xf32>
    tpu.vector_store %arg30[%c0_101, %c16_102], %228 {strides = array<i32>} : memref<16x32xf32, #tpu.memory_space<vmem>>, vector<16x8xf32>,
    %230 = vector.extract_strided_slice %167 {offsets = [0, 0, 24], sizes = [2, 8, 8], strides = [1, 1, 1]} : vector<2x8x32xf32> to vector<2x8x8xf32>
    %231 = vector.extract_strided_slice %168 {offsets = [0, 0, 24], sizes = [2, 8, 8], strides = [1, 1, 1]} : vector<2x8x32xf32> to vector<2x8x8xf32>
    %232 = vector.extract_strided_slice %169 {offsets = [0, 0, 24], sizes = [2, 8, 8], strides = [1, 1, 1]} : vector<2x8x32xf32> to vector<2x8x8xf32>
    %233 = arith.truncf %232 : vector<2x8x8xf32> to vector<2x8x8xbf16>
    "tpu.trace_start"() <{level = 10 : i32, message = "bqd,bkd->bqk"}> : () -> ()
    %cst_103 = arith.constant dense<0.000000e+00> : vector<2x8x8xf32>
    %234 = tpu.matmul %230, %231, %cst_103 {dimension_numbers = #tpu.dot_dimension_numbers<[2], [2], [1], [1], [0, 0, 0, 1, 1, 1], [0], [0]>} : vector<2x8x8xf32>, vector<2x8x8xf32>, vector<2x8x8xf32> -> vector<2x8x8xf32>
    "tpu.trace_stop"() : () -> ()
    %235 = arith.addf %234, %6 : vector<2x8x8xf32>
    %cst_104 = arith.constant dense<0xFF800000> : vector<2x8xf32>
    %236 = vector.multi_reduction <maximumf>, %235, %cst_104 [2] : vector<2x8x8xf32> to vector<2x8xf32>
    %237 = vector.shape_cast %236 : vector<2x8xf32> to vector<2x8x1xf32>
    %238 = vector.broadcast %237 : vector<2x8x1xf32> to vector<2x8x8xf32>
    %239 = arith.subf %235, %238 : vector<2x8x8xf32>
    %240 = math.exp %239 : vector<2x8x8xf32>
    %cst_105 = arith.constant dense<0.000000e+00> : vector<2x8xf32>
    %241 = vector.multi_reduction <add>, %240, %cst_105 [2] : vector<2x8x8xf32> to vector<2x8xf32>
    %242 = vector.shape_cast %241 : vector<2x8xf32> to vector<2x8x1xf32>
    %243 = tpu.reciprocal %242 {approx = true} : vector<2x8x1xf32> -> vector<2x8x1xf32>
    %244 = vector.broadcast %243 : vector<2x8x1xf32> to vector<2x8x8xf32>
    %245 = arith.mulf %240, %244 : vector<2x8x8xf32>
    %246 = arith.truncf %245 : vector<2x8x8xf32> to vector<2x8x8xbf16>
    "tpu.trace_start"() <{level = 10 : i32, message = "bqk,bkd->bqd"}> : () -> ()
    %cst_106 = arith.constant dense<0.000000e+00> : vector<2x8x8xf32>
    %247 = tpu.matmul %246, %233, %cst_106 {dimension_numbers = #tpu.dot_dimension_numbers<[2], [1], [1], [2], [0, 0, 0, 1, 1, 2], [0], [0]>} : vector<2x8x8xbf16>, vector<2x8x8xbf16>, vector<2x8x8xf32> -> vector<2x8x8xf32>
    "tpu.trace_stop"() : () -> ()
    %248 = vector.shape_cast %247 : vector<2x8x8xf32> to vector<16x8xf32>
    %c0_107 = arith.constant 0 : index
    %c24_108 = arith.constant 24 : index
    %249 = vector.load %arg30[%c0_107, %c24_108] : memref<16x32xf32, #tpu.memory_space<vmem>>, vector<16x8xf32>
    tpu.vector_store %arg30[%c0_107, %c24_108], %248 {strides = array<i32>} : memref<16x32xf32, #tpu.memory_space<vmem>>, vector<16x8xf32>,
    %c0_109 = arith.constant 0 : index
    %c0_110 = arith.constant 0 : index
    %250 = vector.load %arg30[%c0_109, %c0_110] : memref<16x32xf32, #tpu.memory_space<vmem>>, vector<16x32xf32>
    %251 = arith.truncf %250 : vector<16x32xf32> to vector<16x32xbf16>
    %cst_111 = arith.constant dense<0.000000e+00> : vector<16x32xf32>
    %252 = tpu.matmul %251, %160, %cst_111 {dimension_numbers = #tpu.dot_dimension_numbers<[1], [0], [0], [1], [0, 0, 1, 1], [], []>} : vector<16x32xbf16>, vector<32x32xbf16>, vector<16x32xf32> -> vector<16x32xf32>
    %253 = vector.broadcast %162 : vector<1x32xf32> to vector<16x32xf32>
    %254 = arith.addf %252, %253 : vector<16x32xf32>
    %255 = arith.addf %254, %138 : vector<16x32xf32>
    %cst_112 = arith.constant dense<0.000000e+00> : vector<16xf32>
    %256 = vector.multi_reduction <add>, %255, %cst_112 [1] : vector<16x32xf32> to vector<16xf32>
    %257 = vector.shape_cast %256 : vector<16xf32> to vector<16x1xf32>
    %258 = arith.mulf %255, %255 : vector<16x32xf32>
    %cst_113 = arith.constant dense<0.000000e+00> : vector<16xf32>
    %259 = vector.multi_reduction <add>, %258, %cst_113 [1] : vector<16x32xf32> to vector<16xf32>
    %260 = vector.shape_cast %259 : vector<16xf32> to vector<16x1xf32>
    %cst_114 = arith.constant 3.125000e-02 : f32
    %261 = vector.broadcast %cst_114 : f32 to vector<16x1xf32>
    %262 = arith.mulf %257, %261 : vector<16x1xf32>
    %cst_115 = arith.constant 3.125000e-02 : f32
    %263 = vector.broadcast %cst_115 : f32 to vector<16x1xf32>
    %264 = arith.mulf %260, %263 : vector<16x1xf32>
    %265 = arith.mulf %262, %262 : vector<16x1xf32>
    %266 = arith.subf %264, %265 : vector<16x1xf32>
    %267 = vector.broadcast %262 : vector<16x1xf32> to vector<16x32xf32>
    %268 = arith.subf %255, %267 : vector<16x32xf32>
    %cst_116 = arith.constant 9.99999997E-7 : f32
    %269 = vector.broadcast %cst_116 : f32 to vector<16x1xf32>
    %270 = arith.addf %266, %269 : vector<16x1xf32>
    %271 = math.rsqrt %270 : vector<16x1xf32>
    %272 = vector.broadcast %271 : vector<16x1xf32> to vector<16x32xf32>
    %273 = arith.mulf %268, %272 : vector<16x32xf32>
    %274 = vector.broadcast %164 : vector<1x32xf32> to vector<16x32xf32>
    %275 = arith.mulf %273, %274 : vector<16x32xf32>
    %276 = vector.broadcast %166 : vector<1x32xf32> to vector<16x32xf32>
    %277 = arith.addf %275, %276 : vector<16x32xf32>
    %c0_117 = arith.constant 0 : index
    %c0_118 = arith.constant 0 : index
    %c0_119 = arith.constant 0 : index
    %278 = vector.load %arg20[%c0_117, %c0_118, %c0_119] : memref<1x32x64xbf16, #tpu.memory_space<vmem>>, vector<1x32x64xbf16>
    %279 = vector.shape_cast %278 : vector<1x32x64xbf16> to vector<32x64xbf16>
    %c0_120 = arith.constant 0 : index
    %c0_121 = arith.constant 0 : index
    %c0_122 = arith.constant 0 : index
    %280 = vector.load %arg21[%c0_120, %c0_121, %c0_122] : memref<1x1x64xf32, #tpu.memory_space<vmem>>, vector<1x1x64xf32>
    %281 = vector.shape_cast %280 : vector<1x1x64xf32> to vector<1x64xf32>
    %c0_123 = arith.constant 0 : index
    %c0_124 = arith.constant 0 : index
    %c0_125 = arith.constant 0 : index
    %282 = vector.load %arg22[%c0_123, %c0_124, %c0_125] : memref<1x64x32xbf16, #tpu.memory_space<vmem>>, vector<1x64x32xbf16>
    %283 = vector.shape_cast %282 : vector<1x64x32xbf16> to vector<64x32xbf16>
    %c0_126 = arith.constant 0 : index
    %c0_127 = arith.constant 0 : index
    %c0_128 = arith.constant 0 : index
    %284 = vector.load %arg23[%c0_126, %c0_127, %c0_128] : memref<1x1x32xf32, #tpu.memory_space<vmem>>, vector<1x1x32xf32>
    %285 = vector.shape_cast %284 : vector<1x1x32xf32> to vector<1x32xf32>
    %c0_129 = arith.constant 0 : index
    %c0_130 = arith.constant 0 : index
    %c0_131 = arith.constant 0 : index
    %286 = vector.load %arg24[%c0_129, %c0_130, %c0_131] : memref<1x1x32xf32, #tpu.memory_space<vmem>>, vector<1x1x32xf32>
    %287 = vector.shape_cast %286 : vector<1x1x32xf32> to vector<1x32xf32>
    %c0_132 = arith.constant 0 : index
    %c0_133 = arith.constant 0 : index
    %c0_134 = arith.constant 0 : index
    %288 = vector.load %arg25[%c0_132, %c0_133, %c0_134] : memref<1x1x32xf32, #tpu.memory_space<vmem>>, vector<1x1x32xf32>
    %289 = vector.shape_cast %288 : vector<1x1x32xf32> to vector<1x32xf32>
    %290 = arith.truncf %277 : vector<16x32xf32> to vector<16x32xbf16>
    %cst_135 = arith.constant dense<0.000000e+00> : vector<16x64xf32>
    %291 = tpu.matmul %290, %279, %cst_135 {dimension_numbers = #tpu.dot_dimension_numbers<[1], [0], [0], [1], [0, 0, 1, 1], [], []>} : vector<16x32xbf16>, vector<32x64xbf16>, vector<16x64xf32> -> vector<16x64xf32>
    %292 = vector.broadcast %281 : vector<1x64xf32> to vector<16x64xf32>
    %293 = arith.addf %291, %292 : vector<16x64xf32>
    %cst_136 = arith.constant 0.000000e+00 : f32
    %294 = vector.broadcast %cst_136 : f32 to vector<16x64xf32>
    %295 = arith.maximumf %293, %294 : vector<16x64xf32>
    %296 = arith.truncf %295 : vector<16x64xf32> to vector<16x64xbf16>
    %cst_137 = arith.constant dense<0.000000e+00> : vector<16x32xf32>
    %297 = tpu.matmul %296, %283, %cst_137 {dimension_numbers = #tpu.dot_dimension_numbers<[1], [0], [0], [1], [0, 0, 1, 1], [], []>} : vector<16x64xbf16>, vector<64x32xbf16>, vector<16x32xf32> -> vector<16x32xf32>
    %298 = vector.broadcast %285 : vector<1x32xf32> to vector<16x32xf32>
    %299 = arith.addf %297, %298 : vector<16x32xf32>
    %300 = arith.addf %299, %277 : vector<16x32xf32>
    %cst_138 = arith.constant dense<0.000000e+00> : vector<16xf32>
    %301 = vector.multi_reduction <add>, %300, %cst_138 [1] : vector<16x32xf32> to vector<16xf32>
    %302 = vector.shape_cast %301 : vector<16xf32> to vector<16x1xf32>
    %303 = arith.mulf %300, %300 : vector<16x32xf32>
    %cst_139 = arith.constant dense<0.000000e+00> : vector<16xf32>
    %304 = vector.multi_reduction <add>, %303, %cst_139 [1] : vector<16x32xf32> to vector<16xf32>
    %305 = vector.shape_cast %304 : vector<16xf32> to vector<16x1xf32>
    %cst_140 = arith.constant 3.125000e-02 : f32
    %306 = vector.broadcast %cst_140 : f32 to vector<16x1xf32>
    %307 = arith.mulf %302, %306 : vector<16x1xf32>
    %cst_141 = arith.constant 3.125000e-02 : f32
    %308 = vector.broadcast %cst_141 : f32 to vector<16x1xf32>
    %309 = arith.mulf %305, %308 : vector<16x1xf32>
    %310 = arith.mulf %307, %307 : vector<16x1xf32>
    %311 = arith.subf %309, %310 : vector<16x1xf32>
    %312 = vector.broadcast %307 : vector<16x1xf32> to vector<16x32xf32>
    %313 = arith.subf %300, %312 : vector<16x32xf32>
    %cst_142 = arith.constant 9.99999997E-7 : f32
    %314 = vector.broadcast %cst_142 : f32 to vector<16x1xf32>
    %315 = arith.addf %311, %314 : vector<16x1xf32>
    %316 = math.rsqrt %315 : vector<16x1xf32>
    %317 = vector.broadcast %316 : vector<16x1xf32> to vector<16x32xf32>
    %318 = arith.mulf %313, %317 : vector<16x32xf32>
    %319 = vector.broadcast %287 : vector<1x32xf32> to vector<16x32xf32>
    %320 = arith.mulf %318, %319 : vector<16x32xf32>
    %321 = vector.broadcast %289 : vector<1x32xf32> to vector<16x32xf32>
    %322 = arith.addf %320, %321 : vector<16x32xf32>
    %c0_143 = arith.constant 0 : index
    %c0_144 = arith.constant 0 : index
    %323 = vector.load %arg29[%c0_143, %c0_144] : memref<16x32xf32, #tpu.memory_space<vmem>>, vector<16x32xf32>
    tpu.vector_store %arg29[%c0_143, %c0_144], %322 {strides = array<i32>} : memref<16x32xf32, #tpu.memory_space<vmem>>, vector<16x32xf32>,
    %c1_i32 = arith.constant 1 : i32
    %324 = arith.cmpi eq, %arg0, %c1_i32 : i32
    %325 = arith.extui %324 : i1 to i32
    %c0_i32_145 = arith.constant 0 : i32
    %326 = arith.cmpi ne, %325, %c0_i32_145 : i32
    scf.if %326 {
      %c0_146 = arith.constant 0 : index
      %c0_147 = arith.constant 0 : index
      %327 = vector.load %arg26[%c0_146, %c0_147] : memref<1x32xf32, #tpu.memory_space<vmem>>, vector<1x32xf32>
      %c0_148 = arith.constant 0 : index
      %c0_149 = arith.constant 0 : index
      %328 = vector.load %arg27[%c0_148, %c0_149] : memref<1x32xf32, #tpu.memory_space<vmem>>, vector<1x32xf32>
      %cst_150 = arith.constant dense<0.000000e+00> : vector<16xf32>
      %329 = vector.multi_reduction <add>, %322, %cst_150 [1] : vector<16x32xf32> to vector<16xf32>
      %330 = vector.shape_cast %329 : vector<16xf32> to vector<16x1xf32>
      %331 = arith.mulf %322, %322 : vector<16x32xf32>
      %cst_151 = arith.constant dense<0.000000e+00> : vector<16xf32>
      %332 = vector.multi_reduction <add>, %331, %cst_151 [1] : vector<16x32xf32> to vector<16xf32>
      %333 = vector.shape_cast %332 : vector<16xf32> to vector<16x1xf32>
      %cst_152 = arith.constant 3.125000e-02 : f32
      %334 = vector.broadcast %cst_152 : f32 to vector<16x1xf32>
      %335 = arith.mulf %330, %334 : vector<16x1xf32>
      %cst_153 = arith.constant 3.125000e-02 : f32
      %336 = vector.broadcast %cst_153 : f32 to vector<16x1xf32>
      %337 = arith.mulf %333, %336 : vector<16x1xf32>
      %338 = arith.mulf %335, %335 : vector<16x1xf32>
      %339 = arith.subf %337, %338 : vector<16x1xf32>
      %340 = vector.broadcast %335 : vector<16x1xf32> to vector<16x32xf32>
      %341 = arith.subf %322, %340 : vector<16x32xf32>
      %cst_154 = arith.constant 9.99999997E-7 : f32
      %342 = vector.broadcast %cst_154 : f32 to vector<16x1xf32>
      %343 = arith.addf %339, %342 : vector<16x1xf32>
      %344 = math.rsqrt %343 : vector<16x1xf32>
      %345 = vector.broadcast %344 : vector<16x1xf32> to vector<16x32xf32>
      %346 = arith.mulf %341, %345 : vector<16x32xf32>
      %347 = vector.broadcast %327 : vector<1x32xf32> to vector<16x32xf32>
      %348 = arith.mulf %346, %347 : vector<16x32xf32>
      %349 = vector.broadcast %328 : vector<1x32xf32> to vector<16x32xf32>
      %350 = arith.addf %348, %349 : vector<16x32xf32>
      %351 = vector.shape_cast %350 : vector<16x32xf32> to vector<2x8x32xf32>
      %c0_155 = arith.constant 0 : index
      %c0_156 = arith.constant 0 : index
      %c0_157 = arith.constant 0 : index
      %352 = vector.load %arg28[%c0_155, %c0_156, %c0_157] : memref<2x8x32xf32, #tpu.memory_space<vmem>>, vector<2x8x32xf32>
      tpu.vector_store %arg28[%c0_155, %c0_156, %c0_157], %351 {strides = array<i32>} : memref<2x8x32xf32, #tpu.memory_space<vmem>>, vector<2x8x32xf32>,
    } else {
    }
    return
  }
  func.func @transform_0(%arg0: i32) -> (i32, i32, i32) {
    %c0_i32 = arith.constant 0 : i32
    %c0_i32_0 = arith.constant 0 : i32
    %c0_i32_1 = arith.constant 0 : i32
    %c0_i32_2 = arith.constant 0 : i32
    return %c0_i32, %c0_i32_0, %c0_i32_1 : i32, i32, i32
  }
  func.func @transform_1(%arg0: i32) -> (i32, i32, i32) {
    %c0_i32 = arith.constant 0 : i32
    %c0_i32_0 = arith.constant 0 : i32
    %c0_i32_1 = arith.constant 0 : i32
    %c0_i32_2 = arith.constant 0 : i32
    return %c0_i32, %c0_i32_0, %c0_i32_1 : i32, i32, i32
  }
  func.func @transform_2(%arg0: i32) -> (i32, i32) {
    %c0_i32 = arith.constant 0 : i32
    %c0_i32_0 = arith.constant 0 : i32
    %c0_i32_1 = arith.constant 0 : i32
    return %c0_i32, %c0_i32_0 : i32, i32
  }
  func.func @transform_3(%arg0: i32) -> (i32, i32, i32) {
    %c0_i32 = arith.constant 0 : i32
    %c0_i32_0 = arith.constant 0 : i32
    %c0_i32_1 = arith.constant 0 : i32
    %c0_i32_2 = arith.constant 0 : i32
    return %c0_i32, %c0_i32_0, %c0_i32_1 : i32, i32, i32
  }
  func.func @transform_4(%arg0: i32) -> (i32, i32, i32) {
    %c0_i32 = arith.constant 0 : i32
    %c0_i32_0 = arith.constant 0 : i32
    %c0_i32_1 = arith.constant 0 : i32
    %c0_i32_2 = arith.constant 0 : i32
    return %c0_i32, %c0_i32_0, %c0_i32_1 : i32, i32, i32
  }
  func.func @transform_5(%arg0: i32) -> (i32, i32, i32) {
    %c0_i32 = arith.constant 0 : i32
    %c0_i32_0 = arith.constant 0 : i32
    %c0_i32_1 = arith.constant 0 : i32
    return %arg0, %c0_i32, %c0_i32_0 : i32, i32, i32
  }
  func.func @transform_6(%arg0: i32) -> (i32, i32, i32) {
    %c0_i32 = arith.constant 0 : i32
    %c0_i32_0 = arith.constant 0 : i32
    %c0_i32_1 = arith.constant 0 : i32
    return %arg0, %c0_i32, %c0_i32_0 : i32, i32, i32
  }
  func.func @transform_7(%arg0: i32) -> (i32, i32, i32) {
    %c0_i32 = arith.constant 0 : i32
    %c0_i32_0 = arith.constant 0 : i32
    %c0_i32_1 = arith.constant 0 : i32
    return %arg0, %c0_i32, %c0_i32_0 : i32, i32, i32
  }
  func.func @transform_8(%arg0: i32) -> (i32, i32, i32) {
    %c0_i32 = arith.constant 0 : i32
    %c0_i32_0 = arith.constant 0 : i32
    %c0_i32_1 = arith.constant 0 : i32
    return %arg0, %c0_i32, %c0_i32_0 : i32, i32, i32
  }
  func.func @transform_9(%arg0: i32) -> (i32, i32, i32) {
    %c0_i32 = arith.constant 0 : i32
    %c0_i32_0 = arith.constant 0 : i32
    %c0_i32_1 = arith.constant 0 : i32
    return %arg0, %c0_i32, %c0_i32_0 : i32, i32, i32
  }
  func.func @transform_10(%arg0: i32) -> (i32, i32, i32) {
    %c0_i32 = arith.constant 0 : i32
    %c0_i32_0 = arith.constant 0 : i32
    %c0_i32_1 = arith.constant 0 : i32
    return %arg0, %c0_i32, %c0_i32_0 : i32, i32, i32
  }
  func.func @transform_11(%arg0: i32) -> (i32, i32, i32) {
    %c0_i32 = arith.constant 0 : i32
    %c0_i32_0 = arith.constant 0 : i32
    %c0_i32_1 = arith.constant 0 : i32
    return %arg0, %c0_i32, %c0_i32_0 : i32, i32, i32
  }
  func.func @transform_12(%arg0: i32) -> (i32, i32, i32) {
    %c0_i32 = arith.constant 0 : i32
    %c0_i32_0 = arith.constant 0 : i32
    %c0_i32_1 = arith.constant 0 : i32
    return %arg0, %c0_i32, %c0_i32_0 : i32, i32, i32
  }
  func.func @transform_13(%arg0: i32) -> (i32, i32, i32) {
    %c0_i32 = arith.constant 0 : i32
    %c0_i32_0 = arith.constant 0 : i32
    %c0_i32_1 = arith.constant 0 : i32
    return %arg0, %c0_i32, %c0_i32_0 : i32, i32, i32
  }
  func.func @transform_14(%arg0: i32) -> (i32, i32, i32) {
    %c0_i32 = arith.constant 0 : i32
    %c0_i32_0 = arith.constant 0 : i32
    %c0_i32_1 = arith.constant 0 : i32
    return %arg0, %c0_i32, %c0_i32_0 : i32, i32, i32
  }
  func.func @transform_15(%arg0: i32) -> (i32, i32, i32) {
    %c0_i32 = arith.constant 0 : i32
    %c0_i32_0 = arith.constant 0 : i32
    %c0_i32_1 = arith.constant 0 : i32
    return %arg0, %c0_i32, %c0_i32_0 : i32, i32, i32
  }
  func.func @transform_16(%arg0: i32) -> (i32, i32, i32) {
    %c0_i32 = arith.constant 0 : i32
    %c0_i32_0 = arith.constant 0 : i32
    %c0_i32_1 = arith.constant 0 : i32
    return %arg0, %c0_i32, %c0_i32_0 : i32, i32, i32
  }
  func.func @transform_17(%arg0: i32) -> (i32, i32, i32) {
    %c0_i32 = arith.constant 0 : i32
    %c0_i32_0 = arith.constant 0 : i32
    %c0_i32_1 = arith.constant 0 : i32
    return %arg0, %c0_i32, %c0_i32_0 : i32, i32, i32
  }
  func.func @transform_18(%arg0: i32) -> (i32, i32, i32) {
    %c0_i32 = arith.constant 0 : i32
    %c0_i32_0 = arith.constant 0 : i32
    %c0_i32_1 = arith.constant 0 : i32
    return %arg0, %c0_i32, %c0_i32_0 : i32, i32, i32
  }
  func.func @transform_19(%arg0: i32) -> (i32, i32, i32) {
    %c0_i32 = arith.constant 0 : i32
    %c0_i32_0 = arith.constant 0 : i32
    %c0_i32_1 = arith.constant 0 : i32
    return %arg0, %c0_i32, %c0_i32_0 : i32, i32, i32
  }
  func.func @transform_20(%arg0: i32) -> (i32, i32, i32) {
    %c0_i32 = arith.constant 0 : i32
    %c0_i32_0 = arith.constant 0 : i32
    %c0_i32_1 = arith.constant 0 : i32
    return %arg0, %c0_i32, %c0_i32_0 : i32, i32, i32
  }
  func.func @transform_21(%arg0: i32) -> (i32, i32, i32) {
    %c0_i32 = arith.constant 0 : i32
    %c0_i32_0 = arith.constant 0 : i32
    %c0_i32_1 = arith.constant 0 : i32
    return %arg0, %c0_i32, %c0_i32_0 : i32, i32, i32
  }
  func.func @transform_22(%arg0: i32) -> (i32, i32, i32) {
    %c0_i32 = arith.constant 0 : i32
    %c0_i32_0 = arith.constant 0 : i32
    %c0_i32_1 = arith.constant 0 : i32
    return %arg0, %c0_i32, %c0_i32_0 : i32, i32, i32
  }
  func.func @transform_23(%arg0: i32) -> (i32, i32, i32) {
    %c0_i32 = arith.constant 0 : i32
    %c0_i32_0 = arith.constant 0 : i32
    %c0_i32_1 = arith.constant 0 : i32
    return %arg0, %c0_i32, %c0_i32_0 : i32, i32, i32
  }
  func.func @transform_24(%arg0: i32) -> (i32, i32, i32) {
    %c0_i32 = arith.constant 0 : i32
    %c0_i32_0 = arith.constant 0 : i32
    %c0_i32_1 = arith.constant 0 : i32
    return %arg0, %c0_i32, %c0_i32_0 : i32, i32, i32
  }
  func.func @transform_25(%arg0: i32) -> (i32, i32) {
    %c0_i32 = arith.constant 0 : i32
    %c0_i32_0 = arith.constant 0 : i32
    %c0_i32_1 = arith.constant 0 : i32
    return %c0_i32, %c0_i32_0 : i32, i32
  }
  func.func @transform_26(%arg0: i32) -> (i32, i32) {
    %c0_i32 = arith.constant 0 : i32
    %c0_i32_0 = arith.constant 0 : i32
    %c0_i32_1 = arith.constant 0 : i32
    return %c0_i32, %c0_i32_0 : i32, i32
  }
  func.func @transform_27(%arg0: i32) -> (i32, i32, i32) {
    %c0_i32 = arith.constant 0 : i32
    %c0_i32_0 = arith.constant 0 : i32
    %c0_i32_1 = arith.constant 0 : i32
    %c0_i32_2 = arith.constant 0 : i32
    return %c0_i32, %c0_i32_0, %c0_i32_1 : i32, i32, i32
  }
}

</mosaic_0001>

<llo_original>
// kernel: tpu_custom_call.1
$region0: #{tpu_custom_call.1}
  #allocation0 [shape = 'u32[]', space=smem, size = 0x4, offset = 0x4, fixed_abs, tag = 'smem constant byte address 0x4 - core index']
  #allocation1 [shape = 'u32[144,128]{1,0:T(1,128)}', space=vmem, size = 0x12000, scoped, tag = 'internal scratch']
  #allocation2 [shape = 'f32[16,32]{1,0:T(8,128)}', space=vmem, size = 0x2000, scoped, tag = 'scratch operand']
  #allocation3 [shape = 'f32[16,32]{1,0:T(8,128)}', space=vmem, size = 0x2000, scoped, tag = 'scratch operand']
  %s0 = inlined_call_operand.hbm [shape: f32[2,8,32], index: 0, kind: input, shape index: {}]
  %s1 = inlined_call_operand.hbm [shape: f32[1,8,32], index: 1, kind: input, shape index: {}]
  %s2 = inlined_call_operand.hbm [shape: f32[16,32], index: 2, kind: input, shape index: {}]
  %s3 = inlined_call_operand.hbm [shape: f32[2,8,8], index: 3, kind: input, shape index: {}]
  %s4 = inlined_call_operand.hbm [shape: f32[2,8,8], index: 4, kind: input, shape index: {}]
  %s5 = inlined_call_operand.vmem [shape: bf16[2,32,96], index: 5, kind: input, shape index: {}]
  %s6 = inlined_call_operand.hbm [shape: f32[2,1,96], index: 6, kind: input, shape index: {}]
  %s7 = inlined_call_operand.vmem [shape: bf16[2,32,32], index: 7, kind: input, shape index: {}]
  %s8 = inlined_call_operand.hbm [shape: f32[2,1,32], index: 8, kind: input, shape index: {}]
  %s9 = inlined_call_operand.hbm [shape: f32[2,1,32], index: 9, kind: input, shape index: {}]
  %s10 = inlined_call_operand.hbm [shape: f32[2,1,32], index: 10, kind: input, shape index: {}]
  %s11 = inlined_call_operand.vmem [shape: bf16[2,32,32], index: 11, kind: input, shape index: {}]
  %s12 = inlined_call_operand.hbm [shape: f32[2,1,32], index: 12, kind: input, shape index: {}]
  %s13 = inlined_call_operand.vmem [shape: bf16[2,32,64], index: 13, kind: input, shape index: {}]
  %s14 = inlined_call_operand.hbm [shape: f32[2,1,64], index: 14, kind: input, shape index: {}]
  %s15 = inlined_call_operand.hbm [shape: bf16[2,32,32], index: 15, kind: input, shape index: {}]
  %s16 = inlined_call_operand.hbm [shape: f32[2,1,32], index: 16, kind: input, shape index: {}]
  %s17 = inlined_call_operand.hbm [shape: f32[2,1,32], index: 17, kind: input, shape index: {}]
  %s18 = inlined_call_operand.vmem [shape: f32[2,1,32], index: 18, kind: input, shape index: {}]
  %s19 = inlined_call_operand.hbm [shape: bf16[2,32,64], index: 19, kind: input, shape index: {}]
  %s20 = inlined_call_operand.vmem [shape: f32[2,1,64], index: 20, kind: input, shape index: {}]
  %s21 = inlined_call_operand.vmem [shape: bf16[2,64,32], index: 21, kind: input, shape index: {}]
  %s22 = inlined_call_operand.vmem [shape: f32[2,1,32], index: 22, kind: input, shape index: {}]
  %s23 = inlined_call_operand.vmem [shape: f32[2,1,32], index: 23, kind: input, shape index: {}]
  %s24 = inlined_call_operand.vmem [shape: f32[2,1,32], index: 24, kind: input, shape index: {}]
  %s25 = inlined_call_operand.vmem [shape: f32[1,32], index: 25, kind: input, shape index: {}]
  %s26 = inlined_call_operand.vmem [shape: f32[1,32], index: 26, kind: input, shape index: {}]
  %s27 = inlined_call_operand.hbm [shape: f32[2,8,32], index: 27, kind: output, shape index: {}]
  %s28 = sld [smem:[#allocation0]]
  $region209: #{tpu_custom_call.1} parent=0
    _
  %s30 = ssub.s32 1, %s28
  %s31 = scalar_select 0, %s30, %s28
  $region1: #{tpu_custom_call.1} parent=0
    #allocation4 [shape = 'u8[8192]{0}', space=vmem, size = 0x2000, scoped, tag = 'input window, operand 0, single buffered']
    #allocation5 [shape = 's32[2]{0}', space=sflag, size = 0x8, scoped, tag = 'scoped memory for tpu_custom_call.1']
    #allocation6 [shape = 's32[2]{0}', space=sflag, size = 0x8, scoped, tag = 'scoped memory for tpu_custom_call.1']
    #allocation7 [shape = 'u8[4096]{0}', space=vmem, size = 0x1000, scoped, tag = 'input window, operand 1, single buffered']
    #allocation8 [shape = 's32[1]{0}', space=sflag, size = 0x4, scoped, tag = 'scoped memory for tpu_custom_call.1']
    #allocation9 [shape = 'u8[8192]{0}', space=vmem, size = 0x2000, scoped, tag = 'input window, operand 2, single buffered']
    #allocation10 [shape = 'u8[8192]{0}', space=vmem, size = 0x2000, scoped, tag = 'input window, operand 3, single buffered']
    #allocation11 [shape = 's32[1]{0}', space=sflag, size = 0x4, scoped, tag = 'scoped memory for tpu_custom_call.1']
    #allocation12 [shape = 'u8[8192]{0}', space=vmem, size = 0x2000, scoped, tag = 'input window, operand 4, single buffered']
    #allocation13 [shape = 'u8[1024]{0}', space=vmem, size = 0x400, scoped, tag = 'input window, operand 6']
    #allocation14 [shape = 's32[2]{0}', space=sflag, size = 0x8, scoped, tag = 'scoped memory for tpu_custom_call.1']
    #allocation15 [shape = 'u8[1024]{0}', space=vmem, size = 0x400, scoped, tag = 'input window, operand 8']
    #allocation16 [shape = 'u8[1024]{0}', space=vmem, size = 0x400, scoped, tag = 'input window, operand 9']
    #allocation17 [shape = 's32[2]{0}', space=sflag, size = 0x8, scoped, tag = 'scoped memory for tpu_custom_call.1']
    #allocation18 [shape = 'u8[1024]{0}', space=vmem, size = 0x400, scoped, tag = 'input window, operand 10']
    #allocation19 [shape = 'u8[1024]{0}', space=vmem, size = 0x400, scoped, tag = 'input window, operand 12']
    #allocation20 [shape = 's32[2]{0}', space=sflag, size = 0x8, scoped, tag = 'scoped memory for tpu_custom_call.1']
    #allocation21 [shape = 'u8[1024]{0}', space=vmem, size = 0x400, scoped, tag = 'input window, operand 14']
    #allocation22 [shape = 'u8[16384]{0}', space=vmem, size = 0x4000, scoped, tag = 'input window, operand 15']
    #allocation23 [shape = 's32[2]{0}', space=sflag, size = 0x8, scoped, tag = 'scoped memory for tpu_custom_call.1']
    #allocation24 [shape = 'u8[1024]{0}', space=vmem, size = 0x400, scoped, tag = 'input window, operand 16']
    #allocation25 [shape = 'u8[1024]{0}', space=vmem, size = 0x400, scoped, tag = 'input window, operand 17']
    #allocation26 [shape = 's32[2]{0}', space=sflag, size = 0x8, scoped, tag = 'scoped memory for tpu_custom_call.1']
    #allocation27 [shape = 'u8[16384]{0}', space=vmem, size = 0x4000, scoped, tag = 'input window, operand 19']
    #allocation28 [shape = 'u8[8192]{0}', space=vmem, size = 0x2000, scoped, tag = 'output window, operand 0, single buffered']
    %32 = vsyncpa [#allocation5], 0
    %33 = vsyncpa [#allocation8], 0
    %34 = vsyncpa [#allocation11], 0
    %35 = vsyncpa [#allocation14], 0
    %s36 = scalar_lea.sflag [#allocation14], 1
    %37 = vsyncpa %s36, 0
    %38 = vsyncpa [#allocation17], 0
    %s39 = scalar_lea.sflag [#allocation17], 1
    %40 = vsyncpa %s39, 0
    %41 = vsyncpa [#allocation20], 0
    %s42 = scalar_lea.sflag [#allocation20], 1
    %43 = vsyncpa %s42, 0
    %44 = vsyncpa [#allocation23], 0
    %s45 = scalar_lea.sflag [#allocation23], 1
    %46 = vsyncpa %s45, 0
    %47 = vsyncpa [#allocation26], 0
    %s48 = scalar_lea.sflag [#allocation26], 1
    %49 = vsyncpa %s48, 0
    %50 = vsyncpa [#allocation6], 0
    loop: start=0, step=1, limit=4
    $region2: #{tpu_custom_call.1} parent=1 // loop_pre_header
      _
    $region3: #{tpu_custom_call.1} parent=1 // loop_header
      %s52 = sphi 0, %s56
      %p53 = scmp.ge.s32.totalorder %s52, 4
      %s60 = sphi 0, %s60
      %s62 = sphi 0, %s60
      %s63 = sphi 0, %s62
      %s77 = sphi 0, %s63
      %s81 = sphi 0, %s81
      %s83 = sphi 0, %s81
      %s84 = sphi 0, %s83
      %s98 = sphi 0, %s84
      %s102 = sphi 0, %s102
      %s104 = sphi 0, %s102
      %s105 = sphi 0, %s104
      %s119 = sphi 0, %s105
      %s123 = sphi 0, %s123
      %s125 = sphi 0, %s123
      %s126 = sphi 0, %s125
      %s140 = sphi 0, %s126
      %s144 = sphi 0, %s144
      %s146 = sphi 0, %s144
      %s147 = sphi 0, %s146
      %s161 = sphi 0, %s147
      %s167 = sphi 0, %s169
      %s170 = sphi 0, %s167
      %s171 = sphi 0, %s170
      %s187 = sphi 0, %s171
      %s193 = sphi 0, %s195
      %s196 = sphi 0, %s193
      %s197 = sphi 0, %s196
      %s213 = sphi 0, %s197
      %s219 = sphi 0, %s221
      %s222 = sphi 0, %s219
      %s223 = sphi 0, %s222
      %s239 = sphi 0, %s223
      %s245 = sphi 0, %s247
      %s248 = sphi 0, %s245
      %s249 = sphi 0, %s248
      %s265 = sphi 0, %s249
      %s271 = sphi 0, %s273
      %s274 = sphi 0, %s271
      %s275 = sphi 0, %s274
      %s291 = sphi 0, %s275
      %s297 = sphi 0, %s299
      %s300 = sphi 0, %s297
      %s301 = sphi 0, %s300
      %s317 = sphi 0, %s301
      %s323 = sphi 0, %s325
      %s326 = sphi 0, %s323
      %s327 = sphi 0, %s326
      %s343 = sphi 0, %s327
      %s349 = sphi 0, %s351
      %s352 = sphi 0, %s349
      %s353 = sphi 0, %s352
      %s369 = sphi 0, %s353
      %s375 = sphi 0, %s377
      %s378 = sphi 0, %s375
      %s379 = sphi 0, %s378
      %s395 = sphi 0, %s379
      %s401 = sphi 0, %s403
      %s404 = sphi 0, %s401
      %s405 = sphi 0, %s404
      %s421 = sphi 0, %s405
      %s427 = sphi 0, %s429
      %s430 = sphi 0, %s427
      %s431 = sphi 0, %s430
      %s447 = sphi 0, %s431
      %s453 = sphi 0, %s455
      %s456 = sphi 0, %s453
      %s457 = sphi 0, %s456
      %s473 = sphi 0, %s457
      %s479 = sphi 0, %s481
      %s482 = sphi 0, %s479
      %s483 = sphi 0, %s482
      %s499 = sphi 0, %s483
      %s505 = sphi 0, %s507
      %s508 = sphi 0, %s505
      %s509 = sphi 0, %s508
      %s525 = sphi 0, %s509
      %s531 = sphi 0, %s533
      %s534 = sphi 0, %s531
      %s535 = sphi 0, %s534
      %s551 = sphi 0, %s535
      %s557 = sphi 0, %s559
      %s560 = sphi 0, %s557
      %s561 = sphi 0, %s560
      %s577 = sphi 0, %s561
      %s583 = sphi 0, %s585
      %s586 = sphi 0, %s583
      %s587 = sphi 0, %s586
      %s603 = sphi 0, %s587
      %s609 = sphi 0, %s611
      %s612 = sphi 0, %s609
      %s613 = sphi 0, %s612
      %s629 = sphi 0, %s613
      %s635 = sphi 0, %s637
      %s638 = sphi 0, %s635
      %s639 = sphi 0, %s638
      %s655 = sphi 0, %s639
      %s661 = sphi 0, %s663
      %s664 = sphi 0, %s661
      %s665 = sphi 0, %s664
      %s681 = sphi 0, %s665
      %s685 = sphi 0, %s685
      %s687 = sphi 0, %s685
      %s688 = sphi 0, %s687
      %s702 = sphi 0, %s688
      %s706 = sphi 0, %s706
      %s708 = sphi 0, %s706
      %s709 = sphi 0, %s708
      %s723 = sphi 0, %s709
      %s727 = sphi 0, %s727
      %s729 = sphi 0, %s727
      %s730 = sphi 0, %s729
      %s744 = sphi 0, %s730
    $region4: #{tpu_custom_call.1} parent=1 // loop_header_branch
      %55 = sbr.rel (%p53) target = $region8
    $region5: #{tpu_custom_call.1} parent=1 // loop_body
      %s57 = ssub.s32 %s52, 1
      %s58 = ssub.s32 %s52, 2
      %s59 = sadd.s32 %s52, 1
      %s61 = sadd.s32 %s60, 1
      %p64 = scmp.eq.s32.totalorder %s52, 1
      %p65 = scmp.ne.s32.totalorder %s60, %s62
      %p66 = scmp.eq.s32.totalorder %s52, 0
      %p67 = por %p65, %p66
      %p68 = scmp.ne.s32.totalorder %s60, %s62
      %p69 = scmp.eq.s32.totalorder %s57, 1
      %p70 = por %p68, %p69
      %p71 = scmp.ne.s32.totalorder %s62, %s63
      %p72 = scmp.eq.s32.totalorder %s57, 0
      %p73 = por %p71, %p72
      %p74 = scmp.ne.s32.totalorder %s62, %s63
      %p75 = scmp.eq.s32.totalorder %s58, 1
      %p76 = por %p74, %p75
      %p78 = scmp.ne.s32.totalorder %s63, %s77
      %p79 = scmp.eq.s32.totalorder %s58, 0
      %p80 = por %p78, %p79
      %s82 = sadd.s32 %s81, 1
      %p85 = scmp.eq.s32.totalorder %s52, 1
      %p86 = scmp.ne.s32.totalorder %s81, %s83
      %p87 = scmp.eq.s32.totalorder %s52, 0
      %p88 = por %p86, %p87
      %p89 = scmp.ne.s32.totalorder %s81, %s83
      %p90 = scmp.eq.s32.totalorder %s57, 1
      %p91 = por %p89, %p90
      %p92 = scmp.ne.s32.totalorder %s83, %s84
      %p93 = scmp.eq.s32.totalorder %s57, 0
      %p94 = por %p92, %p93
      %p95 = scmp.ne.s32.totalorder %s83, %s84
      %p96 = scmp.eq.s32.totalorder %s58, 1
      %p97 = por %p95, %p96
      %p99 = scmp.ne.s32.totalorder %s84, %s98
      %p100 = scmp.eq.s32.totalorder %s58, 0
      %p101 = por %p99, %p100
      %s103 = sadd.s32 %s102, 1
      %p106 = scmp.eq.s32.totalorder %s52, 1
      %p107 = scmp.ne.s32.totalorder %s102, %s104
      %p108 = scmp.eq.s32.totalorder %s52, 0
      %p109 = por %p107, %p108
      %p110 = scmp.ne.s32.totalorder %s102, %s104
      %p111 = scmp.eq.s32.totalorder %s57, 1
      %p112 = por %p110, %p111
      %p113 = scmp.ne.s32.totalorder %s104, %s105
      %p114 = scmp.eq.s32.totalorder %s57, 0
      %p115 = por %p113, %p114
      %p116 = scmp.ne.s32.totalorder %s104, %s105
      %p117 = scmp.eq.s32.totalorder %s58, 1
      %p118 = por %p116, %p117
      %p120 = scmp.ne.s32.totalorder %s105, %s119
      %p121 = scmp.eq.s32.totalorder %s58, 0
      %p122 = por %p120, %p121
      %s124 = sadd.s32 %s123, 1
      %p127 = scmp.eq.s32.totalorder %s52, 1
      %p128 = scmp.ne.s32.totalorder %s123, %s125
      %p129 = scmp.eq.s32.totalorder %s52, 0
      %p130 = por %p128, %p129
      %p131 = scmp.ne.s32.totalorder %s123, %s125
      %p132 = scmp.eq.s32.totalorder %s57, 1
      %p133 = por %p131, %p132
      %p134 = scmp.ne.s32.totalorder %s125, %s126
      %p135 = scmp.eq.s32.totalorder %s57, 0
      %p136 = por %p134, %p135
      %p137 = scmp.ne.s32.totalorder %s125, %s126
      %p138 = scmp.eq.s32.totalorder %s58, 1
      %p139 = por %p137, %p138
      %p141 = scmp.ne.s32.totalorder %s126, %s140
      %p142 = scmp.eq.s32.totalorder %s58, 0
      %p143 = por %p141, %p142
      %s145 = sadd.s32 %s144, 1
      %p148 = scmp.eq.s32.totalorder %s52, 1
      %p149 = scmp.ne.s32.totalorder %s144, %s146
      %p150 = scmp.eq.s32.totalorder %s52, 0
      %p151 = por %p149, %p150
      %p152 = scmp.ne.s32.totalorder %s144, %s146
      %p153 = scmp.eq.s32.totalorder %s57, 1
      %p154 = por %p152, %p153
      %p155 = scmp.ne.s32.totalorder %s146, %s147
      %p156 = scmp.eq.s32.totalorder %s57, 0
      %p157 = por %p155, %p156
      %p158 = scmp.ne.s32.totalorder %s146, %s147
      %p159 = scmp.eq.s32.totalorder %s58, 1
      %p160 = por %p158, %p159
      %p162 = scmp.ne.s32.totalorder %s147, %s161
      %p163 = scmp.eq.s32.totalorder %s58, 0
      %p164 = por %p162, %p163
      %s165 = ssub.s32 %s52, %s59
      %p166 = scmp.eq.s32.totalorder %s165, 0
      %s168 = sadd.s32 %s167, 1
      %s169 = scalar_select %p166, %s167, %s168
      %p172 = pneg %p166
      %p173 = scmp.eq.s32.totalorder %s52, 1
      %p174 = por %p172, %p173
      %p175 = scmp.ne.s32.totalorder %s167, %s170
      %p176 = scmp.eq.s32.totalorder %s52, 0
      %p177 = por %p175, %p176
      %p178 = scmp.ne.s32.totalorder %s167, %s170
      %p179 = scmp.eq.s32.totalorder %s57, 1
      %p180 = por %p178, %p179
      %p181 = scmp.ne.s32.totalorder %s170, %s171
      %p182 = scmp.eq.s32.totalorder %s57, 0
      %p183 = por %p181, %p182
      %p184 = scmp.ne.s32.totalorder %s170, %s171
      %p185 = scmp.eq.s32.totalorder %s58, 1
      %p186 = por %p184, %p185
      %p188 = scmp.ne.s32.totalorder %s171, %s187
      %p189 = scmp.eq.s32.totalorder %s58, 0
      %p190 = por %p188, %p189
      %s191 = ssub.s32 %s52, %s59
      %p192 = scmp.eq.s32.totalorder %s191, 0
      %s194 = sadd.s32 %s193, 1
      %s195 = scalar_select %p192, %s193, %s194
      %p198 = pneg %p192
      %p199 = scmp.eq.s32.totalorder %s52, 1
      %p200 = por %p198, %p199
      %p201 = scmp.ne.s32.totalorder %s193, %s196
      %p202 = scmp.eq.s32.totalorder %s52, 0
      %p203 = por %p201, %p202
      %p204 = scmp.ne.s32.totalorder %s193, %s196
      %p205 = scmp.eq.s32.totalorder %s57, 1
      %p206 = por %p204, %p205
      %p207 = scmp.ne.s32.totalorder %s196, %s197
      %p208 = scmp.eq.s32.totalorder %s57, 0
      %p209 = por %p207, %p208
      %p210 = scmp.ne.s32.totalorder %s196, %s197
      %p211 = scmp.eq.s32.totalorder %s58, 1
      %p212 = por %p210, %p211
      %p214 = scmp.ne.s32.totalorder %s197, %s213
      %p215 = scmp.eq.s32.totalorder %s58, 0
      %p216 = por %p214, %p215
      %s217 = ssub.s32 %s52, %s59
      %p218 = scmp.eq.s32.totalorder %s217, 0
      %s220 = sadd.s32 %s219, 1
      %s221 = scalar_select %p218, %s219, %s220
      %p224 = pneg %p218
      %p225 = scmp.eq.s32.totalorder %s52, 1
      %p226 = por %p224, %p225
      %p227 = scmp.ne.s32.totalorder %s219, %s222
      %p228 = scmp.eq.s32.totalorder %s52, 0
      %p229 = por %p227, %p228
      %p230 = scmp.ne.s32.totalorder %s219, %s222
      %p231 = scmp.eq.s32.totalorder %s57, 1
      %p232 = por %p230, %p231
      %p233 = scmp.ne.s32.totalorder %s222, %s223
      %p234 = scmp.eq.s32.totalorder %s57, 0
      %p235 = por %p233, %p234
      %p236 = scmp.ne.s32.totalorder %s222, %s223
      %p237 = scmp.eq.s32.totalorder %s58, 1
      %p238 = por %p236, %p237
      %p240 = scmp.ne.s32.totalorder %s223, %s239
      %p241 = scmp.eq.s32.totalorder %s58, 0
      %p242 = por %p240, %p241
      %s243 = ssub.s32 %s52, %s59
      %p244 = scmp.eq.s32.totalorder %s243, 0
      %s246 = sadd.s32 %s245, 1
      %s247 = scalar_select %p244, %s245, %s246
      %p250 = pneg %p244
      %p251 = scmp.eq.s32.totalorder %s52, 1
      %p252 = por %p250, %p251
      %p253 = scmp.ne.s32.totalorder %s245, %s248
      %p254 = scmp.eq.s32.totalorder %s52, 0
      %p255 = por %p253, %p254
      %p256 = scmp.ne.s32.totalorder %s245, %s248
      %p257 = scmp.eq.s32.totalorder %s57, 1
      %p258 = por %p256, %p257
      %p259 = scmp.ne.s32.totalorder %s248, %s249
      %p260 = scmp.eq.s32.totalorder %s57, 0
      %p261 = por %p259, %p260
      %p262 = scmp.ne.s32.totalorder %s248, %s249
      %p263 = scmp.eq.s32.totalorder %s58, 1
      %p264 = por %p262, %p263
      %p266 = scmp.ne.s32.totalorder %s249, %s265
      %p267 = scmp.eq.s32.totalorder %s58, 0
      %p268 = por %p266, %p267
      %s269 = ssub.s32 %s52, %s59
      %p270 = scmp.eq.s32.totalorder %s269, 0
      %s272 = sadd.s32 %s271, 1
      %s273 = scalar_select %p270, %s271, %s272
      %p276 = pneg %p270
      %p277 = scmp.eq.s32.totalorder %s52, 1
      %p278 = por %p276, %p277
      %p279 = scmp.ne.s32.totalorder %s271, %s274
      %p280 = scmp.eq.s32.totalorder %s52, 0
      %p281 = por %p279, %p280
      %p282 = scmp.ne.s32.totalorder %s271, %s274
      %p283 = scmp.eq.s32.totalorder %s57, 1
      %p284 = por %p282, %p283
      %p285 = scmp.ne.s32.totalorder %s274, %s275
      %p286 = scmp.eq.s32.totalorder %s57, 0
      %p287 = por %p285, %p286
      %p288 = scmp.ne.s32.totalorder %s274, %s275
      %p289 = scmp.eq.s32.totalorder %s58, 1
      %p290 = por %p288, %p289
      %p292 = scmp.ne.s32.totalorder %s275, %s291
      %p293 = scmp.eq.s32.totalorder %s58, 0
      %p294 = por %p292, %p293
      %s295 = ssub.s32 %s52, %s59
      %p296 = scmp.eq.s32.totalorder %s295, 0
      %s298 = sadd.s32 %s297, 1
      %s299 = scalar_select %p296, %s297, %s298
      %p302 = pneg %p296
      %p303 = scmp.eq.s32.totalorder %s52, 1
      %p304 = por %p302, %p303
      %p305 = scmp.ne.s32.totalorder %s297, %s300
      %p306 = scmp.eq.s32.totalorder %s52, 0
      %p307 = por %p305, %p306
      %p308 = scmp.ne.s32.totalorder %s297, %s300
      %p309 = scmp.eq.s32.totalorder %s57, 1
      %p310 = por %p308, %p309
      %p311 = scmp.ne.s32.totalorder %s300, %s301
      %p312 = scmp.eq.s32.totalorder %s57, 0
      %p313 = por %p311, %p312
      %p314 = scmp.ne.s32.totalorder %s300, %s301
      %p315 = scmp.eq.s32.totalorder %s58, 1
      %p316 = por %p314, %p315
      %p318 = scmp.ne.s32.totalorder %s301, %s317
      %p319 = scmp.eq.s32.totalorder %s58, 0
      %p320 = por %p318, %p319
      %s321 = ssub.s32 %s52, %s59
      %p322 = scmp.eq.s32.totalorder %s321, 0
      %s324 = sadd.s32 %s323, 1
      %s325 = scalar_select %p322, %s323, %s324
      %p328 = pneg %p322
      %p329 = scmp.eq.s32.totalorder %s52, 1
      %p330 = por %p328, %p329
      %p331 = scmp.ne.s32.totalorder %s323, %s326
      %p332 = scmp.eq.s32.totalorder %s52, 0
      %p333 = por %p331, %p332
      %p334 = scmp.ne.s32.totalorder %s323, %s326
      %p335 = scmp.eq.s32.totalorder %s57, 1
      %p336 = por %p334, %p335
      %p337 = scmp.ne.s32.totalorder %s326, %s327
      %p338 = scmp.eq.s32.totalorder %s57, 0
      %p339 = por %p337, %p338
      %p340 = scmp.ne.s32.totalorder %s326, %s327
      %p341 = scmp.eq.s32.totalorder %s58, 1
      %p342 = por %p340, %p341
      %p344 = scmp.ne.s32.totalorder %s327, %s343
      %p345 = scmp.eq.s32.totalorder %s58, 0
      %p346 = por %p344, %p345
      %s347 = ssub.s32 %s52, %s59
      %p348 = scmp.eq.s32.totalorder %s347, 0
      %s350 = sadd.s32 %s349, 1
      %s351 = scalar_select %p348, %s349, %s350
      %p354 = pneg %p348
      %p355 = scmp.eq.s32.totalorder %s52, 1
      %p356 = por %p354, %p355
      %p357 = scmp.ne.s32.totalorder %s349, %s352
      %p358 = scmp.eq.s32.totalorder %s52, 0
      %p359 = por %p357, %p358
      %p360 = scmp.ne.s32.totalorder %s349, %s352
      %p361 = scmp.eq.s32.totalorder %s57, 1
      %p362 = por %p360, %p361
      %p363 = scmp.ne.s32.totalorder %s352, %s353
      %p364 = scmp.eq.s32.totalorder %s57, 0
      %p365 = por %p363, %p364
      %p366 = scmp.ne.s32.totalorder %s352, %s353
      %p367 = scmp.eq.s32.totalorder %s58, 1
      %p368 = por %p366, %p367
      %p370 = scmp.ne.s32.totalorder %s353, %s369
      %p371 = scmp.eq.s32.totalorder %s58, 0
      %p372 = por %p370, %p371
      %s373 = ssub.s32 %s52, %s59
      %p374 = scmp.eq.s32.totalorder %s373, 0
      %s376 = sadd.s32 %s375, 1
      %s377 = scalar_select %p374, %s375, %s376
      %p380 = pneg %p374
      %p381 = scmp.eq.s32.totalorder %s52, 1
      %p382 = por %p380, %p381
      %p383 = scmp.ne.s32.totalorder %s375, %s378
      %p384 = scmp.eq.s32.totalorder %s52, 0
      %p385 = por %p383, %p384
      %p386 = scmp.ne.s32.totalorder %s375, %s378
      %p387 = scmp.eq.s32.totalorder %s57, 1
      %p388 = por %p386, %p387
      %p389 = scmp.ne.s32.totalorder %s378, %s379
      %p390 = scmp.eq.s32.totalorder %s57, 0
      %p391 = por %p389, %p390
      %p392 = scmp.ne.s32.totalorder %s378, %s379
      %p393 = scmp.eq.s32.totalorder %s58, 1
      %p394 = por %p392, %p393
      %p396 = scmp.ne.s32.totalorder %s379, %s395
      %p397 = scmp.eq.s32.totalorder %s58, 0
      %p398 = por %p396, %p397
      %s399 = ssub.s32 %s52, %s59
      %p400 = scmp.eq.s32.totalorder %s399, 0
      %s402 = sadd.s32 %s401, 1
      %s403 = scalar_select %p400, %s401, %s402
      %p406 = pneg %p400
      %p407 = scmp.eq.s32.totalorder %s52, 1
      %p408 = por %p406, %p407
      %p409 = scmp.ne.s32.totalorder %s401, %s404
      %p410 = scmp.eq.s32.totalorder %s52, 0
      %p411 = por %p409, %p410
      %p412 = scmp.ne.s32.totalorder %s401, %s404
      %p413 = scmp.eq.s32.totalorder %s57, 1
      %p414 = por %p412, %p413
      %p415 = scmp.ne.s32.totalorder %s404, %s405
      %p416 = scmp.eq.s32.totalorder %s57, 0
      %p417 = por %p415, %p416
      %p418 = scmp.ne.s32.totalorder %s404, %s405
      %p419 = scmp.eq.s32.totalorder %s58, 1
      %p420 = por %p418, %p419
      %p422 = scmp.ne.s32.totalorder %s405, %s421
      %p423 = scmp.eq.s32.totalorder %s58, 0
      %p424 = por %p422, %p423
      %s425 = ssub.s32 %s52, %s59
      %p426 = scmp.eq.s32.totalorder %s425, 0
      %s428 = sadd.s32 %s427, 1
      %s429 = scalar_select %p426, %s427, %s428
      %p432 = pneg %p426
      %p433 = scmp.eq.s32.totalorder %s52, 1
      %p434 = por %p432, %p433
      %p435 = scmp.ne.s32.totalorder %s427, %s430
      %p436 = scmp.eq.s32.totalorder %s52, 0
      %p437 = por %p435, %p436
      %p438 = scmp.ne.s32.totalorder %s427, %s430
      %p439 = scmp.eq.s32.totalorder %s57, 1
      %p440 = por %p438, %p439
      %p441 = scmp.ne.s32.totalorder %s430, %s431
      %p442 = scmp.eq.s32.totalorder %s57, 0
      %p443 = por %p441, %p442
      %p444 = scmp.ne.s32.totalorder %s430, %s431
      %p445 = scmp.eq.s32.totalorder %s58, 1
      %p446 = por %p444, %p445
      %p448 = scmp.ne.s32.totalorder %s431, %s447
      %p449 = scmp.eq.s32.totalorder %s58, 0
      %p450 = por %p448, %p449
      %s451 = ssub.s32 %s52, %s59
      %p452 = scmp.eq.s32.totalorder %s451, 0
      %s454 = sadd.s32 %s453, 1
      %s455 = scalar_select %p452, %s453, %s454
      %p458 = pneg %p452
      %p459 = scmp.eq.s32.totalorder %s52, 1
      %p460 = por %p458, %p459
      %p461 = scmp.ne.s32.totalorder %s453, %s456
      %p462 = scmp.eq.s32.totalorder %s52, 0
      %p463 = por %p461, %p462
      %p464 = scmp.ne.s32.totalorder %s453, %s456
      %p465 = scmp.eq.s32.totalorder %s57, 1
      %p466 = por %p464, %p465
      %p467 = scmp.ne.s32.totalorder %s456, %s457
      %p468 = scmp.eq.s32.totalorder %s57, 0
      %p469 = por %p467, %p468
      %p470 = scmp.ne.s32.totalorder %s456, %s457
      %p471 = scmp.eq.s32.totalorder %s58, 1
      %p472 = por %p470, %p471
      %p474 = scmp.ne.s32.totalorder %s457, %s473
      %p475 = scmp.eq.s32.totalorder %s58, 0
      %p476 = por %p474, %p475
      %s477 = ssub.s32 %s52, %s59
      %p478 = scmp.eq.s32.totalorder %s477, 0
      %s480 = sadd.s32 %s479, 1
      %s481 = scalar_select %p478, %s479, %s480
      %p484 = pneg %p478
      %p485 = scmp.eq.s32.totalorder %s52, 1
      %p486 = por %p484, %p485
      %p487 = scmp.ne.s32.totalorder %s479, %s482
      %p488 = scmp.eq.s32.totalorder %s52, 0
      %p489 = por %p487, %p488
      %p490 = scmp.ne.s32.totalorder %s479, %s482
      %p491 = scmp.eq.s32.totalorder %s57, 1
      %p492 = por %p490, %p491
      %p493 = scmp.ne.s32.totalorder %s482, %s483
      %p494 = scmp.eq.s32.totalorder %s57, 0
      %p495 = por %p493, %p494
      %p496 = scmp.ne.s32.totalorder %s482, %s483
      %p497 = scmp.eq.s32.totalorder %s58, 1
      %p498 = por %p496, %p497
      %p500 = scmp.ne.s32.totalorder %s483, %s499
      %p501 = scmp.eq.s32.totalorder %s58, 0
      %p502 = por %p500, %p501
      %s503 = ssub.s32 %s52, %s59
      %p504 = scmp.eq.s32.totalorder %s503, 0
      %s506 = sadd.s32 %s505, 1
      %s507 = scalar_select %p504, %s505, %s506
      %p510 = pneg %p504
      %p511 = scmp.eq.s32.totalorder %s52, 1
      %p512 = por %p510, %p511
      %p513 = scmp.ne.s32.totalorder %s505, %s508
      %p514 = scmp.eq.s32.totalorder %s52, 0
      %p515 = por %p513, %p514
      %p516 = scmp.ne.s32.totalorder %s505, %s508
      %p517 = scmp.eq.s32.totalorder %s57, 1
      %p518 = por %p516, %p517
      %p519 = scmp.ne.s32.totalorder %s508, %s509
      %p520 = scmp.eq.s32.totalorder %s57, 0
      %p521 = por %p519, %p520
      %p522 = scmp.ne.s32.totalorder %s508, %s509
      %p523 = scmp.eq.s32.totalorder %s58, 1
      %p524 = por %p522, %p523
      %p526 = scmp.ne.s32.totalorder %s509, %s525
      %p527 = scmp.eq.s32.totalorder %s58, 0
      %p528 = por %p526, %p527
      %s529 = ssub.s32 %s52, %s59
      %p530 = scmp.eq.s32.totalorder %s529, 0
      %s532 = sadd.s32 %s531, 1
      %s533 = scalar_select %p530, %s531, %s532
      %p536 = pneg %p530
      %p537 = scmp.eq.s32.totalorder %s52, 1
      %p538 = por %p536, %p537
      %p539 = scmp.ne.s32.totalorder %s531, %s534
      %p540 = scmp.eq.s32.totalorder %s52, 0
      %p541 = por %p539, %p540
      %p542 = scmp.ne.s32.totalorder %s531, %s534
      %p543 = scmp.eq.s32.totalorder %s57, 1
      %p544 = por %p542, %p543
      %p545 = scmp.ne.s32.totalorder %s534, %s535
      %p546 = scmp.eq.s32.totalorder %s57, 0
      %p547 = por %p545, %p546
      %p548 = scmp.ne.s32.totalorder %s534, %s535
      %p549 = scmp.eq.s32.totalorder %s58, 1
      %p550 = por %p548, %p549
      %p552 = scmp.ne.s32.totalorder %s535, %s551
      %p553 = scmp.eq.s32.totalorder %s58, 0
      %p554 = por %p552, %p553
      %s555 = ssub.s32 %s52, %s59
      %p556 = scmp.eq.s32.totalorder %s555, 0
      %s558 = sadd.s32 %s557, 1
      %s559 = scalar_select %p556, %s557, %s558
      %p562 = pneg %p556
      %p563 = scmp.eq.s32.totalorder %s52, 1
      %p564 = por %p562, %p563
      %p565 = scmp.ne.s32.totalorder %s557, %s560
      %p566 = scmp.eq.s32.totalorder %s52, 0
      %p567 = por %p565, %p566
      %p568 = scmp.ne.s32.totalorder %s557, %s560
      %p569 = scmp.eq.s32.totalorder %s57, 1
      %p570 = por %p568, %p569
      %p571 = scmp.ne.s32.totalorder %s560, %s561
      %p572 = scmp.eq.s32.totalorder %s57, 0
      %p573 = por %p571, %p572
      %p574 = scmp.ne.s32.totalorder %s560, %s561
      %p575 = scmp.eq.s32.totalorder %s58, 1
      %p576 = por %p574, %p575
      %p578 = scmp.ne.s32.totalorder %s561, %s577
      %p579 = scmp.eq.s32.totalorder %s58, 0
      %p580 = por %p578, %p579
      %s581 = ssub.s32 %s52, %s59
      %p582 = scmp.eq.s32.totalorder %s581, 0
      %s584 = sadd.s32 %s583, 1
      %s585 = scalar_select %p582, %s583, %s584
      %p588 = pneg %p582
      %p589 = scmp.eq.s32.totalorder %s52, 1
      %p590 = por %p588, %p589
      %p591 = scmp.ne.s32.totalorder %s583, %s586
      %p592 = scmp.eq.s32.totalorder %s52, 0
      %p593 = por %p591, %p592
      %p594 = scmp.ne.s32.totalorder %s583, %s586
      %p595 = scmp.eq.s32.totalorder %s57, 1
      %p596 = por %p594, %p595
      %p597 = scmp.ne.s32.totalorder %s586, %s587
      %p598 = scmp.eq.s32.totalorder %s57, 0
      %p599 = por %p597, %p598
      %p600 = scmp.ne.s32.totalorder %s586, %s587
      %p601 = scmp.eq.s32.totalorder %s58, 1
      %p602 = por %p600, %p601
      %p604 = scmp.ne.s32.totalorder %s587, %s603
      %p605 = scmp.eq.s32.totalorder %s58, 0
      %p606 = por %p604, %p605
      %s607 = ssub.s32 %s52, %s59
      %p608 = scmp.eq.s32.totalorder %s607, 0
      %s610 = sadd.s32 %s609, 1
      %s611 = scalar_select %p608, %s609, %s610
      %p614 = pneg %p608
      %p615 = scmp.eq.s32.totalorder %s52, 1
      %p616 = por %p614, %p615
      %p617 = scmp.ne.s32.totalorder %s609, %s612
      %p618 = scmp.eq.s32.totalorder %s52, 0
      %p619 = por %p617, %p618
      %p620 = scmp.ne.s32.totalorder %s609, %s612
      %p621 = scmp.eq.s32.totalorder %s57, 1
      %p622 = por %p620, %p621
      %p623 = scmp.ne.s32.totalorder %s612, %s613
      %p624 = scmp.eq.s32.totalorder %s57, 0
      %p625 = por %p623, %p624
      %p626 = scmp.ne.s32.totalorder %s612, %s613
      %p627 = scmp.eq.s32.totalorder %s58, 1
      %p628 = por %p626, %p627
      %p630 = scmp.ne.s32.totalorder %s613, %s629
      %p631 = scmp.eq.s32.totalorder %s58, 0
      %p632 = por %p630, %p631
      %s633 = ssub.s32 %s52, %s59
      %p634 = scmp.eq.s32.totalorder %s633, 0
      %s636 = sadd.s32 %s635, 1
      %s637 = scalar_select %p634, %s635, %s636
      %p640 = pneg %p634
      %p641 = scmp.eq.s32.totalorder %s52, 1
      %p642 = por %p640, %p641
      %p643 = scmp.ne.s32.totalorder %s635, %s638
      %p644 = scmp.eq.s32.totalorder %s52, 0
      %p645 = por %p643, %p644
      %p646 = scmp.ne.s32.totalorder %s635, %s638
      %p647 = scmp.eq.s32.totalorder %s57, 1
      %p648 = por %p646, %p647
      %p649 = scmp.ne.s32.totalorder %s638, %s639
      %p650 = scmp.eq.s32.totalorder %s57, 0
      %p651 = por %p649, %p650
      %p652 = scmp.ne.s32.totalorder %s638, %s639
      %p653 = scmp.eq.s32.totalorder %s58, 1
      %p654 = por %p652, %p653
      %p656 = scmp.ne.s32.totalorder %s639, %s655
      %p657 = scmp.eq.s32.totalorder %s58, 0
      %p658 = por %p656, %p657
      %s659 = ssub.s32 %s52, %s59
      %p660 = scmp.eq.s32.totalorder %s659, 0
      %s662 = sadd.s32 %s661, 1
      %s663 = scalar_select %p660, %s661, %s662
      %p666 = pneg %p660
      %p667 = scmp.eq.s32.totalorder %s52, 1
      %p668 = por %p666, %p667
      %p669 = scmp.ne.s32.totalorder %s661, %s664
      %p670 = scmp.eq.s32.totalorder %s52, 0
      %p671 = por %p669, %p670
      %p672 = scmp.ne.s32.totalorder %s661, %s664
      %p673 = scmp.eq.s32.totalorder %s57, 1
      %p674 = por %p672, %p673
      %p675 = scmp.ne.s32.totalorder %s664, %s665
      %p676 = scmp.eq.s32.totalorder %s57, 0
      %p677 = por %p675, %p676
      %p678 = scmp.ne.s32.totalorder %s664, %s665
      %p679 = scmp.eq.s32.totalorder %s58, 1
      %p680 = por %p678, %p679
      %p682 = scmp.ne.s32.totalorder %s665, %s681
      %p683 = scmp.eq.s32.totalorder %s58, 0
      %p684 = por %p682, %p683
      %s686 = sadd.s32 %s685, 1
      %p689 = scmp.eq.s32.totalorder %s52, 1
      %p690 = scmp.ne.s32.totalorder %s685, %s687
      %p691 = scmp.eq.s32.totalorder %s52, 0
      %p692 = por %p690, %p691
      %p693 = scmp.ne.s32.totalorder %s685, %s687
      %p694 = scmp.eq.s32.totalorder %s57, 1
      %p695 = por %p693, %p694
      %p696 = scmp.ne.s32.totalorder %s687, %s688
      %p697 = scmp.eq.s32.totalorder %s57, 0
      %p698 = por %p696, %p697
      %p699 = scmp.ne.s32.totalorder %s687, %s688
      %p700 = scmp.eq.s32.totalorder %s58, 1
      %p701 = por %p699, %p700
      %p703 = scmp.ne.s32.totalorder %s688, %s702
      %p704 = scmp.eq.s32.totalorder %s58, 0
      %p705 = por %p703, %p704
      %s707 = sadd.s32 %s706, 1
      %p710 = scmp.eq.s32.totalorder %s52, 1
      %p711 = scmp.ne.s32.totalorder %s706, %s708
      %p712 = scmp.eq.s32.totalorder %s52, 0
      %p713 = por %p711, %p712
      %p714 = scmp.ne.s32.totalorder %s706, %s708
      %p715 = scmp.eq.s32.totalorder %s57, 1
      %p716 = por %p714, %p715
      %p717 = scmp.ne.s32.totalorder %s708, %s709
      %p718 = scmp.eq.s32.totalorder %s57, 0
      %p719 = por %p717, %p718
      %p720 = scmp.ne.s32.totalorder %s708, %s709
      %p721 = scmp.eq.s32.totalorder %s58, 1
      %p722 = por %p720, %p721
      %p724 = scmp.ne.s32.totalorder %s709, %s723
      %p725 = scmp.eq.s32.totalorder %s58, 0
      %p726 = por %p724, %p725
      %s728 = sadd.s32 %s727, 1
      %p731 = scmp.eq.s32.totalorder %s52, 1
      %p732 = scmp.ne.s32.totalorder %s727, %s729
      %p733 = scmp.eq.s32.totalorder %s52, 0
      %p734 = por %p732, %p733
      %p735 = scmp.ne.s32.totalorder %s727, %s729
      %p736 = scmp.eq.s32.totalorder %s57, 1
      %p737 = por %p735, %p736
      %p738 = scmp.ne.s32.totalorder %s729, %s730
      %p739 = scmp.eq.s32.totalorder %s57, 0
      %p740 = por %p738, %p739
      %p741 = scmp.ne.s32.totalorder %s729, %s730
      %p742 = scmp.eq.s32.totalorder %s58, 1
      %p743 = por %p741, %p742
      %p745 = scmp.ne.s32.totalorder %s730, %s744
      %p746 = scmp.eq.s32.totalorder %s58, 0
      %p747 = por %p745, %p746
      %p748 = scmp.le.s32.totalorder 1, %s52
      %p749 = scmp.lt.s32.totalorder %s52, 3
      %p750 = pnand %p748, %p749
      %p751 = pneg %p750
      // Predicated region
      $region9: #{tpu_custom_call.1} parent=5 // pred_check
        _
      $region10: #{tpu_custom_call.1} parent=5 // pred_check_branch
        %753 = sbr.rel (%p750) target = $region12
      $region11: #{tpu_custom_call.1} parent=5 // pred_region
        %s754 = ssub.s32 %s52, 1
        // Predicated region
        $region13: #{tpu_custom_call.1} parent=11 // pred_check
          %p755 = pneg %p73
        $region14: #{tpu_custom_call.1} parent=11 // pred_check_branch
          %757 = sbr.rel (%p755) target = $region16
        $region15: #{tpu_custom_call.1} parent=11 // pred_region
          %s759 = ssub.s32 256, 256
          %760 = vsyncadd [#allocation5], %s759
          %s761 = sshll.u32 [#allocation4], 4
          %s762 = int_to_ptr.vmem [resolvable:$true] %s761
          %767 = dma.hbm_to_vmem [thread:$0]  %s0, 256, %s762, [#allocation5], 128, 128, 8
        $region16: #{tpu_custom_call.1} parent=11 // pred_fallthru
          _
        // Predicated region
        $region17: #{tpu_custom_call.1} parent=11 // pred_check
          %p768 = pneg %p94
        $region18: #{tpu_custom_call.1} parent=11 // pred_check_branch
          %770 = sbr.rel (%p768) target = $region20
        $region19: #{tpu_custom_call.1} parent=11 // pred_region
          %s772 = ssub.s32 128, 128
          %773 = vsyncadd [#allocation8], %s772
          %s775 = sshll.u32 [#allocation7], 4
          %s776 = int_to_ptr.vmem [resolvable:$true] %s775
          %778 = dma.hbm_to_vmem [thread:$0]  %s1, 128, %s776, [#allocation8]
        $region20: #{tpu_custom_call.1} parent=11 // pred_fallthru
          _
        // Predicated region
        $region21: #{tpu_custom_call.1} parent=11 // pred_check
          %p779 = pneg %p115
        $region22: #{tpu_custom_call.1} parent=11 // pred_check_branch
          %781 = sbr.rel (%p779) target = $region24
        $region23: #{tpu_custom_call.1} parent=11 // pred_region
          %s783 = ssub.s32 256, 256
          %784 = vsyncadd [#allocation8], %s783
          %s785 = sshll.u32 [#allocation9], 4
          %s786 = int_to_ptr.vmem [resolvable:$true] %s785
          %791 = dma.hbm_to_vmem [thread:$0]  %s2, 256, %s786, [#allocation8], 128, 128, 8
        $region24: #{tpu_custom_call.1} parent=11 // pred_fallthru
          _
        // Predicated region
        $region25: #{tpu_custom_call.1} parent=11 // pred_check
          %p792 = pneg %p136
        $region26: #{tpu_custom_call.1} parent=11 // pred_check_branch
          %794 = sbr.rel (%p792) target = $region28
        $region27: #{tpu_custom_call.1} parent=11 // pred_region
          %s796 = ssub.s32 256, 256
          %797 = vsyncadd [#allocation11], %s796
          %s798 = sshll.u32 [#allocation10], 4
          %s799 = int_to_ptr.vmem [resolvable:$true] %s798
          %804 = dma.hbm_to_vmem [thread:$0]  %s3, 256, %s799, [#allocation11], 128, 128, 8
        $region28: #{tpu_custom_call.1} parent=11 // pred_fallthru
          _
        // Predicated region
        $region29: #{tpu_custom_call.1} parent=11 // pred_check
          %p805 = pneg %p157
        $region30: #{tpu_custom_call.1} parent=11 // pred_check_branch
          %807 = sbr.rel (%p805) target = $region32
        $region31: #{tpu_custom_call.1} parent=11 // pred_region
          %s809 = ssub.s32 256, 256
          %810 = vsyncadd [#allocation11], %s809
          %s811 = sshll.u32 [#allocation12], 4
          %s812 = int_to_ptr.vmem [resolvable:$true] %s811
          %817 = dma.hbm_to_vmem [thread:$0]  %s4, 256, %s812, [#allocation11], 128, 128, 8
        $region32: #{tpu_custom_call.1} parent=11 // pred_fallthru
          _
        // Predicated region
        $region33: #{tpu_custom_call.1} parent=11 // pred_check
          %p818 = pneg %p698
        $region34: #{tpu_custom_call.1} parent=11 // pred_check_branch
          %820 = sbr.rel (%p818) target = $region36
        $region35: #{tpu_custom_call.1} parent=11 // pred_region
          _
        $region36: #{tpu_custom_call.1} parent=11 // pred_fallthru
          _
        // Predicated region
        $region37: #{tpu_custom_call.1} parent=11 // pred_check
          %p821 = pneg %p719
        $region38: #{tpu_custom_call.1} parent=11 // pred_check_branch
          %823 = sbr.rel (%p821) target = $region40
        $region39: #{tpu_custom_call.1} parent=11 // pred_region
          _
        $region40: #{tpu_custom_call.1} parent=11 // pred_fallthru
          _
      $region12: #{tpu_custom_call.1} parent=5 // pred_fallthru
        _
      %p824 = scmp.lt.s32.totalorder %s52, 2
      // Predicated region
      $region41: #{tpu_custom_call.1} parent=5 // pred_check
        %p825 = pneg %p824
      $region42: #{tpu_custom_call.1} parent=5 // pred_check_branch
        %827 = sbr.rel (%p825) target = $region44
      $region43: #{tpu_custom_call.1} parent=5 // pred_region
        // Predicated region
        $region45: #{tpu_custom_call.1} parent=43 // pred_check
          %p828 = pneg %p177
        $region46: #{tpu_custom_call.1} parent=43 // pred_check_branch
          %830 = sbr.rel (%p828) target = $region48
        $region47: #{tpu_custom_call.1} parent=43 // pred_region
          %p831 = scmp.lt.s32.totalorder %s52, 1
          %s832 = scalar_select %p831, %s52, 1
          %s833 = smul.addr %s832, 4
          %s834 = smul.addr %s833, 4
          %s835 = scalar_lea.vmem %s5, %s834
        $region48: #{tpu_custom_call.1} parent=43 // pred_fallthru
          _
        // Predicated region
        $region49: #{tpu_custom_call.1} parent=43 // pred_check
          %p836 = pneg %p203
        $region50: #{tpu_custom_call.1} parent=43 // pred_check_branch
          %838 = sbr.rel (%p836) target = $region52
        $region51: #{tpu_custom_call.1} parent=43 // pred_region
          %s839 = sand.u32 %s52, 1
          %s840 = scalar_lea.sflag [#allocation14], %s839
          %s841 = sand.u32 %s193, 1
          %s842 = scalar_lea.vmem [#allocation13], %s841
          %s844 = ssub.s32 16, 16
          %845 = vsyncadd %s840, %s844
          %s846 = smul.addr %s52, 16
          %s847 = scalar_lea.hbm %s6, %s846
          %s849 = sshll.u32 %s842, 4
          %s850 = int_to_ptr.vmem [resolvable:$true] %s849
          %852 = dma.hbm_to_vmem [thread:$0]  %s847, 16, %s850, %s840
        $region52: #{tpu_custom_call.1} parent=43 // pred_fallthru
          _
        // Predicated region
        $region53: #{tpu_custom_call.1} parent=43 // pred_check
          %p853 = pneg %p229
        $region54: #{tpu_custom_call.1} parent=43 // pred_check_branch
          %855 = sbr.rel (%p853) target = $region56
        $region55: #{tpu_custom_call.1} parent=43 // pred_region
          %p856 = scmp.lt.s32.totalorder %s52, 1
          %s857 = scalar_select %p856, %s52, 1
          %s858 = smul.addr %s857, 4
          %s859 = smul.addr %s858, 4
          %s860 = scalar_lea.vmem %s7, %s859
        $region56: #{tpu_custom_call.1} parent=43 // pred_fallthru
          _
        // Predicated region
        $region57: #{tpu_custom_call.1} parent=43 // pred_check
          %p861 = pneg %p255
        $region58: #{tpu_custom_call.1} parent=43 // pred_check_branch
          %863 = sbr.rel (%p861) target = $region60
        $region59: #{tpu_custom_call.1} parent=43 // pred_region
          %s864 = sand.u32 %s52, 1
          %s865 = scalar_lea.sflag [#allocation14], %s864
          %s866 = sand.u32 %s245, 1
          %s867 = scalar_lea.vmem [#allocation15], %s866
          %s869 = ssub.s32 16, 16
          %870 = vsyncadd %s865, %s869
          %s871 = smul.addr %s52, 16
          %s872 = scalar_lea.hbm %s8, %s871
          %s874 = sshll.u32 %s867, 4
          %s875 = int_to_ptr.vmem [resolvable:$true] %s874
          %877 = dma.hbm_to_vmem [thread:$0]  %s872, 16, %s875, %s865
        $region60: #{tpu_custom_call.1} parent=43 // pred_fallthru
          _
        // Predicated region
        $region61: #{tpu_custom_call.1} parent=43 // pred_check
          %p878 = pneg %p281
        $region62: #{tpu_custom_call.1} parent=43 // pred_check_branch
          %880 = sbr.rel (%p878) target = $region64
        $region63: #{tpu_custom_call.1} parent=43 // pred_region
          %s881 = sand.u32 %s52, 1
          %s882 = scalar_lea.sflag [#allocation17], %s881
          %s883 = sand.u32 %s271, 1
          %s884 = scalar_lea.vmem [#allocation16], %s883
          %s886 = ssub.s32 16, 16
          %887 = vsyncadd %s882, %s886
          %s888 = smul.addr %s52, 16
          %s889 = scalar_lea.hbm %s9, %s888
          %s891 = sshll.u32 %s884, 4
          %s892 = int_to_ptr.vmem [resolvable:$true] %s891
          %894 = dma.hbm_to_vmem [thread:$0]  %s889, 16, %s892, %s882
        $region64: #{tpu_custom_call.1} parent=43 // pred_fallthru
          _
        // Predicated region
        $region65: #{tpu_custom_call.1} parent=43 // pred_check
          %p895 = pneg %p307
        $region66: #{tpu_custom_call.1} parent=43 // pred_check_branch
          %897 = sbr.rel (%p895) target = $region68
        $region67: #{tpu_custom_call.1} parent=43 // pred_region
          %s898 = sand.u32 %s52, 1
          %s899 = scalar_lea.sflag [#allocation17], %s898
          %s900 = sand.u32 %s297, 1
          %s901 = scalar_lea.vmem [#allocation18], %s900
          %s903 = ssub.s32 16, 16
          %904 = vsyncadd %s899, %s903
          %s905 = smul.addr %s52, 16
          %s906 = scalar_lea.hbm %s10, %s905
          %s908 = sshll.u32 %s901, 4
          %s909 = int_to_ptr.vmem [resolvable:$true] %s908
          %911 = dma.hbm_to_vmem [thread:$0]  %s906, 16, %s909, %s899
        $region68: #{tpu_custom_call.1} parent=43 // pred_fallthru
          _
        // Predicated region
        $region69: #{tpu_custom_call.1} parent=43 // pred_check
          %p912 = pneg %p333
        $region70: #{tpu_custom_call.1} parent=43 // pred_check_branch
          %914 = sbr.rel (%p912) target = $region72
        $region71: #{tpu_custom_call.1} parent=43 // pred_region
          %p915 = scmp.lt.s32.totalorder %s52, 1
          %s916 = scalar_select %p915, %s52, 1
          %s917 = smul.addr %s916, 4
          %s918 = smul.addr %s917, 4
          %s919 = scalar_lea.vmem %s11, %s918
        $region72: #{tpu_custom_call.1} parent=43 // pred_fallthru
          _
        // Predicated region
        $region73: #{tpu_custom_call.1} parent=43 // pred_check
          %p920 = pneg %p359
        $region74: #{tpu_custom_call.1} parent=43 // pred_check_branch
          %922 = sbr.rel (%p920) target = $region76
        $region75: #{tpu_custom_call.1} parent=43 // pred_region
          %s923 = sand.u32 %s52, 1
          %s924 = scalar_lea.sflag [#allocation20], %s923
          %s925 = sand.u32 %s349, 1
          %s926 = scalar_lea.vmem [#allocation19], %s925
          %s928 = ssub.s32 16, 16
          %929 = vsyncadd %s924, %s928
          %s930 = smul.addr %s52, 16
          %s931 = scalar_lea.hbm %s12, %s930
          %s933 = sshll.u32 %s926, 4
          %s934 = int_to_ptr.vmem [resolvable:$true] %s933
          %936 = dma.hbm_to_vmem [thread:$0]  %s931, 16, %s934, %s924
        $region76: #{tpu_custom_call.1} parent=43 // pred_fallthru
          _
        // Predicated region
        $region77: #{tpu_custom_call.1} parent=43 // pred_check
          %p937 = pneg %p385
        $region78: #{tpu_custom_call.1} parent=43 // pred_check_branch
          %939 = sbr.rel (%p937) target = $region80
        $region79: #{tpu_custom_call.1} parent=43 // pred_region
          %p940 = scmp.lt.s32.totalorder %s52, 1
          %s941 = scalar_select %p940, %s52, 1
          %s942 = smul.addr %s941, 4
          %s943 = smul.addr %s942, 4
          %s944 = scalar_lea.vmem %s13, %s943
        $region80: #{tpu_custom_call.1} parent=43 // pred_fallthru
          _
        // Predicated region
        $region81: #{tpu_custom_call.1} parent=43 // pred_check
          %p945 = pneg %p411
        $region82: #{tpu_custom_call.1} parent=43 // pred_check_branch
          %947 = sbr.rel (%p945) target = $region84
        $region83: #{tpu_custom_call.1} parent=43 // pred_region
          %s948 = sand.u32 %s52, 1
          %s949 = scalar_lea.sflag [#allocation20], %s948
          %s950 = sand.u32 %s401, 1
          %s951 = scalar_lea.vmem [#allocation21], %s950
          %s953 = ssub.s32 16, 16
          %954 = vsyncadd %s949, %s953
          %s955 = smul.addr %s52, 16
          %s956 = scalar_lea.hbm %s14, %s955
          %s958 = sshll.u32 %s951, 4
          %s959 = int_to_ptr.vmem [resolvable:$true] %s958
          %961 = dma.hbm_to_vmem [thread:$0]  %s956, 16, %s959, %s949
        $region84: #{tpu_custom_call.1} parent=43 // pred_fallthru
          _
        // Predicated region
        $region85: #{tpu_custom_call.1} parent=43 // pred_check
          %p962 = pneg %p437
        $region86: #{tpu_custom_call.1} parent=43 // pred_check_branch
          %964 = sbr.rel (%p962) target = $region88
        $region87: #{tpu_custom_call.1} parent=43 // pred_region
          %s965 = sand.u32 %s52, 1
          %s966 = scalar_lea.sflag [#allocation23], %s965
          %s967 = sand.u32 %s427, 1
          %s968 = smul.addr %s967, 16
          %s969 = scalar_lea.vmem [#allocation22], %s968
          %s971 = ssub.s32 256, 256
          %972 = vsyncadd %s966, %s971
          %s973 = smul.addr %s52, 4
          %s974 = smul.addr %s973, 64
          %s975 = scalar_lea.hbm %s15, %s974
          %s976 = sshll.u32 %s969, 4
          %s977 = int_to_ptr.vmem [resolvable:$true] %s976
          %982 = dma.hbm_to_vmem [thread:$0]  %s975, 256, %s977, %s966, 64, 64, 4
        $region88: #{tpu_custom_call.1} parent=43 // pred_fallthru
          _
        // Predicated region
        $region89: #{tpu_custom_call.1} parent=43 // pred_check
          %p983 = pneg %p463
        $region90: #{tpu_custom_call.1} parent=43 // pred_check_branch
          %985 = sbr.rel (%p983) target = $region92
        $region91: #{tpu_custom_call.1} parent=43 // pred_region
          %s986 = sand.u32 %s52, 1
          %s987 = scalar_lea.sflag [#allocation23], %s986
          %s988 = sand.u32 %s453, 1
          %s989 = scalar_lea.vmem [#allocation24], %s988
          %s991 = ssub.s32 16, 16
          %992 = vsyncadd %s987, %s991
          %s993 = smul.addr %s52, 16
          %s994 = scalar_lea.hbm %s16, %s993
          %s996 = sshll.u32 %s989, 4
          %s997 = int_to_ptr.vmem [resolvable:$true] %s996
          %999 = dma.hbm_to_vmem [thread:$0]  %s994, 16, %s997, %s987
        $region92: #{tpu_custom_call.1} parent=43 // pred_fallthru
          _
        // Predicated region
        $region93: #{tpu_custom_call.1} parent=43 // pred_check
          %p1000 = pneg %p489
        $region94: #{tpu_custom_call.1} parent=43 // pred_check_branch
          %1002 = sbr.rel (%p1000) target = $region96
        $region95: #{tpu_custom_call.1} parent=43 // pred_region
          %s1003 = sand.u32 %s52, 1
          %s1004 = scalar_lea.sflag [#allocation26], %s1003
          %s1005 = sand.u32 %s479, 1
          %s1006 = scalar_lea.vmem [#allocation25], %s1005
          %s1008 = ssub.s32 16, 16
          %1009 = vsyncadd %s1004, %s1008
          %s1010 = smul.addr %s52, 16
          %s1011 = scalar_lea.hbm %s17, %s1010
          %s1013 = sshll.u32 %s1006, 4
          %s1014 = int_to_ptr.vmem [resolvable:$true] %s1013
          %1016 = dma.hbm_to_vmem [thread:$0]  %s1011, 16, %s1014, %s1004
        $region96: #{tpu_custom_call.1} parent=43 // pred_fallthru
          _
        // Predicated region
        $region97: #{tpu_custom_call.1} parent=43 // pred_check
          %p1017 = pneg %p515
        $region98: #{tpu_custom_call.1} parent=43 // pred_check_branch
          %1019 = sbr.rel (%p1017) target = $region100
        $region99: #{tpu_custom_call.1} parent=43 // pred_region
          %p1020 = scmp.lt.s32.totalorder %s52, 1
          %s1021 = scalar_select %p1020, %s52, 1
          %s1022 = scalar_lea.vmem %s18, %s1021
        $region100: #{tpu_custom_call.1} parent=43 // pred_fallthru
          _
        // Predicated region
        $region101: #{tpu_custom_call.1} parent=43 // pred_check
          %p1023 = pneg %p541
        $region102: #{tpu_custom_call.1} parent=43 // pred_check_branch
          %1025 = sbr.rel (%p1023) target = $region104
        $region103: #{tpu_custom_call.1} parent=43 // pred_region
          %s1026 = sand.u32 %s52, 1
          %s1027 = scalar_lea.sflag [#allocation26], %s1026
          %s1028 = sand.u32 %s531, 1
          %s1029 = smul.addr %s1028, 16
          %s1030 = scalar_lea.vmem [#allocation27], %s1029
          %s1032 = ssub.s32 256, 256
          %1033 = vsyncadd %s1027, %s1032
          %s1034 = smul.addr %s52, 4
          %s1035 = smul.addr %s1034, 64
          %s1036 = scalar_lea.hbm %s19, %s1035
          %s1037 = sshll.u32 %s1030, 4
          %s1038 = int_to_ptr.vmem [resolvable:$true] %s1037
          %1043 = dma.hbm_to_vmem [thread:$0]  %s1036, 256, %s1038, %s1027, 64, 64, 4
        $region104: #{tpu_custom_call.1} parent=43 // pred_fallthru
          _
        // Predicated region
        $region105: #{tpu_custom_call.1} parent=43 // pred_check
          %p1044 = pneg %p567
        $region106: #{tpu_custom_call.1} parent=43 // pred_check_branch
          %1046 = sbr.rel (%p1044) target = $region108
        $region107: #{tpu_custom_call.1} parent=43 // pred_region
          %p1047 = scmp.lt.s32.totalorder %s52, 1
          %s1048 = scalar_select %p1047, %s52, 1
          %s1049 = scalar_lea.vmem %s20, %s1048
        $region108: #{tpu_custom_call.1} parent=43 // pred_fallthru
          _
        // Predicated region
        $region109: #{tpu_custom_call.1} parent=43 // pred_check
          %p1050 = pneg %p593
        $region110: #{tpu_custom_call.1} parent=43 // pred_check_branch
          %1052 = sbr.rel (%p1050) target = $region112
        $region111: #{tpu_custom_call.1} parent=43 // pred_region
          %p1053 = scmp.lt.s32.totalorder %s52, 1
          %s1054 = scalar_select %p1053, %s52, 1
          %s1055 = smul.addr %s1054, 8
          %s1056 = smul.addr %s1055, 4
          %s1057 = scalar_lea.vmem %s21, %s1056
        $region112: #{tpu_custom_call.1} parent=43 // pred_fallthru
          _
        // Predicated region
        $region113: #{tpu_custom_call.1} parent=43 // pred_check
          %p1058 = pneg %p619
        $region114: #{tpu_custom_call.1} parent=43 // pred_check_branch
          %1060 = sbr.rel (%p1058) target = $region116
        $region115: #{tpu_custom_call.1} parent=43 // pred_region
          %p1061 = scmp.lt.s32.totalorder %s52, 1
          %s1062 = scalar_select %p1061, %s52, 1
          %s1063 = scalar_lea.vmem %s22, %s1062
        $region116: #{tpu_custom_call.1} parent=43 // pred_fallthru
          _
        // Predicated region
        $region117: #{tpu_custom_call.1} parent=43 // pred_check
          %p1064 = pneg %p645
        $region118: #{tpu_custom_call.1} parent=43 // pred_check_branch
          %1066 = sbr.rel (%p1064) target = $region120
        $region119: #{tpu_custom_call.1} parent=43 // pred_region
          %p1067 = scmp.lt.s32.totalorder %s52, 1
          %s1068 = scalar_select %p1067, %s52, 1
          %s1069 = scalar_lea.vmem %s23, %s1068
        $region120: #{tpu_custom_call.1} parent=43 // pred_fallthru
          _
        // Predicated region
        $region121: #{tpu_custom_call.1} parent=43 // pred_check
          %p1070 = pneg %p671
        $region122: #{tpu_custom_call.1} parent=43 // pred_check_branch
          %1072 = sbr.rel (%p1070) target = $region124
        $region123: #{tpu_custom_call.1} parent=43 // pred_region
          %p1073 = scmp.lt.s32.totalorder %s52, 1
          %s1074 = scalar_select %p1073, %s52, 1
          %s1075 = scalar_lea.vmem %s24, %s1074
        $region124: #{tpu_custom_call.1} parent=43 // pred_fallthru
          _
      $region44: #{tpu_custom_call.1} parent=5 // pred_fallthru
        _
      %p1076 = scmp.le.s32.totalorder 1, %s52
      %p1077 = scmp.lt.s32.totalorder %s52, 3
      %p1078 = pnand %p1076, %p1077
      %p1079 = pneg %p1078
      // Predicated region
      $region125: #{tpu_custom_call.1} parent=5 // pred_check
        _
      $region126: #{tpu_custom_call.1} parent=5 // pred_check_branch
        %1081 = sbr.rel (%p1078) target = $region128
      $region127: #{tpu_custom_call.1} parent=5 // pred_region
        %s1082 = ssub.s32 %s52, 1
        // Predicated region
        $region129: #{tpu_custom_call.1} parent=127 // pred_check
          %p1083 = pneg %p73
        $region130: #{tpu_custom_call.1} parent=127 // pred_check_branch
          %1085 = sbr.rel (%p1083) target = $region132
        $region131: #{tpu_custom_call.1} parent=127 // pred_region
          %1086 = dma.done [#allocation5], 256
        $region132: #{tpu_custom_call.1} parent=127 // pred_fallthru
          _
        // Predicated region
        $region133: #{tpu_custom_call.1} parent=127 // pred_check
          %p1087 = pneg %p94
        $region134: #{tpu_custom_call.1} parent=127 // pred_check_branch
          %1089 = sbr.rel (%p1087) target = $region136
        $region135: #{tpu_custom_call.1} parent=127 // pred_region
          %1090 = dma.done [#allocation8], 128
        $region136: #{tpu_custom_call.1} parent=127 // pred_fallthru
          _
        // Predicated region
        $region137: #{tpu_custom_call.1} parent=127 // pred_check
          %p1091 = pneg %p115
        $region138: #{tpu_custom_call.1} parent=127 // pred_check_branch
          %1093 = sbr.rel (%p1091) target = $region140
        $region139: #{tpu_custom_call.1} parent=127 // pred_region
          %1094 = dma.done [#allocation8], 256
        $region140: #{tpu_custom_call.1} parent=127 // pred_fallthru
          _
        // Predicated region
        $region141: #{tpu_custom_call.1} parent=127 // pred_check
          %p1095 = pneg %p136
        $region142: #{tpu_custom_call.1} parent=127 // pred_check_branch
          %1097 = sbr.rel (%p1095) target = $region144
        $region143: #{tpu_custom_call.1} parent=127 // pred_region
          %1098 = dma.done [#allocation11], 256
        $region144: #{tpu_custom_call.1} parent=127 // pred_fallthru
          _
        // Predicated region
        $region145: #{tpu_custom_call.1} parent=127 // pred_check
          %p1099 = pneg %p157
        $region146: #{tpu_custom_call.1} parent=127 // pred_check_branch
          %1101 = sbr.rel (%p1099) target = $region148
        $region147: #{tpu_custom_call.1} parent=127 // pred_region
          %1102 = dma.done [#allocation11], 256
        $region148: #{tpu_custom_call.1} parent=127 // pred_fallthru
          _
        %s1103 = sand.u32 %s57, 1
        %s1104 = scalar_lea.sflag [#allocation14], %s1103
        %s1105 = sand.u32 %s196, 1
        %s1106 = scalar_lea.vmem [#allocation13], %s1105
        // Predicated region
        $region149: #{tpu_custom_call.1} parent=127 // pred_check
          %p1107 = pneg %p209
        $region150: #{tpu_custom_call.1} parent=127 // pred_check_branch
          %1109 = sbr.rel (%p1107) target = $region152
        $region151: #{tpu_custom_call.1} parent=127 // pred_region
          %1110 = dma.done %s1104, 16
        $region152: #{tpu_custom_call.1} parent=127 // pred_fallthru
          _
        %s1111 = sand.u32 %s57, 1
        %s1112 = scalar_lea.sflag [#allocation14], %s1111
        %s1113 = sand.u32 %s248, 1
        %s1114 = scalar_lea.vmem [#allocation15], %s1113
        // Predicated region
        $region153: #{tpu_custom_call.1} parent=127 // pred_check
          %p1115 = pneg %p261
        $region154: #{tpu_custom_call.1} parent=127 // pred_check_branch
          %1117 = sbr.rel (%p1115) target = $region156
        $region155: #{tpu_custom_call.1} parent=127 // pred_region
          %1118 = dma.done %s1112, 16
        $region156: #{tpu_custom_call.1} parent=127 // pred_fallthru
          _
        %s1119 = sand.u32 %s57, 1
        %s1120 = scalar_lea.sflag [#allocation17], %s1119
        %s1121 = sand.u32 %s274, 1
        %s1122 = scalar_lea.vmem [#allocation16], %s1121
        // Predicated region
        $region157: #{tpu_custom_call.1} parent=127 // pred_check
          %p1123 = pneg %p287
        $region158: #{tpu_custom_call.1} parent=127 // pred_check_branch
          %1125 = sbr.rel (%p1123) target = $region160
        $region159: #{tpu_custom_call.1} parent=127 // pred_region
          %1126 = dma.done %s1120, 16
        $region160: #{tpu_custom_call.1} parent=127 // pred_fallthru
          _
        %s1127 = sand.u32 %s57, 1
        %s1128 = scalar_lea.sflag [#allocation17], %s1127
        %s1129 = sand.u32 %s300, 1
        %s1130 = scalar_lea.vmem [#allocation18], %s1129
        // Predicated region
        $region161: #{tpu_custom_call.1} parent=127 // pred_check
          %p1131 = pneg %p313
        $region162: #{tpu_custom_call.1} parent=127 // pred_check_branch
          %1133 = sbr.rel (%p1131) target = $region164
        $region163: #{tpu_custom_call.1} parent=127 // pred_region
          %1134 = dma.done %s1128, 16
        $region164: #{tpu_custom_call.1} parent=127 // pred_fallthru
          _
        %s1135 = sand.u32 %s57, 1
        %s1136 = scalar_lea.sflag [#allocation20], %s1135
        %s1137 = sand.u32 %s352, 1
        %s1138 = scalar_lea.vmem [#allocation19], %s1137
        // Predicated region
        $region165: #{tpu_custom_call.1} parent=127 // pred_check
          %p1139 = pneg %p365
        $region166: #{tpu_custom_call.1} parent=127 // pred_check_branch
          %1141 = sbr.rel (%p1139) target = $region168
        $region167: #{tpu_custom_call.1} parent=127 // pred_region
          %1142 = dma.done %s1136, 16
        $region168: #{tpu_custom_call.1} parent=127 // pred_fallthru
          _
        %s1143 = sand.u32 %s57, 1
        %s1144 = scalar_lea.sflag [#allocation20], %s1143
        %s1145 = sand.u32 %s404, 1
        %s1146 = scalar_lea.vmem [#allocation21], %s1145
        // Predicated region
        $region169: #{tpu_custom_call.1} parent=127 // pred_check
          %p1147 = pneg %p417
        $region170: #{tpu_custom_call.1} parent=127 // pred_check_branch
          %1149 = sbr.rel (%p1147) target = $region172
        $region171: #{tpu_custom_call.1} parent=127 // pred_region
          %1150 = dma.done %s1144, 16
        $region172: #{tpu_custom_call.1} parent=127 // pred_fallthru
          _
        %s1151 = sand.u32 %s57, 1
        %s1152 = scalar_lea.sflag [#allocation23], %s1151
        %s1153 = sand.u32 %s430, 1
        %s1154 = smul.addr %s1153, 16
        %s1155 = scalar_lea.vmem [#allocation22], %s1154
        // Predicated region
        $region173: #{tpu_custom_call.1} parent=127 // pred_check
          %p1156 = pneg %p443
        $region174: #{tpu_custom_call.1} parent=127 // pred_check_branch
          %1158 = sbr.rel (%p1156) target = $region176
        $region175: #{tpu_custom_call.1} parent=127 // pred_region
          %1159 = dma.done %s1152, 256
        $region176: #{tpu_custom_call.1} parent=127 // pred_fallthru
          _
        %s1160 = sand.u32 %s57, 1
        %s1161 = scalar_lea.sflag [#allocation23], %s1160
        %s1162 = sand.u32 %s456, 1
        %s1163 = scalar_lea.vmem [#allocation24], %s1162
        // Predicated region
        $region177: #{tpu_custom_call.1} parent=127 // pred_check
          %p1164 = pneg %p469
        $region178: #{tpu_custom_call.1} parent=127 // pred_check_branch
          %1166 = sbr.rel (%p1164) target = $region180
        $region179: #{tpu_custom_call.1} parent=127 // pred_region
          %1167 = dma.done %s1161, 16
        $region180: #{tpu_custom_call.1} parent=127 // pred_fallthru
          _
        %s1168 = sand.u32 %s57, 1
        %s1169 = scalar_lea.sflag [#allocation26], %s1168
        %s1170 = sand.u32 %s482, 1
        %s1171 = scalar_lea.vmem [#allocation25], %s1170
        // Predicated region
        $region181: #{tpu_custom_call.1} parent=127 // pred_check
          %p1172 = pneg %p495
        $region182: #{tpu_custom_call.1} parent=127 // pred_check_branch
          %1174 = sbr.rel (%p1172) target = $region184
        $region183: #{tpu_custom_call.1} parent=127 // pred_region
          %1175 = dma.done %s1169, 16
        $region184: #{tpu_custom_call.1} parent=127 // pred_fallthru
          _
        %s1176 = sand.u32 %s57, 1
        %s1177 = scalar_lea.sflag [#allocation26], %s1176
        %s1178 = sand.u32 %s534, 1
        %s1179 = smul.addr %s1178, 16
        %s1180 = scalar_lea.vmem [#allocation27], %s1179
        // Predicated region
        $region185: #{tpu_custom_call.1} parent=127 // pred_check
          %p1181 = pneg %p547
        $region186: #{tpu_custom_call.1} parent=127 // pred_check_branch
          %1183 = sbr.rel (%p1181) target = $region188
        $region187: #{tpu_custom_call.1} parent=127 // pred_region
          %1184 = dma.done %s1177, 256
        $region188: #{tpu_custom_call.1} parent=127 // pred_fallthru
          _
        %p1185 = pneg %p73
        %p1186 = pneg %p70
        %p1187 = pneg %p94
        %p1188 = pneg %p91
        %p1189 = pneg %p115
        %p1190 = pneg %p112
        %p1191 = pneg %p136
        %p1192 = pneg %p133
        %p1193 = pneg %p157
        %p1194 = pneg %p154
        %p1195 = scmp.lt.s32.totalorder %s57, 1
        %s1196 = scalar_select %p1195, %s57, 1
        %s1197 = smul.addr %s1196, 4
        %s1198 = smul.addr %s1197, 4
        %s1199 = scalar_lea.vmem %s5, %s1198
        %p1200 = pneg %p183
        %p1201 = pneg %p180
        %s1202 = sand.u32 %s57, 1
        %s1203 = scalar_lea.sflag [#allocation14], %s1202
        %s1204 = sand.u32 %s196, 1
        %s1205 = scalar_lea.vmem [#allocation13], %s1204
        %p1206 = pneg %p209
        %p1207 = pneg %p206
        %p1208 = scmp.lt.s32.totalorder %s57, 1
        %s1209 = scalar_select %p1208, %s57, 1
        %s1210 = smul.addr %s1209, 4
        %s1211 = smul.addr %s1210, 4
        %s1212 = scalar_lea.vmem %s7, %s1211
        %p1213 = pneg %p235
        %p1214 = pneg %p232
        %s1215 = sand.u32 %s57, 1
        %s1216 = scalar_lea.sflag [#allocation14], %s1215
        %s1217 = sand.u32 %s248, 1
        %s1218 = scalar_lea.vmem [#allocation15], %s1217
        %p1219 = pneg %p261
        %p1220 = pneg %p258
        %s1221 = sand.u32 %s57, 1
        %s1222 = scalar_lea.sflag [#allocation17], %s1221
        %s1223 = sand.u32 %s274, 1
        %s1224 = scalar_lea.vmem [#allocation16], %s1223
        %p1225 = pneg %p287
        %p1226 = pneg %p284
        %s1227 = sand.u32 %s57, 1
        %s1228 = scalar_lea.sflag [#allocation17], %s1227
        %s1229 = sand.u32 %s300, 1
        %s1230 = scalar_lea.vmem [#allocation18], %s1229
        %p1231 = pneg %p313
        %p1232 = pneg %p310
        %p1233 = scmp.lt.s32.totalorder %s57, 1
        %s1234 = scalar_select %p1233, %s57, 1
        %s1235 = smul.addr %s1234, 4
        %s1236 = smul.addr %s1235, 4
        %s1237 = scalar_lea.vmem %s11, %s1236
        %p1238 = pneg %p339
        %p1239 = pneg %p336
        %s1240 = sand.u32 %s57, 1
        %s1241 = scalar_lea.sflag [#allocation20], %s1240
        %s1242 = sand.u32 %s352, 1
        %s1243 = scalar_lea.vmem [#allocation19], %s1242
        %p1244 = pneg %p365
        %p1245 = pneg %p362
        %p1246 = scmp.lt.s32.totalorder %s57, 1
        %s1247 = scalar_select %p1246, %s57, 1
        %s1248 = smul.addr %s1247, 4
        %s1249 = smul.addr %s1248, 4
        %s1250 = scalar_lea.vmem %s13, %s1249
        %p1251 = pneg %p391
        %p1252 = pneg %p388
        %s1253 = sand.u32 %s57, 1
        %s1254 = scalar_lea.sflag [#allocation20], %s1253
        %s1255 = sand.u32 %s404, 1
        %s1256 = scalar_lea.vmem [#allocation21], %s1255
        %p1257 = pneg %p417
        %p1258 = pneg %p414
        %s1259 = sand.u32 %s57, 1
        %s1260 = scalar_lea.sflag [#allocation23], %s1259
        %s1261 = sand.u32 %s430, 1
        %s1262 = smul.addr %s1261, 16
        %s1263 = scalar_lea.vmem [#allocation22], %s1262
        %p1264 = pneg %p443
        %p1265 = pneg %p440
        %s1266 = sand.u32 %s57, 1
        %s1267 = scalar_lea.sflag [#allocation23], %s1266
        %s1268 = sand.u32 %s456, 1
        %s1269 = scalar_lea.vmem [#allocation24], %s1268
        %p1270 = pneg %p469
        %p1271 = pneg %p466
        %s1272 = sand.u32 %s57, 1
        %s1273 = scalar_lea.sflag [#allocation26], %s1272
        %s1274 = sand.u32 %s482, 1
        %s1275 = scalar_lea.vmem [#allocation25], %s1274
        %p1276 = pneg %p495
        %p1277 = pneg %p492
        %p1278 = scmp.lt.s32.totalorder %s57, 1
        %s1279 = scalar_select %p1278, %s57, 1
        %s1280 = scalar_lea.vmem %s18, %s1279
        %p1281 = pneg %p521
        %p1282 = pneg %p518
        %s1283 = sand.u32 %s57, 1
        %s1284 = scalar_lea.sflag [#allocation26], %s1283
        %s1285 = sand.u32 %s534, 1
        %s1286 = smul.addr %s1285, 16
        %s1287 = scalar_lea.vmem [#allocation27], %s1286
        %p1288 = pneg %p547
        %p1289 = pneg %p544
        %p1290 = scmp.lt.s32.totalorder %s57, 1
        %s1291 = scalar_select %p1290, %s57, 1
        %s1292 = scalar_lea.vmem %s20, %s1291
        %p1293 = pneg %p573
        %p1294 = pneg %p570
        %p1295 = scmp.lt.s32.totalorder %s57, 1
        %s1296 = scalar_select %p1295, %s57, 1
        %s1297 = smul.addr %s1296, 8
        %s1298 = smul.addr %s1297, 4
        %s1299 = scalar_lea.vmem %s21, %s1298
        %p1300 = pneg %p599
        %p1301 = pneg %p596
        %p1302 = scmp.lt.s32.totalorder %s57, 1
        %s1303 = scalar_select %p1302, %s57, 1
        %s1304 = scalar_lea.vmem %s22, %s1303
        %p1305 = pneg %p625
        %p1306 = pneg %p622
        %p1307 = scmp.lt.s32.totalorder %s57, 1
        %s1308 = scalar_select %p1307, %s57, 1
        %s1309 = scalar_lea.vmem %s23, %s1308
        %p1310 = pneg %p651
        %p1311 = pneg %p648
        %p1312 = scmp.lt.s32.totalorder %s57, 1
        %s1313 = scalar_select %p1312, %s57, 1
        %s1314 = scalar_lea.vmem %s24, %s1313
        %p1315 = pneg %p677
        %p1316 = pneg %p674
        %p1317 = pneg %p698
        %p1318 = pneg %p695
        %p1319 = pneg %p719
        %p1320 = pneg %p716
        %p1321 = pneg %p740
        %p1322 = pneg %p737
        %p1323 = scmp.lt.s32.totalorder %s57, 1
        %s1324 = scalar_select %p1323, %s57, 1
        %s1325 = smul.addr %s1324, 4
        %s1326 = smul.addr %s1325, 4
        %s1327 = scalar_lea.vmem %s5, %s1326
        %p1328 = scmp.lt.s32.totalorder %s57, 1
        %s1329 = scalar_select %p1328, %s57, 1
        %s1330 = smul.addr %s1329, 4
        %s1331 = smul.addr %s1330, 4
        %s1332 = scalar_lea.vmem %s7, %s1331
        %p1333 = scmp.lt.s32.totalorder %s57, 1
        %s1334 = scalar_select %p1333, %s57, 1
        %s1335 = smul.addr %s1334, 4
        %s1336 = smul.addr %s1335, 4
        %s1337 = scalar_lea.vmem %s11, %s1336
        %p1338 = scmp.lt.s32.totalorder %s57, 1
        %s1339 = scalar_select %p1338, %s57, 1
        %s1340 = smul.addr %s1339, 4
        %s1341 = smul.addr %s1340, 4
        %s1342 = scalar_lea.vmem %s13, %s1341
        %p1343 = scmp.lt.s32.totalorder %s57, 1
        %s1344 = scalar_select %p1343, %s57, 1
        %s1345 = scalar_lea.vmem %s18, %s1344
        %p1346 = scmp.lt.s32.totalorder %s57, 1
        %s1347 = scalar_select %p1346, %s57, 1
        %s1348 = scalar_lea.vmem %s20, %s1347
        %p1349 = scmp.lt.s32.totalorder %s57, 1
        %s1350 = scalar_select %p1349, %s57, 1
        %s1351 = smul.addr %s1350, 8
        %s1352 = smul.addr %s1351, 4
        %s1353 = scalar_lea.vmem %s21, %s1352
        %p1354 = scmp.lt.s32.totalorder %s57, 1
        %s1355 = scalar_select %p1354, %s57, 1
        %s1356 = scalar_lea.vmem %s22, %s1355
        %p1357 = scmp.lt.s32.totalorder %s57, 1
        %s1358 = scalar_select %p1357, %s57, 1
        %s1359 = scalar_lea.vmem %s23, %s1358
        %p1360 = scmp.lt.s32.totalorder %s57, 1
        %s1361 = scalar_select %p1360, %s57, 1
        %s1362 = scalar_lea.vmem %s24, %s1361
        %p1364 = scmp.eq.s32.totalorder %s57, 0
        // Predicated region
        $region189: #{tpu_custom_call.1} parent=127 // pred_check
          %p1365 = pneg %p1364
        $region190: #{tpu_custom_call.1} parent=127 // pred_check_branch
          %1367 = sbr.rel (%p1365) target = $region192
        $region191: #{tpu_custom_call.1} parent=127 // pred_region
          %v1368 = vld [vmem:[#allocation4] sm:$0xff]
          %v1369 = vld [vmem:[#allocation4 + $0x8] sm:$0xff]
          %v1370 = vld [vmem:[#allocation7] sm:$0xff]
          %v1371 = vadd.f32 %v1368, %v1370
          %v1372 = vadd.f32 %v1369, %v1370
          %vm1373 = vcmask 261120
          %1374 = vst.msk [vmem:[#allocation2] sm:$0xff] %vm1373, %v1371
          %1375 = vst.msk [vmem:[#allocation2 + $0x8] sm:$0xff] %vm1373, %v1372
        $region192: #{tpu_custom_call.1} parent=127 // pred_fallthru
          _
        %v1376 = vld [vmem:[#allocation2] sm:$0xff]
        %v1377 = vld [vmem:[#allocation2 + $0x8] sm:$0xff]
        %v1378 = vld [vmem:[#allocation9] sm:$0xff]
        %v1379 = vld [vmem:[#allocation9 + $0x8] sm:$0xff]
        %v1380 = vld [vmem:[#allocation10] sm:$0xff]
        %v1381 = vld [vmem:[#allocation10 + $0x8] sm:$0xff]
        %v1382 = vld [vmem:[#allocation12] sm:$0xff]
        %v1383 = vld [vmem:[#allocation12 + $0x8] sm:$0xff]
        %v1384 = vpack.c.bf16 %v1377, %v1376
        %v1385 = vld [vmem:[%s1327] sm:$0xf]
        %v1386 = vld [vmem:[%s1327 + $0x4] sm:$0xf]
        %v1387 = vld [vmem:[%s1327 + $0x8] sm:$0xf]
        %v1388 = vld [vmem:[%s1327 + $0xc] sm:$0xf]
        %v1389 = vld [vmem:[%s1106] sm:$0x1]
        %v1391 = vlaneseq
        %v1392 = vshrl.u32 %v1391, 7
        %v1393 = vsub.s32 0, %v1392
        %v1394 = vrot.slane %v1389, %v1393
        %v1400 = vunpack.c.l.b16 %v1385
        %v1401 = vunpack.c.l.b16 %v1386
        %v1402 = vunpack.c.l.b16 %v1387
        %v1403 = vunpack.c.l.b16 %v1388
        %v1404 = vpack.c.b16 %v1401, %v1400
        %v1405 = vpack.c.b16 %v1403, %v1402
        %vm1408 = vcmask 261120
        %v1410 = vsel %vm1408, %v1384, 0
        %1412 = vmatprep.subr.bf16.mxu0 0
        %1413 = vmatpush1.bf16.msra.mxu0 %v1404
        %1414 = vmatprep.subr.bf16.mxu0 0
        %1415 = vmatpush1.bf16.msra.mxu0 %v1405
        %1416 = vmatprep.subr.bf16.mxu0 0
        %1417 = vmatpush1.bf16.msra.mxu0 0
        %1418 = vmatprep.subr.bf16.mxu0 0
        %1419 = vmatpush1.bf16.msra.mxu0 0
        %1420 = vmatprep.subr.bf16.mxu0 0
        %1421 = vmatpush1.bf16.msra.mxu0 0
        %1422 = vmatprep.subr.bf16.mxu0 0
        %1423 = vmatpush1.bf16.msra.mxu0 0
        %1424 = vmatprep.subr.bf16.mxu0 0
        %1425 = vmatpush1.bf16.msra.mxu0 0
        %1426 = vmatprep.subr.bf16.mxu0 0
        %1427 = vmatpush1.bf16.msra.mxu0 0
        %1428 = vmatprep.subr.bf16.mxu0 0
        %1429 = vmatpush1.bf16.msra.mxu0 0
        %1430 = vmatprep.subr.bf16.mxu0 0
        %1431 = vmatpush1.bf16.msra.mxu0 0
        %1432 = vmatprep.subr.bf16.mxu0 0
        %1433 = vmatpush1.bf16.msra.mxu0 0
        %1434 = vmatprep.subr.bf16.mxu0 0
        %1435 = vmatpush1.bf16.msra.mxu0 0
        %1436 = vmatprep.subr.bf16.mxu0 0
        %1437 = vmatpush1.bf16.msra.mxu0 0
        %1438 = vmatprep.subr.bf16.mxu0 0
        %1439 = vmatpush1.bf16.msra.mxu0 0
        %1440 = vmatprep.subr.bf16.mxu0 0
        %1441 = vmatpush1.bf16.msra.mxu0 0
        %1442 = vmatprep.subr.bf16.mxu0 0
        %1443 = vmatpush1.bf16.msra.mxu0 0
        %1444 = vmatprep.mubr.bf16.mxu0 0
        %1445 = vmatmul.mubr.bf16.gmra.mrb[0].mxu0 %v1410
        %v1446 = vpop.f32.mrb[0].mxu0
        %v1447 = vadd.f32 %v1394, %v1446
        %v1448 = vpop.f32.mrb[0].mxu0
        %v1449 = vpop.f32.mrb[0].mxu0
        %v1450 = vadd.f32 %v1394, %v1449
        %v1451 = vpop.f32.mrb[0].mxu0
        %1452 = vdwg.mxu0
        %v1453 = vmul.f32 %v1447, 0.35355338
        %v1454 = vmul.f32 %v1450, 0.35355338
        %v1455 = vld [vmem:[%s1332] sm:$0xf]
        %v1456 = vld [vmem:[%s1332 + $0x4] sm:$0xf]
        %v1457 = vld [vmem:[%s1332 + $0x8] sm:$0xf]
        %v1458 = vld [vmem:[%s1332 + $0xc] sm:$0xf]
        %v1459 = vld [vmem:[%s1114] sm:$0x1]
        %v1460 = vld [vmem:[%s1122] sm:$0x1]
        %v1461 = vld [vmem:[%s1130] sm:$0x1]
        %v1462 = vpack.c.bf16 %v1447, %v1447
        %v1463 = vpack.c.bf16 %v1450, %v1450
        %1465 = vrot.lane.b32.xlu0 %v1447, 96
        %v1466 = vpop.permute.xlu0 %1465
        %vm1467 = vcmask 64512
        %v1469 = vsel %vm1467, %v1453, 0
        %v1471 = vsel %vm1467, %v1466, 0
        %1473 = vmatprep.subr.mxu0 0.0
        %1474 = vmatpush1.xpose.msra.mxu0 %v1471
        %1475 = vmatprep.subr.mxu0 0.0
        %1476 = vmatpush1.xpose.msra.mxu0 0.0
        %1477 = vmatprep.subr.mxu0 0.0
        %1478 = vmatpush1.xpose.msra.mxu0 0.0
        %1479 = vmatprep.subr.mxu0 0.0
        %1480 = vmatpush1.xpose.msra.mxu0 0.0
        %1481 = vmatprep.subr.mxu0 0.0
        %1482 = vmatpush1.xpose.msra.mxu0 0.0
        %1483 = vmatprep.subr.mxu0 0.0
        %1484 = vmatpush1.xpose.msra.mxu0 0.0
        %1485 = vmatprep.subr.mxu0 0.0
        %1486 = vmatpush1.xpose.msra.mxu0 0.0
        %1487 = vmatprep.subr.mxu0 0.0
        %1488 = vmatpush1.xpose.msra.mxu0 0.0
        %1489 = vmatprep.subr.mxu0 0.0
        %1490 = vmatpush1.xpose.msra.mxu0 0.0
        %1491 = vmatprep.subr.mxu0 0.0
        %1492 = vmatpush1.xpose.msra.mxu0 0.0
        %1493 = vmatprep.subr.mxu0 0.0
        %1494 = vmatpush1.xpose.msra.mxu0 0.0
        %1495 = vmatprep.subr.mxu0 0.0
        %1496 = vmatpush1.xpose.msra.mxu0 0.0
        %1497 = vmatprep.subr.mxu0 0.0
        %1498 = vmatpush1.xpose.msra.mxu0 0.0
        %1499 = vmatprep.subr.mxu0 0.0
        %1500 = vmatpush1.xpose.msra.mxu0 0.0
        %1501 = vmatprep.subr.mxu0 0.0
        %1502 = vmatpush1.xpose.msra.mxu0 0.0
        %1503 = vmatprep.subr.mxu0 0.0
        %1504 = vmatpush1.xpose.msra.mxu0 0.0
        %1505 = vmatprep.subr.mxu0 0.0
        %1506 = vmatpush1.xpose.msra.mxu0 0.0
        %1507 = vmatprep.subr.mxu0 0.0
        %1508 = vmatpush1.xpose.msra.mxu0 0.0
        %1509 = vmatprep.subr.mxu0 0.0
        %1510 = vmatpush1.xpose.msra.mxu0 0.0
        %1511 = vmatprep.subr.mxu0 0.0
        %1512 = vmatpush1.xpose.msra.mxu0 0.0
        %1513 = vmatprep.subr.mxu0 0.0
        %1514 = vmatpush1.xpose.msra.mxu0 0.0
        %1515 = vmatprep.subr.mxu0 0.0
        %1516 = vmatpush1.xpose.msra.mxu0 0.0
        %1517 = vmatprep.subr.mxu0 0.0
        %1518 = vmatpush1.xpose.msra.mxu0 0.0
        %1519 = vmatprep.subr.mxu0 0.0
        %1520 = vmatpush1.xpose.msra.mxu0 0.0
        %1521 = vmatprep.subr.mxu0 0.0
        %1522 = vmatpush1.xpose.msra.mxu0 0.0
        %1523 = vmatprep.subr.mxu0 0.0
        %1524 = vmatpush1.xpose.msra.mxu0 0.0
        %1525 = vmatprep.subr.mxu0 0.0
        %1526 = vmatpush1.xpose.msra.mxu0 0.0
        %1527 = vmatprep.subr.mxu0 0.0
        %1528 = vmatpush1.xpose.msra.mxu0 0.0
        %1529 = vmatprep.subr.mxu0 0.0
        %1530 = vmatpush1.xpose.msra.mxu0 0.0
        %1531 = vmatprep.subr.mxu0 0.0
        %1532 = vmatpush1.xpose.msra.mxu0 0.0
        %1533 = vmatprep.subr.mxu0 0.0
        %1534 = vmatpush1.xpose.msra.mxu0 0.0
        %1535 = vmatprep.subr.mxu0 0.0
        %1536 = vmatpush1.xpose.msra.mxu0 0.0
        %1537 = vmatprep.mubr.f32.mxu0 0.0
        %1538 = vmatmul.mubr.f32.gmra.mrb[0].mxu0 %v1469
        %v1539 = vpop.f32.mrb[0].mxu0
        %v1540 = vadd.f32 %v1380, %v1539
        %v1541 = vpop.f32.mrb[0].mxu0
        %1542 = vdwg.mxu0
        %1544 = vrot.lane.b32.xlu0 %v1450, 96
        %v1545 = vpop.permute.xlu0 %1544
        %v1547 = vsel %vm1467, %v1454, 0
        %v1549 = vsel %vm1467, %v1545, 0
        %1551 = vmatprep.subr.mxu0 0.0
        %1552 = vmatpush1.xpose.msra.mxu0 %v1549
        %1553 = vmatprep.subr.mxu0 0.0
        %1554 = vmatpush1.xpose.msra.mxu0 0.0
        %1555 = vmatprep.subr.mxu0 0.0
        %1556 = vmatpush1.xpose.msra.mxu0 0.0
        %1557 = vmatprep.subr.mxu0 0.0
        %1558 = vmatpush1.xpose.msra.mxu0 0.0
        %1559 = vmatprep.subr.mxu0 0.0
        %1560 = vmatpush1.xpose.msra.mxu0 0.0
        %1561 = vmatprep.subr.mxu0 0.0
        %1562 = vmatpush1.xpose.msra.mxu0 0.0
        %1563 = vmatprep.subr.mxu0 0.0
        %1564 = vmatpush1.xpose.msra.mxu0 0.0
        %1565 = vmatprep.subr.mxu0 0.0
        %1566 = vmatpush1.xpose.msra.mxu0 0.0
        %1567 = vmatprep.subr.mxu0 0.0
        %1568 = vmatpush1.xpose.msra.mxu0 0.0
        %1569 = vmatprep.subr.mxu0 0.0
        %1570 = vmatpush1.xpose.msra.mxu0 0.0
        %1571 = vmatprep.subr.mxu0 0.0
        %1572 = vmatpush1.xpose.msra.mxu0 0.0
        %1573 = vmatprep.subr.mxu0 0.0
        %1574 = vmatpush1.xpose.msra.mxu0 0.0
        %1575 = vmatprep.subr.mxu0 0.0
        %1576 = vmatpush1.xpose.msra.mxu0 0.0
        %1577 = vmatprep.subr.mxu0 0.0
        %1578 = vmatpush1.xpose.msra.mxu0 0.0
        %1579 = vmatprep.subr.mxu0 0.0
        %1580 = vmatpush1.xpose.msra.mxu0 0.0
        %1581 = vmatprep.subr.mxu0 0.0
        %1582 = vmatpush1.xpose.msra.mxu0 0.0
        %1583 = vmatprep.subr.mxu0 0.0
        %1584 = vmatpush1.xpose.msra.mxu0 0.0
        %1585 = vmatprep.subr.mxu0 0.0
        %1586 = vmatpush1.xpose.msra.mxu0 0.0
        %1587 = vmatprep.subr.mxu0 0.0
        %1588 = vmatpush1.xpose.msra.mxu0 0.0
        %1589 = vmatprep.subr.mxu0 0.0
        %1590 = vmatpush1.xpose.msra.mxu0 0.0
        %1591 = vmatprep.subr.mxu0 0.0
        %1592 = vmatpush1.xpose.msra.mxu0 0.0
        %1593 = vmatprep.subr.mxu0 0.0
        %1594 = vmatpush1.xpose.msra.mxu0 0.0
        %1595 = vmatprep.subr.mxu0 0.0
        %1596 = vmatpush1.xpose.msra.mxu0 0.0
        %1597 = vmatprep.subr.mxu0 0.0
        %1598 = vmatpush1.xpose.msra.mxu0 0.0
        %1599 = vmatprep.subr.mxu0 0.0
        %1600 = vmatpush1.xpose.msra.mxu0 0.0
        %1601 = vmatprep.subr.mxu0 0.0
        %1602 = vmatpush1.xpose.msra.mxu0 0.0
        %1603 = vmatprep.subr.mxu0 0.0
        %1604 = vmatpush1.xpose.msra.mxu0 0.0
        %1605 = vmatprep.subr.mxu0 0.0
        %1606 = vmatpush1.xpose.msra.mxu0 0.0
        %1607 = vmatprep.subr.mxu0 0.0
        %1608 = vmatpush1.xpose.msra.mxu0 0.0
        %1609 = vmatprep.subr.mxu0 0.0
        %1610 = vmatpush1.xpose.msra.mxu0 0.0
        %1611 = vmatprep.subr.mxu0 0.0
        %1612 = vmatpush1.xpose.msra.mxu0 0.0
        %1613 = vmatprep.subr.mxu0 0.0
        %1614 = vmatpush1.xpose.msra.mxu0 0.0
        %1615 = vmatprep.mubr.f32.mxu0 0.0
        %1616 = vmatmul.mubr.f32.gmra.mrb[0].mxu0 %v1547
        %v1617 = vpop.f32.mrb[0].mxu0
        %v1618 = vadd.f32 %v1381, %v1617
        %v1619 = vpop.f32.mrb[0].mxu0
        %1620 = vdwg.mxu0
        %v1621 = vsel %vm1467, %v1540, -inf
        %1622 = vmax.xlane.f32.xlu0 %v1621
        %v1623 = vpop.xlane.xlu0 %1622
        %v1624 = vsel %vm1467, %v1618, -inf
        %1625 = vmax.xlane.f32.xlu0 %v1624
        %v1626 = vpop.xlane.xlu0 %1625
        %v1627 = vsub.f32 %v1540, %v1623
        %v1628 = vsub.f32 %v1618, %v1626
        %v1629 = vmul.f32 %v1627, 1.442695
        %v1630 = vpow.pop %v1629
        %v1631 = vmul.f32 %v1628, 1.442695
        %v1632 = vpow.pop %v1631
        %v1633 = vsel %vm1467, %v1630, 0.0
        %1634 = vadd.xlane.f32.xlu0 %v1633
        %v1635 = vpop.xlane.xlu0 %1634
        %v1636 = vsel %vm1467, %v1632, 0.0
        %1637 = vadd.xlane.f32.xlu0 %v1636
        %v1638 = vpop.xlane.xlu0 %1637
        %v1639 = vrcp.pop %v1635
        %v1640 = vrcp.pop %v1638
        %v1641 = vmul.f32 %v1630, %v1639
        %v1642 = vmul.f32 %v1632, %v1640
        %v1643 = vpack.c.bf16 %v1641, %v1641
        %v1644 = vpack.c.bf16 %v1642, %v1642
        %1646 = vrot.lane.b32.xlu0 %v1462, 64
        %v1647 = vpop.permute.xlu0 %1646
        %v1649 = vsel %vm1467, %v1643, 0
        %vm1651 = vcmask 1043456
        %v1653 = vsel %vm1651, %v1647, 0
        %1655 = vmatprep.subr.bf16.mxu0 0
        %1656 = vmatpush1.bf16.msra.mxu0 %v1653
        %1657 = vmatprep.subr.bf16.mxu0 0
        %1658 = vmatpush1.bf16.msra.mxu0 0
        %1659 = vmatprep.subr.bf16.mxu0 0
        %1660 = vmatpush1.bf16.msra.mxu0 0
        %1661 = vmatprep.subr.bf16.mxu0 0
        %1662 = vmatpush1.bf16.msra.mxu0 0
        %1663 = vmatprep.subr.bf16.mxu0 0
        %1664 = vmatpush1.bf16.msra.mxu0 0
        %1665 = vmatprep.subr.bf16.mxu0 0
        %1666 = vmatpush1.bf16.msra.mxu0 0
        %1667 = vmatprep.subr.bf16.mxu0 0
        %1668 = vmatpush1.bf16.msra.mxu0 0
        %1669 = vmatprep.subr.bf16.mxu0 0
        %1670 = vmatpush1.bf16.msra.mxu0 0
        %1671 = vmatprep.subr.bf16.mxu0 0
        %1672 = vmatpush1.bf16.msra.mxu0 0
        %1673 = vmatprep.subr.bf16.mxu0 0
        %1674 = vmatpush1.bf16.msra.mxu0 0
        %1675 = vmatprep.subr.bf16.mxu0 0
        %1676 = vmatpush1.bf16.msra.mxu0 0
        %1677 = vmatprep.subr.bf16.mxu0 0
        %1678 = vmatpush1.bf16.msra.mxu0 0
        %1679 = vmatprep.subr.bf16.mxu0 0
        %1680 = vmatpush1.bf16.msra.mxu0 0
        %1681 = vmatprep.subr.bf16.mxu0 0
        %1682 = vmatpush1.bf16.msra.mxu0 0
        %1683 = vmatprep.subr.bf16.mxu0 0
        %1684 = vmatpush1.bf16.msra.mxu0 0
        %1685 = vmatprep.subr.bf16.mxu0 0
        %1686 = vmatpush1.bf16.msra.mxu0 0
        %1687 = vmatprep.mubr.bf16.mxu0 0
        %1688 = vmatmul.mubr.bf16.gmra.mrb[0].mxu0 %v1649
        %v1689 = vpop.f32.mrb[0].mxu0
        %v1690 = vadd.f32 0.0, %v1689
        %v1691 = vpop.f32.mrb[0].mxu0
        %v1692 = vpop.f32.mrb[0].mxu0
        %v1693 = vpop.f32.mrb[0].mxu0
        %1694 = vdwg.mxu0
        %1696 = vrot.lane.b32.xlu0 %v1463, 64
        %v1697 = vpop.permute.xlu0 %1696
        %v1699 = vsel %vm1467, %v1644, 0
        %v1702 = vsel %vm1651, %v1697, 0
        %1704 = vmatprep.subr.bf16.mxu0 0
        %1705 = vmatpush1.bf16.msra.mxu0 %v1702
        %1706 = vmatprep.subr.bf16.mxu0 0
        %1707 = vmatpush1.bf16.msra.mxu0 0
        %1708 = vmatprep.subr.bf16.mxu0 0
        %1709 = vmatpush1.bf16.msra.mxu0 0
        %1710 = vmatprep.subr.bf16.mxu0 0
        %1711 = vmatpush1.bf16.msra.mxu0 0
        %1712 = vmatprep.subr.bf16.mxu0 0
        %1713 = vmatpush1.bf16.msra.mxu0 0
        %1714 = vmatprep.subr.bf16.mxu0 0
        %1715 = vmatpush1.bf16.msra.mxu0 0
        %1716 = vmatprep.subr.bf16.mxu0 0
        %1717 = vmatpush1.bf16.msra.mxu0 0
        %1718 = vmatprep.subr.bf16.mxu0 0
        %1719 = vmatpush1.bf16.msra.mxu0 0
        %1720 = vmatprep.subr.bf16.mxu0 0
        %1721 = vmatpush1.bf16.msra.mxu0 0
        %1722 = vmatprep.subr.bf16.mxu0 0
        %1723 = vmatpush1.bf16.msra.mxu0 0
        %1724 = vmatprep.subr.bf16.mxu0 0
        %1725 = vmatpush1.bf16.msra.mxu0 0
        %1726 = vmatprep.subr.bf16.mxu0 0
        %1727 = vmatpush1.bf16.msra.mxu0 0
        %1728 = vmatprep.subr.bf16.mxu0 0
        %1729 = vmatpush1.bf16.msra.mxu0 0
        %1730 = vmatprep.subr.bf16.mxu0 0
        %1731 = vmatpush1.bf16.msra.mxu0 0
        %1732 = vmatprep.subr.bf16.mxu0 0
        %1733 = vmatpush1.bf16.msra.mxu0 0
        %1734 = vmatprep.subr.bf16.mxu0 0
        %1735 = vmatpush1.bf16.msra.mxu0 0
        %1736 = vmatprep.mubr.bf16.mxu0 0
        %1737 = vmatmul.mubr.bf16.gmra.mrb[0].mxu0 %v1699
        %v1738 = vpop.f32.mrb[0].mxu0
        %v1739 = vadd.f32 0.0, %v1738
        %v1740 = vpop.f32.mrb[0].mxu0
        %v1741 = vpop.f32.mrb[0].mxu0
        %v1742 = vpop.f32.mrb[0].mxu0
        %1743 = vdwg.mxu0
        %1744 = vst.msk [vmem:[#allocation3] sm:$0xff] %vm1467, %v1690
        %1745 = vst.msk [vmem:[#allocation3 + $0x8] sm:$0xff] %vm1467, %v1739
        %1746 = vrot.lane.b32.xlu0 %v1453, 120
        %v1747 = vpop.permute.xlu0 %1746
        %1748 = vrot.lane.b32.xlu0 %v1447, 88
        %v1749 = vpop.permute.xlu0 %1748
        %v1750 = vsel %vm1467, %v1747, 0
        %v1752 = vsel %vm1467, %v1749, 0
        %1754 = vmatprep.subr.mxu0 0.0
        %1755 = vmatpush1.xpose.msra.mxu0 %v1752
        %1756 = vmatprep.subr.mxu0 0.0
        %1757 = vmatpush1.xpose.msra.mxu0 0.0
        %1758 = vmatprep.subr.mxu0 0.0
        %1759 = vmatpush1.xpose.msra.mxu0 0.0
        %1760 = vmatprep.subr.mxu0 0.0
        %1761 = vmatpush1.xpose.msra.mxu0 0.0
        %1762 = vmatprep.subr.mxu0 0.0
        %1763 = vmatpush1.xpose.msra.mxu0 0.0
        %1764 = vmatprep.subr.mxu0 0.0
        %1765 = vmatpush1.xpose.msra.mxu0 0.0
        %1766 = vmatprep.subr.mxu0 0.0
        %1767 = vmatpush1.xpose.msra.mxu0 0.0
        %1768 = vmatprep.subr.mxu0 0.0
        %1769 = vmatpush1.xpose.msra.mxu0 0.0
        %1770 = vmatprep.subr.mxu0 0.0
        %1771 = vmatpush1.xpose.msra.mxu0 0.0
        %1772 = vmatprep.subr.mxu0 0.0
        %1773 = vmatpush1.xpose.msra.mxu0 0.0
        %1774 = vmatprep.subr.mxu0 0.0
        %1775 = vmatpush1.xpose.msra.mxu0 0.0
        %1776 = vmatprep.subr.mxu0 0.0
        %1777 = vmatpush1.xpose.msra.mxu0 0.0
        %1778 = vmatprep.subr.mxu0 0.0
        %1779 = vmatpush1.xpose.msra.mxu0 0.0
        %1780 = vmatprep.subr.mxu0 0.0
        %1781 = vmatpush1.xpose.msra.mxu0 0.0
        %1782 = vmatprep.subr.mxu0 0.0
        %1783 = vmatpush1.xpose.msra.mxu0 0.0
        %1784 = vmatprep.subr.mxu0 0.0
        %1785 = vmatpush1.xpose.msra.mxu0 0.0
        %1786 = vmatprep.subr.mxu0 0.0
        %1787 = vmatpush1.xpose.msra.mxu0 0.0
        %1788 = vmatprep.subr.mxu0 0.0
        %1789 = vmatpush1.xpose.msra.mxu0 0.0
        %1790 = vmatprep.subr.mxu0 0.0
        %1791 = vmatpush1.xpose.msra.mxu0 0.0
        %1792 = vmatprep.subr.mxu0 0.0
        %1793 = vmatpush1.xpose.msra.mxu0 0.0
        %1794 = vmatprep.subr.mxu0 0.0
        %1795 = vmatpush1.xpose.msra.mxu0 0.0
        %1796 = vmatprep.subr.mxu0 0.0
        %1797 = vmatpush1.xpose.msra.mxu0 0.0
        %1798 = vmatprep.subr.mxu0 0.0
        %1799 = vmatpush1.xpose.msra.mxu0 0.0
        %1800 = vmatprep.subr.mxu0 0.0
        %1801 = vmatpush1.xpose.msra.mxu0 0.0
        %1802 = vmatprep.subr.mxu0 0.0
        %1803 = vmatpush1.xpose.msra.mxu0 0.0
        %1804 = vmatprep.subr.mxu0 0.0
        %1805 = vmatpush1.xpose.msra.mxu0 0.0
        %1806 = vmatprep.subr.mxu0 0.0
        %1807 = vmatpush1.xpose.msra.mxu0 0.0
        %1808 = vmatprep.subr.mxu0 0.0
        %1809 = vmatpush1.xpose.msra.mxu0 0.0
        %1810 = vmatprep.subr.mxu0 0.0
        %1811 = vmatpush1.xpose.msra.mxu0 0.0
        %1812 = vmatprep.subr.mxu0 0.0
        %1813 = vmatpush1.xpose.msra.mxu0 0.0
        %1814 = vmatprep.subr.mxu0 0.0
        %1815 = vmatpush1.xpose.msra.mxu0 0.0
        %1816 = vmatprep.subr.mxu0 0.0
        %1817 = vmatpush1.xpose.msra.mxu0 0.0
        %1818 = vmatprep.mubr.f32.mxu0 0.0
        %1819 = vmatmul.mubr.f32.gmra.mrb[0].mxu0 %v1750
        %v1820 = vpop.f32.mrb[0].mxu0
        %v1821 = vadd.f32 %v1380, %v1820
        %v1822 = vpop.f32.mrb[0].mxu0
        %1823 = vdwg.mxu0
        %1824 = vrot.lane.b32.xlu0 %v1454, 120
        %v1825 = vpop.permute.xlu0 %1824
        %1826 = vrot.lane.b32.xlu0 %v1450, 88
        %v1827 = vpop.permute.xlu0 %1826
        %v1828 = vsel %vm1467, %v1825, 0
        %v1830 = vsel %vm1467, %v1827, 0
        %1832 = vmatprep.subr.mxu0 0.0
        %1833 = vmatpush1.xpose.msra.mxu0 %v1830
        %1834 = vmatprep.subr.mxu0 0.0
        %1835 = vmatpush1.xpose.msra.mxu0 0.0
        %1836 = vmatprep.subr.mxu0 0.0
        %1837 = vmatpush1.xpose.msra.mxu0 0.0
        %1838 = vmatprep.subr.mxu0 0.0
        %1839 = vmatpush1.xpose.msra.mxu0 0.0
        %1840 = vmatprep.subr.mxu0 0.0
        %1841 = vmatpush1.xpose.msra.mxu0 0.0
        %1842 = vmatprep.subr.mxu0 0.0
        %1843 = vmatpush1.xpose.msra.mxu0 0.0
        %1844 = vmatprep.subr.mxu0 0.0
        %1845 = vmatpush1.xpose.msra.mxu0 0.0
        %1846 = vmatprep.subr.mxu0 0.0
        %1847 = vmatpush1.xpose.msra.mxu0 0.0
        %1848 = vmatprep.subr.mxu0 0.0
        %1849 = vmatpush1.xpose.msra.mxu0 0.0
        %1850 = vmatprep.subr.mxu0 0.0
        %1851 = vmatpush1.xpose.msra.mxu0 0.0
        %1852 = vmatprep.subr.mxu0 0.0
        %1853 = vmatpush1.xpose.msra.mxu0 0.0
        %1854 = vmatprep.subr.mxu0 0.0
        %1855 = vmatpush1.xpose.msra.mxu0 0.0
        %1856 = vmatprep.subr.mxu0 0.0
        %1857 = vmatpush1.xpose.msra.mxu0 0.0
        %1858 = vmatprep.subr.mxu0 0.0
        %1859 = vmatpush1.xpose.msra.mxu0 0.0
        %1860 = vmatprep.subr.mxu0 0.0
        %1861 = vmatpush1.xpose.msra.mxu0 0.0
        %1862 = vmatprep.subr.mxu0 0.0
        %1863 = vmatpush1.xpose.msra.mxu0 0.0
        %1864 = vmatprep.subr.mxu0 0.0
        %1865 = vmatpush1.xpose.msra.mxu0 0.0
        %1866 = vmatprep.subr.mxu0 0.0
        %1867 = vmatpush1.xpose.msra.mxu0 0.0
        %1868 = vmatprep.subr.mxu0 0.0
        %1869 = vmatpush1.xpose.msra.mxu0 0.0
        %1870 = vmatprep.subr.mxu0 0.0
        %1871 = vmatpush1.xpose.msra.mxu0 0.0
        %1872 = vmatprep.subr.mxu0 0.0
        %1873 = vmatpush1.xpose.msra.mxu0 0.0
        %1874 = vmatprep.subr.mxu0 0.0
        %1875 = vmatpush1.xpose.msra.mxu0 0.0
        %1876 = vmatprep.subr.mxu0 0.0
        %1877 = vmatpush1.xpose.msra.mxu0 0.0
        %1878 = vmatprep.subr.mxu0 0.0
        %1879 = vmatpush1.xpose.msra.mxu0 0.0
        %1880 = vmatprep.subr.mxu0 0.0
        %1881 = vmatpush1.xpose.msra.mxu0 0.0
        %1882 = vmatprep.subr.mxu0 0.0
        %1883 = vmatpush1.xpose.msra.mxu0 0.0
        %1884 = vmatprep.subr.mxu0 0.0
        %1885 = vmatpush1.xpose.msra.mxu0 0.0
        %1886 = vmatprep.subr.mxu0 0.0
        %1887 = vmatpush1.xpose.msra.mxu0 0.0
        %1888 = vmatprep.subr.mxu0 0.0
        %1889 = vmatpush1.xpose.msra.mxu0 0.0
        %1890 = vmatprep.subr.mxu0 0.0
        %1891 = vmatpush1.xpose.msra.mxu0 0.0
        %1892 = vmatprep.subr.mxu0 0.0
        %1893 = vmatpush1.xpose.msra.mxu0 0.0
        %1894 = vmatprep.subr.mxu0 0.0
        %1895 = vmatpush1.xpose.msra.mxu0 0.0
        %1896 = vmatprep.mubr.f32.mxu0 0.0
        %1897 = vmatmul.mubr.f32.gmra.mrb[0].mxu0 %v1828
        %v1898 = vpop.f32.mrb[0].mxu0
        %v1899 = vadd.f32 %v1381, %v1898
        %v1900 = vpop.f32.mrb[0].mxu0
        %1901 = vdwg.mxu0
        %v1902 = vsel %vm1467, %v1821, -inf
        %1903 = vmax.xlane.f32.xlu0 %v1902
        %v1904 = vpop.xlane.xlu0 %1903
        %v1905 = vsel %vm1467, %v1899, -inf
        %1906 = vmax.xlane.f32.xlu0 %v1905
        %v1907 = vpop.xlane.xlu0 %1906
        %v1908 = vsub.f32 %v1821, %v1904
        %v1909 = vsub.f32 %v1899, %v1907
        %v1910 = vmul.f32 %v1908, 1.442695
        %v1911 = vpow.pop %v1910
        %v1912 = vmul.f32 %v1909, 1.442695
        %v1913 = vpow.pop %v1912
        %v1914 = vsel %vm1467, %v1911, 0.0
        %1915 = vadd.xlane.f32.xlu0 %v1914
        %v1916 = vpop.xlane.xlu0 %1915
        %v1917 = vsel %vm1467, %v1913, 0.0
        %1918 = vadd.xlane.f32.xlu0 %v1917
        %v1919 = vpop.xlane.xlu0 %1918
        %v1920 = vrcp.pop %v1916
        %v1921 = vrcp.pop %v1919
        %v1922 = vmul.f32 %v1911, %v1920
        %v1923 = vmul.f32 %v1913, %v1921
        %v1924 = vpack.c.bf16 %v1922, %v1922
        %v1925 = vpack.c.bf16 %v1923, %v1923
        %1926 = vrot.lane.b32.xlu0 %v1462, 56
        %v1927 = vpop.permute.xlu0 %1926
        %v1929 = vsel %vm1467, %v1924, 0
        %v1932 = vsel %vm1651, %v1927, 0
        %1934 = vmatprep.subr.bf16.mxu0 0
        %1935 = vmatpush1.bf16.msra.mxu0 %v1932
        %1936 = vmatprep.subr.bf16.mxu0 0
        %1937 = vmatpush1.bf16.msra.mxu0 0
        %1938 = vmatprep.subr.bf16.mxu0 0
        %1939 = vmatpush1.bf16.msra.mxu0 0
        %1940 = vmatprep.subr.bf16.mxu0 0
        %1941 = vmatpush1.bf16.msra.mxu0 0
        %1942 = vmatprep.subr.bf16.mxu0 0
        %1943 = vmatpush1.bf16.msra.mxu0 0
        %1944 = vmatprep.subr.bf16.mxu0 0
        %1945 = vmatpush1.bf16.msra.mxu0 0
        %1946 = vmatprep.subr.bf16.mxu0 0
        %1947 = vmatpush1.bf16.msra.mxu0 0
        %1948 = vmatprep.subr.bf16.mxu0 0
        %1949 = vmatpush1.bf16.msra.mxu0 0
        %1950 = vmatprep.subr.bf16.mxu0 0
        %1951 = vmatpush1.bf16.msra.mxu0 0
        %1952 = vmatprep.subr.bf16.mxu0 0
        %1953 = vmatpush1.bf16.msra.mxu0 0
        %1954 = vmatprep.subr.bf16.mxu0 0
        %1955 = vmatpush1.bf16.msra.mxu0 0
        %1956 = vmatprep.subr.bf16.mxu0 0
        %1957 = vmatpush1.bf16.msra.mxu0 0
        %1958 = vmatprep.subr.bf16.mxu0 0
        %1959 = vmatpush1.bf16.msra.mxu0 0
        %1960 = vmatprep.subr.bf16.mxu0 0
        %1961 = vmatpush1.bf16.msra.mxu0 0
        %1962 = vmatprep.subr.bf16.mxu0 0
        %1963 = vmatpush1.bf16.msra.mxu0 0
        %1964 = vmatprep.subr.bf16.mxu0 0
        %1965 = vmatpush1.bf16.msra.mxu0 0
        %1966 = vmatprep.mubr.bf16.mxu0 0
        %1967 = vmatmul.mubr.bf16.gmra.mrb[0].mxu0 %v1929
        %v1968 = vpop.f32.mrb[0].mxu0
        %v1969 = vadd.f32 0.0, %v1968
        %v1970 = vpop.f32.mrb[0].mxu0
        %v1971 = vpop.f32.mrb[0].mxu0
        %v1972 = vpop.f32.mrb[0].mxu0
        %1973 = vdwg.mxu0
        %1974 = vrot.lane.b32.xlu0 %v1463, 56
        %v1975 = vpop.permute.xlu0 %1974
        %v1977 = vsel %vm1467, %v1925, 0
        %v1980 = vsel %vm1651, %v1975, 0
        %1982 = vmatprep.subr.bf16.mxu0 0
        %1983 = vmatpush1.bf16.msra.mxu0 %v1980
        %1984 = vmatprep.subr.bf16.mxu0 0
        %1985 = vmatpush1.bf16.msra.mxu0 0
        %1986 = vmatprep.subr.bf16.mxu0 0
        %1987 = vmatpush1.bf16.msra.mxu0 0
        %1988 = vmatprep.subr.bf16.mxu0 0
        %1989 = vmatpush1.bf16.msra.mxu0 0
        %1990 = vmatprep.subr.bf16.mxu0 0
        %1991 = vmatpush1.bf16.msra.mxu0 0
        %1992 = vmatprep.subr.bf16.mxu0 0
        %1993 = vmatpush1.bf16.msra.mxu0 0
        %1994 = vmatprep.subr.bf16.mxu0 0
        %1995 = vmatpush1.bf16.msra.mxu0 0
        %1996 = vmatprep.subr.bf16.mxu0 0
        %1997 = vmatpush1.bf16.msra.mxu0 0
        %1998 = vmatprep.subr.bf16.mxu0 0
        %1999 = vmatpush1.bf16.msra.mxu0 0
        %2000 = vmatprep.subr.bf16.mxu0 0
        %2001 = vmatpush1.bf16.msra.mxu0 0
        %2002 = vmatprep.subr.bf16.mxu0 0
        %2003 = vmatpush1.bf16.msra.mxu0 0
        %2004 = vmatprep.subr.bf16.mxu0 0
        %2005 = vmatpush1.bf16.msra.mxu0 0
        %2006 = vmatprep.subr.bf16.mxu0 0
        %2007 = vmatpush1.bf16.msra.mxu0 0
        %2008 = vmatprep.subr.bf16.mxu0 0
        %2009 = vmatpush1.bf16.msra.mxu0 0
        %2010 = vmatprep.subr.bf16.mxu0 0
        %2011 = vmatpush1.bf16.msra.mxu0 0
        %2012 = vmatprep.subr.bf16.mxu0 0
        %2013 = vmatpush1.bf16.msra.mxu0 0
        %2014 = vmatprep.mubr.bf16.mxu0 0
        %2015 = vmatmul.mubr.bf16.gmra.mrb[0].mxu0 %v1977
        %v2016 = vpop.f32.mrb[0].mxu0
        %v2017 = vadd.f32 0.0, %v2016
        %v2018 = vpop.f32.mrb[0].mxu0
        %v2019 = vpop.f32.mrb[0].mxu0
        %v2020 = vpop.f32.mrb[0].mxu0
        %2021 = vdwg.mxu0
        %2024 = vrot.lane.b32.xlu0 %v1969, 8
        %v2025 = vpop.permute.xlu0 %2024
        %2026 = vrot.lane.b32.xlu0 %v2017, 8
        %v2027 = vpop.permute.xlu0 %2026
        %vm2030 = vcmask 130112
        %2031 = vst.msk [vmem:[#allocation3] sm:$0xff] %vm2030, %v2025
        %2032 = vst.msk [vmem:[#allocation3 + $0x8] sm:$0xff] %vm2030, %v2027
        %2033 = vrot.lane.b32.xlu0 %v1453, 112
        %v2034 = vpop.permute.xlu0 %2033
        %2035 = vrot.lane.b32.xlu0 %v1447, 80
        %v2036 = vpop.permute.xlu0 %2035
        %v2037 = vsel %vm1467, %v2034, 0
        %v2039 = vsel %vm1467, %v2036, 0
        %2041 = vmatprep.subr.mxu0 0.0
        %2042 = vmatpush1.xpose.msra.mxu0 %v2039
        %2043 = vmatprep.subr.mxu0 0.0
        %2044 = vmatpush1.xpose.msra.mxu0 0.0
        %2045 = vmatprep.subr.mxu0 0.0
        %2046 = vmatpush1.xpose.msra.mxu0 0.0
        %2047 = vmatprep.subr.mxu0 0.0
        %2048 = vmatpush1.xpose.msra.mxu0 0.0
        %2049 = vmatprep.subr.mxu0 0.0
        %2050 = vmatpush1.xpose.msra.mxu0 0.0
        %2051 = vmatprep.subr.mxu0 0.0
        %2052 = vmatpush1.xpose.msra.mxu0 0.0
        %2053 = vmatprep.subr.mxu0 0.0
        %2054 = vmatpush1.xpose.msra.mxu0 0.0
        %2055 = vmatprep.subr.mxu0 0.0
        %2056 = vmatpush1.xpose.msra.mxu0 0.0
        %2057 = vmatprep.subr.mxu0 0.0
        %2058 = vmatpush1.xpose.msra.mxu0 0.0
        %2059 = vmatprep.subr.mxu0 0.0
        %2060 = vmatpush1.xpose.msra.mxu0 0.0
        %2061 = vmatprep.subr.mxu0 0.0
        %2062 = vmatpush1.xpose.msra.mxu0 0.0
        %2063 = vmatprep.subr.mxu0 0.0
        %2064 = vmatpush1.xpose.msra.mxu0 0.0
        %2065 = vmatprep.subr.mxu0 0.0
        %2066 = vmatpush1.xpose.msra.mxu0 0.0
        %2067 = vmatprep.subr.mxu0 0.0
        %2068 = vmatpush1.xpose.msra.mxu0 0.0
        %2069 = vmatprep.subr.mxu0 0.0
        %2070 = vmatpush1.xpose.msra.mxu0 0.0
        %2071 = vmatprep.subr.mxu0 0.0
        %2072 = vmatpush1.xpose.msra.mxu0 0.0
        %2073 = vmatprep.subr.mxu0 0.0
        %2074 = vmatpush1.xpose.msra.mxu0 0.0
        %2075 = vmatprep.subr.mxu0 0.0
        %2076 = vmatpush1.xpose.msra.mxu0 0.0
        %2077 = vmatprep.subr.mxu0 0.0
        %2078 = vmatpush1.xpose.msra.mxu0 0.0
        %2079 = vmatprep.subr.mxu0 0.0
        %2080 = vmatpush1.xpose.msra.mxu0 0.0
        %2081 = vmatprep.subr.mxu0 0.0
        %2082 = vmatpush1.xpose.msra.mxu0 0.0
        %2083 = vmatprep.subr.mxu0 0.0
        %2084 = vmatpush1.xpose.msra.mxu0 0.0
        %2085 = vmatprep.subr.mxu0 0.0
        %2086 = vmatpush1.xpose.msra.mxu0 0.0
        %2087 = vmatprep.subr.mxu0 0.0
        %2088 = vmatpush1.xpose.msra.mxu0 0.0
        %2089 = vmatprep.subr.mxu0 0.0
        %2090 = vmatpush1.xpose.msra.mxu0 0.0
        %2091 = vmatprep.subr.mxu0 0.0
        %2092 = vmatpush1.xpose.msra.mxu0 0.0
        %2093 = vmatprep.subr.mxu0 0.0
        %2094 = vmatpush1.xpose.msra.mxu0 0.0
        %2095 = vmatprep.subr.mxu0 0.0
        %2096 = vmatpush1.xpose.msra.mxu0 0.0
        %2097 = vmatprep.subr.mxu0 0.0
        %2098 = vmatpush1.xpose.msra.mxu0 0.0
        %2099 = vmatprep.subr.mxu0 0.0
        %2100 = vmatpush1.xpose.msra.mxu0 0.0
        %2101 = vmatprep.subr.mxu0 0.0
        %2102 = vmatpush1.xpose.msra.mxu0 0.0
        %2103 = vmatprep.subr.mxu0 0.0
        %2104 = vmatpush1.xpose.msra.mxu0 0.0
        %2105 = vmatprep.mubr.f32.mxu0 0.0
        %2106 = vmatmul.mubr.f32.gmra.mrb[0].mxu0 %v2037
        %v2107 = vpop.f32.mrb[0].mxu0
        %v2108 = vadd.f32 %v1380, %v2107
        %v2109 = vpop.f32.mrb[0].mxu0
        %2110 = vdwg.mxu0
        %2111 = vrot.lane.b32.xlu0 %v1454, 112
        %v2112 = vpop.permute.xlu0 %2111
        %2113 = vrot.lane.b32.xlu0 %v1450, 80
        %v2114 = vpop.permute.xlu0 %2113
        %v2115 = vsel %vm1467, %v2112, 0
        %v2117 = vsel %vm1467, %v2114, 0
        %2119 = vmatprep.subr.mxu0 0.0
        %2120 = vmatpush1.xpose.msra.mxu0 %v2117
        %2121 = vmatprep.subr.mxu0 0.0
        %2122 = vmatpush1.xpose.msra.mxu0 0.0
        %2123 = vmatprep.subr.mxu0 0.0
        %2124 = vmatpush1.xpose.msra.mxu0 0.0
        %2125 = vmatprep.subr.mxu0 0.0
        %2126 = vmatpush1.xpose.msra.mxu0 0.0
        %2127 = vmatprep.subr.mxu0 0.0
        %2128 = vmatpush1.xpose.msra.mxu0 0.0
        %2129 = vmatprep.subr.mxu0 0.0
        %2130 = vmatpush1.xpose.msra.mxu0 0.0
        %2131 = vmatprep.subr.mxu0 0.0
        %2132 = vmatpush1.xpose.msra.mxu0 0.0
        %2133 = vmatprep.subr.mxu0 0.0
        %2134 = vmatpush1.xpose.msra.mxu0 0.0
        %2135 = vmatprep.subr.mxu0 0.0
        %2136 = vmatpush1.xpose.msra.mxu0 0.0
        %2137 = vmatprep.subr.mxu0 0.0
        %2138 = vmatpush1.xpose.msra.mxu0 0.0
        %2139 = vmatprep.subr.mxu0 0.0
        %2140 = vmatpush1.xpose.msra.mxu0 0.0
        %2141 = vmatprep.subr.mxu0 0.0
        %2142 = vmatpush1.xpose.msra.mxu0 0.0
        %2143 = vmatprep.subr.mxu0 0.0
        %2144 = vmatpush1.xpose.msra.mxu0 0.0
        %2145 = vmatprep.subr.mxu0 0.0
        %2146 = vmatpush1.xpose.msra.mxu0 0.0
        %2147 = vmatprep.subr.mxu0 0.0
        %2148 = vmatpush1.xpose.msra.mxu0 0.0
        %2149 = vmatprep.subr.mxu0 0.0
        %2150 = vmatpush1.xpose.msra.mxu0 0.0
        %2151 = vmatprep.subr.mxu0 0.0
        %2152 = vmatpush1.xpose.msra.mxu0 0.0
        %2153 = vmatprep.subr.mxu0 0.0
        %2154 = vmatpush1.xpose.msra.mxu0 0.0
        %2155 = vmatprep.subr.mxu0 0.0
        %2156 = vmatpush1.xpose.msra.mxu0 0.0
        %2157 = vmatprep.subr.mxu0 0.0
        %2158 = vmatpush1.xpose.msra.mxu0 0.0
        %2159 = vmatprep.subr.mxu0 0.0
        %2160 = vmatpush1.xpose.msra.mxu0 0.0
        %2161 = vmatprep.subr.mxu0 0.0
        %2162 = vmatpush1.xpose.msra.mxu0 0.0
        %2163 = vmatprep.subr.mxu0 0.0
        %2164 = vmatpush1.xpose.msra.mxu0 0.0
        %2165 = vmatprep.subr.mxu0 0.0
        %2166 = vmatpush1.xpose.msra.mxu0 0.0
        %2167 = vmatprep.subr.mxu0 0.0
        %2168 = vmatpush1.xpose.msra.mxu0 0.0
        %2169 = vmatprep.subr.mxu0 0.0
        %2170 = vmatpush1.xpose.msra.mxu0 0.0
        %2171 = vmatprep.subr.mxu0 0.0
        %2172 = vmatpush1.xpose.msra.mxu0 0.0
        %2173 = vmatprep.subr.mxu0 0.0
        %2174 = vmatpush1.xpose.msra.mxu0 0.0
        %2175 = vmatprep.subr.mxu0 0.0
        %2176 = vmatpush1.xpose.msra.mxu0 0.0
        %2177 = vmatprep.subr.mxu0 0.0
        %2178 = vmatpush1.xpose.msra.mxu0 0.0
        %2179 = vmatprep.subr.mxu0 0.0
        %2180 = vmatpush1.xpose.msra.mxu0 0.0
        %2181 = vmatprep.subr.mxu0 0.0
        %2182 = vmatpush1.xpose.msra.mxu0 0.0
        %2183 = vmatprep.mubr.f32.mxu0 0.0
        %2184 = vmatmul.mubr.f32.gmra.mrb[0].mxu0 %v2115
        %v2185 = vpop.f32.mrb[0].mxu0
        %v2186 = vadd.f32 %v1381, %v2185
        %v2187 = vpop.f32.mrb[0].mxu0
        %2188 = vdwg.mxu0
        %v2189 = vsel %vm1467, %v2108, -inf
        %2190 = vmax.xlane.f32.xlu0 %v2189
        %v2191 = vpop.xlane.xlu0 %2190
        %v2192 = vsel %vm1467, %v2186, -inf
        %2193 = vmax.xlane.f32.xlu0 %v2192
        %v2194 = vpop.xlane.xlu0 %2193
        %v2195 = vsub.f32 %v2108, %v2191
        %v2196 = vsub.f32 %v2186, %v2194
        %v2197 = vmul.f32 %v2195, 1.442695
        %v2198 = vpow.pop %v2197
        %v2199 = vmul.f32 %v2196, 1.442695
        %v2200 = vpow.pop %v2199
        %v2201 = vsel %vm1467, %v2198, 0.0
        %2202 = vadd.xlane.f32.xlu0 %v2201
        %v2203 = vpop.xlane.xlu0 %2202
        %v2204 = vsel %vm1467, %v2200, 0.0
        %2205 = vadd.xlane.f32.xlu0 %v2204
        %v2206 = vpop.xlane.xlu0 %2205
        %v2207 = vrcp.pop %v2203
        %v2208 = vrcp.pop %v2206
        %v2209 = vmul.f32 %v2198, %v2207
        %v2210 = vmul.f32 %v2200, %v2208
        %v2211 = vpack.c.bf16 %v2209, %v2209
        %v2212 = vpack.c.bf16 %v2210, %v2210
        %2213 = vrot.lane.b32.xlu0 %v1462, 48
        %v2214 = vpop.permute.xlu0 %2213
        %v2216 = vsel %vm1467, %v2211, 0
        %v2219 = vsel %vm1651, %v2214, 0
        %2221 = vmatprep.subr.bf16.mxu0 0
        %2222 = vmatpush1.bf16.msra.mxu0 %v2219
        %2223 = vmatprep.subr.bf16.mxu0 0
        %2224 = vmatpush1.bf16.msra.mxu0 0
        %2225 = vmatprep.subr.bf16.mxu0 0
        %2226 = vmatpush1.bf16.msra.mxu0 0
        %2227 = vmatprep.subr.bf16.mxu0 0
        %2228 = vmatpush1.bf16.msra.mxu0 0
        %2229 = vmatprep.subr.bf16.mxu0 0
        %2230 = vmatpush1.bf16.msra.mxu0 0
        %2231 = vmatprep.subr.bf16.mxu0 0
        %2232 = vmatpush1.bf16.msra.mxu0 0
        %2233 = vmatprep.subr.bf16.mxu0 0
        %2234 = vmatpush1.bf16.msra.mxu0 0
        %2235 = vmatprep.subr.bf16.mxu0 0
        %2236 = vmatpush1.bf16.msra.mxu0 0
        %2237 = vmatprep.subr.bf16.mxu0 0
        %2238 = vmatpush1.bf16.msra.mxu0 0
        %2239 = vmatprep.subr.bf16.mxu0 0
        %2240 = vmatpush1.bf16.msra.mxu0 0
        %2241 = vmatprep.subr.bf16.mxu0 0
        %2242 = vmatpush1.bf16.msra.mxu0 0
        %2243 = vmatprep.subr.bf16.mxu0 0
        %2244 = vmatpush1.bf16.msra.mxu0 0
        %2245 = vmatprep.subr.bf16.mxu0 0
        %2246 = vmatpush1.bf16.msra.mxu0 0
        %2247 = vmatprep.subr.bf16.mxu0 0
        %2248 = vmatpush1.bf16.msra.mxu0 0
        %2249 = vmatprep.subr.bf16.mxu0 0
        %2250 = vmatpush1.bf16.msra.mxu0 0
        %2251 = vmatprep.subr.bf16.mxu0 0
        %2252 = vmatpush1.bf16.msra.mxu0 0
        %2253 = vmatprep.mubr.bf16.mxu0 0
        %2254 = vmatmul.mubr.bf16.gmra.mrb[0].mxu0 %v2216
        %v2255 = vpop.f32.mrb[0].mxu0
        %v2256 = vadd.f32 0.0, %v2255
        %v2257 = vpop.f32.mrb[0].mxu0
        %v2258 = vpop.f32.mrb[0].mxu0
        %v2259 = vpop.f32.mrb[0].mxu0
        %2260 = vdwg.mxu0
        %2261 = vrot.lane.b32.xlu0 %v1463, 48
        %v2262 = vpop.permute.xlu0 %2261
        %v2264 = vsel %vm1467, %v2212, 0
        %v2267 = vsel %vm1651, %v2262, 0
        %2269 = vmatprep.subr.bf16.mxu0 0
        %2270 = vmatpush1.bf16.msra.mxu0 %v2267
        %2271 = vmatprep.subr.bf16.mxu0 0
        %2272 = vmatpush1.bf16.msra.mxu0 0
        %2273 = vmatprep.subr.bf16.mxu0 0
        %2274 = vmatpush1.bf16.msra.mxu0 0
        %2275 = vmatprep.subr.bf16.mxu0 0
        %2276 = vmatpush1.bf16.msra.mxu0 0
        %2277 = vmatprep.subr.bf16.mxu0 0
        %2278 = vmatpush1.bf16.msra.mxu0 0
        %2279 = vmatprep.subr.bf16.mxu0 0
        %2280 = vmatpush1.bf16.msra.mxu0 0
        %2281 = vmatprep.subr.bf16.mxu0 0
        %2282 = vmatpush1.bf16.msra.mxu0 0
        %2283 = vmatprep.subr.bf16.mxu0 0
        %2284 = vmatpush1.bf16.msra.mxu0 0
        %2285 = vmatprep.subr.bf16.mxu0 0
        %2286 = vmatpush1.bf16.msra.mxu0 0
        %2287 = vmatprep.subr.bf16.mxu0 0
        %2288 = vmatpush1.bf16.msra.mxu0 0
        %2289 = vmatprep.subr.bf16.mxu0 0
        %2290 = vmatpush1.bf16.msra.mxu0 0
        %2291 = vmatprep.subr.bf16.mxu0 0
        %2292 = vmatpush1.bf16.msra.mxu0 0
        %2293 = vmatprep.subr.bf16.mxu0 0
        %2294 = vmatpush1.bf16.msra.mxu0 0
        %2295 = vmatprep.subr.bf16.mxu0 0
        %2296 = vmatpush1.bf16.msra.mxu0 0
        %2297 = vmatprep.subr.bf16.mxu0 0
        %2298 = vmatpush1.bf16.msra.mxu0 0
        %2299 = vmatprep.subr.bf16.mxu0 0
        %2300 = vmatpush1.bf16.msra.mxu0 0
        %2301 = vmatprep.mubr.bf16.mxu0 0
        %2302 = vmatmul.mubr.bf16.gmra.mrb[0].mxu0 %v2264
        %v2303 = vpop.f32.mrb[0].mxu0
        %v2304 = vadd.f32 0.0, %v2303
        %v2305 = vpop.f32.mrb[0].mxu0
        %v2306 = vpop.f32.mrb[0].mxu0
        %v2307 = vpop.f32.mrb[0].mxu0
        %2308 = vdwg.mxu0
        %2311 = vrot.lane.b32.xlu0 %v2256, 16
        %v2312 = vpop.permute.xlu0 %2311
        %2313 = vrot.lane.b32.xlu0 %v2304, 16
        %v2314 = vpop.permute.xlu0 %2313
        %vm2317 = vcmask 195712
        %2318 = vst.msk [vmem:[#allocation3] sm:$0xff] %vm2317, %v2312
        %2319 = vst.msk [vmem:[#allocation3 + $0x8] sm:$0xff] %vm2317, %v2314
        %2320 = vrot.lane.b32.xlu0 %v1453, 104
        %v2321 = vpop.permute.xlu0 %2320
        %2322 = vrot.lane.b32.xlu0 %v1447, 72
        %v2323 = vpop.permute.xlu0 %2322
        %v2324 = vsel %vm1467, %v2321, 0
        %v2326 = vsel %vm1467, %v2323, 0
        %2328 = vmatprep.subr.mxu0 0.0
        %2329 = vmatpush1.xpose.msra.mxu0 %v2326
        %2330 = vmatprep.subr.mxu0 0.0
        %2331 = vmatpush1.xpose.msra.mxu0 0.0
        %2332 = vmatprep.subr.mxu0 0.0
        %2333 = vmatpush1.xpose.msra.mxu0 0.0
        %2334 = vmatprep.subr.mxu0 0.0
        %2335 = vmatpush1.xpose.msra.mxu0 0.0
        %2336 = vmatprep.subr.mxu0 0.0
        %2337 = vmatpush1.xpose.msra.mxu0 0.0
        %2338 = vmatprep.subr.mxu0 0.0
        %2339 = vmatpush1.xpose.msra.mxu0 0.0
        %2340 = vmatprep.subr.mxu0 0.0
        %2341 = vmatpush1.xpose.msra.mxu0 0.0
        %2342 = vmatprep.subr.mxu0 0.0
        %2343 = vmatpush1.xpose.msra.mxu0 0.0
        %2344 = vmatprep.subr.mxu0 0.0
        %2345 = vmatpush1.xpose.msra.mxu0 0.0
        %2346 = vmatprep.subr.mxu0 0.0
        %2347 = vmatpush1.xpose.msra.mxu0 0.0
        %2348 = vmatprep.subr.mxu0 0.0
        %2349 = vmatpush1.xpose.msra.mxu0 0.0
        %2350 = vmatprep.subr.mxu0 0.0
        %2351 = vmatpush1.xpose.msra.mxu0 0.0
        %2352 = vmatprep.subr.mxu0 0.0
        %2353 = vmatpush1.xpose.msra.mxu0 0.0
        %2354 = vmatprep.subr.mxu0 0.0
        %2355 = vmatpush1.xpose.msra.mxu0 0.0
        %2356 = vmatprep.subr.mxu0 0.0
        %2357 = vmatpush1.xpose.msra.mxu0 0.0
        %2358 = vmatprep.subr.mxu0 0.0
        %2359 = vmatpush1.xpose.msra.mxu0 0.0
        %2360 = vmatprep.subr.mxu0 0.0
        %2361 = vmatpush1.xpose.msra.mxu0 0.0
        %2362 = vmatprep.subr.mxu0 0.0
        %2363 = vmatpush1.xpose.msra.mxu0 0.0
        %2364 = vmatprep.subr.mxu0 0.0
        %2365 = vmatpush1.xpose.msra.mxu0 0.0
        %2366 = vmatprep.subr.mxu0 0.0
        %2367 = vmatpush1.xpose.msra.mxu0 0.0
        %2368 = vmatprep.subr.mxu0 0.0
        %2369 = vmatpush1.xpose.msra.mxu0 0.0
        %2370 = vmatprep.subr.mxu0 0.0
        %2371 = vmatpush1.xpose.msra.mxu0 0.0
        %2372 = vmatprep.subr.mxu0 0.0
        %2373 = vmatpush1.xpose.msra.mxu0 0.0
        %2374 = vmatprep.subr.mxu0 0.0
        %2375 = vmatpush1.xpose.msra.mxu0 0.0
        %2376 = vmatprep.subr.mxu0 0.0
        %2377 = vmatpush1.xpose.msra.mxu0 0.0
        %2378 = vmatprep.subr.mxu0 0.0
        %2379 = vmatpush1.xpose.msra.mxu0 0.0
        %2380 = vmatprep.subr.mxu0 0.0
        %2381 = vmatpush1.xpose.msra.mxu0 0.0
        %2382 = vmatprep.subr.mxu0 0.0
        %2383 = vmatpush1.xpose.msra.mxu0 0.0
        %2384 = vmatprep.subr.mxu0 0.0
        %2385 = vmatpush1.xpose.msra.mxu0 0.0
        %2386 = vmatprep.subr.mxu0 0.0
        %2387 = vmatpush1.xpose.msra.mxu0 0.0
        %2388 = vmatprep.subr.mxu0 0.0
        %2389 = vmatpush1.xpose.msra.mxu0 0.0
        %2390 = vmatprep.subr.mxu0 0.0
        %2391 = vmatpush1.xpose.msra.mxu0 0.0
        %2392 = vmatprep.mubr.f32.mxu0 0.0
        %2393 = vmatmul.mubr.f32.gmra.mrb[0].mxu0 %v2324
        %v2394 = vpop.f32.mrb[0].mxu0
        %v2395 = vadd.f32 %v1380, %v2394
        %v2396 = vpop.f32.mrb[0].mxu0
        %2397 = vdwg.mxu0
        %2398 = vrot.lane.b32.xlu0 %v1454, 104
        %v2399 = vpop.permute.xlu0 %2398
        %2400 = vrot.lane.b32.xlu0 %v1450, 72
        %v2401 = vpop.permute.xlu0 %2400
        %v2402 = vsel %vm1467, %v2399, 0
        %v2404 = vsel %vm1467, %v2401, 0
        %2406 = vmatprep.subr.mxu0 0.0
        %2407 = vmatpush1.xpose.msra.mxu0 %v2404
        %2408 = vmatprep.subr.mxu0 0.0
        %2409 = vmatpush1.xpose.msra.mxu0 0.0
        %2410 = vmatprep.subr.mxu0 0.0
        %2411 = vmatpush1.xpose.msra.mxu0 0.0
        %2412 = vmatprep.subr.mxu0 0.0
        %2413 = vmatpush1.xpose.msra.mxu0 0.0
        %2414 = vmatprep.subr.mxu0 0.0
        %2415 = vmatpush1.xpose.msra.mxu0 0.0
        %2416 = vmatprep.subr.mxu0 0.0
        %2417 = vmatpush1.xpose.msra.mxu0 0.0
        %2418 = vmatprep.subr.mxu0 0.0
        %2419 = vmatpush1.xpose.msra.mxu0 0.0
        %2420 = vmatprep.subr.mxu0 0.0
        %2421 = vmatpush1.xpose.msra.mxu0 0.0
        %2422 = vmatprep.subr.mxu0 0.0
        %2423 = vmatpush1.xpose.msra.mxu0 0.0
        %2424 = vmatprep.subr.mxu0 0.0
        %2425 = vmatpush1.xpose.msra.mxu0 0.0
        %2426 = vmatprep.subr.mxu0 0.0
        %2427 = vmatpush1.xpose.msra.mxu0 0.0
        %2428 = vmatprep.subr.mxu0 0.0
        %2429 = vmatpush1.xpose.msra.mxu0 0.0
        %2430 = vmatprep.subr.mxu0 0.0
        %2431 = vmatpush1.xpose.msra.mxu0 0.0
        %2432 = vmatprep.subr.mxu0 0.0
        %2433 = vmatpush1.xpose.msra.mxu0 0.0
        %2434 = vmatprep.subr.mxu0 0.0
        %2435 = vmatpush1.xpose.msra.mxu0 0.0
        %2436 = vmatprep.subr.mxu0 0.0
        %2437 = vmatpush1.xpose.msra.mxu0 0.0
        %2438 = vmatprep.subr.mxu0 0.0
        %2439 = vmatpush1.xpose.msra.mxu0 0.0
        %2440 = vmatprep.subr.mxu0 0.0
        %2441 = vmatpush1.xpose.msra.mxu0 0.0
        %2442 = vmatprep.subr.mxu0 0.0
        %2443 = vmatpush1.xpose.msra.mxu0 0.0
        %2444 = vmatprep.subr.mxu0 0.0
        %2445 = vmatpush1.xpose.msra.mxu0 0.0
        %2446 = vmatprep.subr.mxu0 0.0
        %2447 = vmatpush1.xpose.msra.mxu0 0.0
        %2448 = vmatprep.subr.mxu0 0.0
        %2449 = vmatpush1.xpose.msra.mxu0 0.0
        %2450 = vmatprep.subr.mxu0 0.0
        %2451 = vmatpush1.xpose.msra.mxu0 0.0
        %2452 = vmatprep.subr.mxu0 0.0
        %2453 = vmatpush1.xpose.msra.mxu0 0.0
        %2454 = vmatprep.subr.mxu0 0.0
        %2455 = vmatpush1.xpose.msra.mxu0 0.0
        %2456 = vmatprep.subr.mxu0 0.0
        %2457 = vmatpush1.xpose.msra.mxu0 0.0
        %2458 = vmatprep.subr.mxu0 0.0
        %2459 = vmatpush1.xpose.msra.mxu0 0.0
        %2460 = vmatprep.subr.mxu0 0.0
        %2461 = vmatpush1.xpose.msra.mxu0 0.0
        %2462 = vmatprep.subr.mxu0 0.0
        %2463 = vmatpush1.xpose.msra.mxu0 0.0
        %2464 = vmatprep.subr.mxu0 0.0
        %2465 = vmatpush1.xpose.msra.mxu0 0.0
        %2466 = vmatprep.subr.mxu0 0.0
        %2467 = vmatpush1.xpose.msra.mxu0 0.0
        %2468 = vmatprep.subr.mxu0 0.0
        %2469 = vmatpush1.xpose.msra.mxu0 0.0
        %2470 = vmatprep.mubr.f32.mxu0 0.0
        %2471 = vmatmul.mubr.f32.gmra.mrb[0].mxu0 %v2402
        %v2472 = vpop.f32.mrb[0].mxu0
        %v2473 = vadd.f32 %v1381, %v2472
        %v2474 = vpop.f32.mrb[0].mxu0
        %2475 = vdwg.mxu0
        %v2476 = vsel %vm1467, %v2395, -inf
        %2477 = vmax.xlane.f32.xlu0 %v2476
        %v2478 = vpop.xlane.xlu0 %2477
        %v2479 = vsel %vm1467, %v2473, -inf
        %2480 = vmax.xlane.f32.xlu0 %v2479
        %v2481 = vpop.xlane.xlu0 %2480
        %v2482 = vsub.f32 %v2395, %v2478
        %v2483 = vsub.f32 %v2473, %v2481
        %v2484 = vmul.f32 %v2482, 1.442695
        %v2485 = vpow.pop %v2484
        %v2486 = vmul.f32 %v2483, 1.442695
        %v2487 = vpow.pop %v2486
        %v2488 = vsel %vm1467, %v2485, 0.0
        %2489 = vadd.xlane.f32.xlu0 %v2488
        %v2490 = vpop.xlane.xlu0 %2489
        %v2491 = vsel %vm1467, %v2487, 0.0
        %2492 = vadd.xlane.f32.xlu0 %v2491
        %v2493 = vpop.xlane.xlu0 %2492
        %v2494 = vrcp.pop %v2490
        %v2495 = vrcp.pop %v2493
        %v2496 = vmul.f32 %v2485, %v2494
        %v2497 = vmul.f32 %v2487, %v2495
        %v2498 = vpack.c.bf16 %v2496, %v2496
        %v2499 = vpack.c.bf16 %v2497, %v2497
        %2500 = vrot.lane.b32.xlu0 %v1462, 40
        %v2501 = vpop.permute.xlu0 %2500
        %v2503 = vsel %vm1467, %v2498, 0
        %v2506 = vsel %vm1651, %v2501, 0
        %2508 = vmatprep.subr.bf16.mxu0 0
        %2509 = vmatpush1.bf16.msra.mxu0 %v2506
        %2510 = vmatprep.subr.bf16.mxu0 0
        %2511 = vmatpush1.bf16.msra.mxu0 0
        %2512 = vmatprep.subr.bf16.mxu0 0
        %2513 = vmatpush1.bf16.msra.mxu0 0
        %2514 = vmatprep.subr.bf16.mxu0 0
        %2515 = vmatpush1.bf16.msra.mxu0 0
        %2516 = vmatprep.subr.bf16.mxu0 0
        %2517 = vmatpush1.bf16.msra.mxu0 0
        %2518 = vmatprep.subr.bf16.mxu0 0
        %2519 = vmatpush1.bf16.msra.mxu0 0
        %2520 = vmatprep.subr.bf16.mxu0 0
        %2521 = vmatpush1.bf16.msra.mxu0 0
        %2522 = vmatprep.subr.bf16.mxu0 0
        %2523 = vmatpush1.bf16.msra.mxu0 0
        %2524 = vmatprep.subr.bf16.mxu0 0
        %2525 = vmatpush1.bf16.msra.mxu0 0
        %2526 = vmatprep.subr.bf16.mxu0 0
        %2527 = vmatpush1.bf16.msra.mxu0 0
        %2528 = vmatprep.subr.bf16.mxu0 0
        %2529 = vmatpush1.bf16.msra.mxu0 0
        %2530 = vmatprep.subr.bf16.mxu0 0
        %2531 = vmatpush1.bf16.msra.mxu0 0
        %2532 = vmatprep.subr.bf16.mxu0 0
        %2533 = vmatpush1.bf16.msra.mxu0 0
        %2534 = vmatprep.subr.bf16.mxu0 0
        %2535 = vmatpush1.bf16.msra.mxu0 0
        %2536 = vmatprep.subr.bf16.mxu0 0
        %2537 = vmatpush1.bf16.msra.mxu0 0
        %2538 = vmatprep.subr.bf16.mxu0 0
        %2539 = vmatpush1.bf16.msra.mxu0 0
        %2540 = vmatprep.mubr.bf16.mxu0 0
        %2541 = vmatmul.mubr.bf16.gmra.mrb[0].mxu0 %v2503
        %v2542 = vpop.f32.mrb[0].mxu0
        %v2543 = vadd.f32 0.0, %v2542
        %v2544 = vpop.f32.mrb[0].mxu0
        %v2545 = vpop.f32.mrb[0].mxu0
        %v2546 = vpop.f32.mrb[0].mxu0
        %2547 = vdwg.mxu0
        %2548 = vrot.lane.b32.xlu0 %v1463, 40
        %v2549 = vpop.permute.xlu0 %2548
        %v2551 = vsel %vm1467, %v2499, 0
        %v2554 = vsel %vm1651, %v2549, 0
        %2556 = vmatprep.subr.bf16.mxu0 0
        %2557 = vmatpush1.bf16.msra.mxu0 %v2554
        %2558 = vmatprep.subr.bf16.mxu0 0
        %2559 = vmatpush1.bf16.msra.mxu0 0
        %2560 = vmatprep.subr.bf16.mxu0 0
        %2561 = vmatpush1.bf16.msra.mxu0 0
        %2562 = vmatprep.subr.bf16.mxu0 0
        %2563 = vmatpush1.bf16.msra.mxu0 0
        %2564 = vmatprep.subr.bf16.mxu0 0
        %2565 = vmatpush1.bf16.msra.mxu0 0
        %2566 = vmatprep.subr.bf16.mxu0 0
        %2567 = vmatpush1.bf16.msra.mxu0 0
        %2568 = vmatprep.subr.bf16.mxu0 0
        %2569 = vmatpush1.bf16.msra.mxu0 0
        %2570 = vmatprep.subr.bf16.mxu0 0
        %2571 = vmatpush1.bf16.msra.mxu0 0
        %2572 = vmatprep.subr.bf16.mxu0 0
        %2573 = vmatpush1.bf16.msra.mxu0 0
        %2574 = vmatprep.subr.bf16.mxu0 0
        %2575 = vmatpush1.bf16.msra.mxu0 0
        %2576 = vmatprep.subr.bf16.mxu0 0
        %2577 = vmatpush1.bf16.msra.mxu0 0
        %2578 = vmatprep.subr.bf16.mxu0 0
        %2579 = vmatpush1.bf16.msra.mxu0 0
        %2580 = vmatprep.subr.bf16.mxu0 0
        %2581 = vmatpush1.bf16.msra.mxu0 0
        %2582 = vmatprep.subr.bf16.mxu0 0
        %2583 = vmatpush1.bf16.msra.mxu0 0
        %2584 = vmatprep.subr.bf16.mxu0 0
        %2585 = vmatpush1.bf16.msra.mxu0 0
        %2586 = vmatprep.subr.bf16.mxu0 0
        %2587 = vmatpush1.bf16.msra.mxu0 0
        %2588 = vmatprep.mubr.bf16.mxu0 0
        %2589 = vmatmul.mubr.bf16.gmra.mrb[0].mxu0 %v2551
        %v2590 = vpop.f32.mrb[0].mxu0
        %v2591 = vadd.f32 0.0, %v2590
        %v2592 = vpop.f32.mrb[0].mxu0
        %v2593 = vpop.f32.mrb[0].mxu0
        %v2594 = vpop.f32.mrb[0].mxu0
        %2595 = vdwg.mxu0
        %2598 = vrot.lane.b32.xlu0 %v2543, 24
        %v2599 = vpop.permute.xlu0 %2598
        %2600 = vrot.lane.b32.xlu0 %v2591, 24
        %v2601 = vpop.permute.xlu0 %2600
        %vm2604 = vcmask 261312
        %2605 = vst.msk [vmem:[#allocation3] sm:$0xff] %vm2604, %v2599
        %2606 = vst.msk [vmem:[#allocation3 + $0x8] sm:$0xff] %vm2604, %v2601
        %v2607 = vld [vmem:[#allocation3] sm:$0xff]
        %v2608 = vld [vmem:[#allocation3 + $0x8] sm:$0xff]
        %v2609 = vpack.c.bf16 %v2608, %v2607
        %v2611 = vlaneseq
        %v2612 = vshrl.u32 %v2611, 7
        %v2613 = vsub.s32 0, %v2612
        %v2614 = vrot.slane %v1459, %v2613
        %v2620 = vunpack.c.l.b16 %v1455
        %v2621 = vunpack.c.l.b16 %v1456
        %v2622 = vunpack.c.l.b16 %v1457
        %v2623 = vunpack.c.l.b16 %v1458
        %v2624 = vpack.c.b16 %v2621, %v2620
        %v2625 = vpack.c.b16 %v2623, %v2622
        %v2629 = vsel %vm1408, %v2609, 0
        %2631 = vmatprep.subr.bf16.mxu0 0
        %2632 = vmatpush1.bf16.msra.mxu0 %v2624
        %2633 = vmatprep.subr.bf16.mxu0 0
        %2634 = vmatpush1.bf16.msra.mxu0 %v2625
        %2635 = vmatprep.subr.bf16.mxu0 0
        %2636 = vmatpush1.bf16.msra.mxu0 0
        %2637 = vmatprep.subr.bf16.mxu0 0
        %2638 = vmatpush1.bf16.msra.mxu0 0
        %2639 = vmatprep.subr.bf16.mxu0 0
        %2640 = vmatpush1.bf16.msra.mxu0 0
        %2641 = vmatprep.subr.bf16.mxu0 0
        %2642 = vmatpush1.bf16.msra.mxu0 0
        %2643 = vmatprep.subr.bf16.mxu0 0
        %2644 = vmatpush1.bf16.msra.mxu0 0
        %2645 = vmatprep.subr.bf16.mxu0 0
        %2646 = vmatpush1.bf16.msra.mxu0 0
        %2647 = vmatprep.subr.bf16.mxu0 0
        %2648 = vmatpush1.bf16.msra.mxu0 0
        %2649 = vmatprep.subr.bf16.mxu0 0
        %2650 = vmatpush1.bf16.msra.mxu0 0
        %2651 = vmatprep.subr.bf16.mxu0 0
        %2652 = vmatpush1.bf16.msra.mxu0 0
        %2653 = vmatprep.subr.bf16.mxu0 0
        %2654 = vmatpush1.bf16.msra.mxu0 0
        %2655 = vmatprep.subr.bf16.mxu0 0
        %2656 = vmatpush1.bf16.msra.mxu0 0
        %2657 = vmatprep.subr.bf16.mxu0 0
        %2658 = vmatpush1.bf16.msra.mxu0 0
        %2659 = vmatprep.subr.bf16.mxu0 0
        %2660 = vmatpush1.bf16.msra.mxu0 0
        %2661 = vmatprep.subr.bf16.mxu0 0
        %2662 = vmatpush1.bf16.msra.mxu0 0
        %2663 = vmatprep.mubr.bf16.mxu0 0
        %2664 = vmatmul.mubr.bf16.gmra.mrb[0].mxu0 %v2629
        %v2665 = vpop.f32.mrb[0].mxu0
        %v2666 = vadd.f32 %v2614, %v2665
        %v2667 = vpop.f32.mrb[0].mxu0
        %v2668 = vpop.f32.mrb[0].mxu0
        %v2669 = vadd.f32 %v2614, %v2668
        %v2670 = vpop.f32.mrb[0].mxu0
        %2671 = vdwg.mxu0
        %v2672 = vadd.f32 %v2666, %v1376
        %v2673 = vadd.f32 %v2669, %v1377
        %v2674 = vsel %vm1408, %v2672, 0.0
        %2675 = vadd.xlane.f32.xlu0 %v2674
        %v2676 = vpop.xlane.xlu0 %2675
        %v2677 = vsel %vm1408, %v2673, 0.0
        %2678 = vadd.xlane.f32.xlu0 %v2677
        %v2679 = vpop.xlane.xlu0 %2678
        %v2680 = vmul.f32 %v2672, %v2672
        %v2681 = vmul.f32 %v2673, %v2673
        %v2682 = vsel %vm1408, %v2680, 0.0
        %2683 = vadd.xlane.f32.xlu0 %v2682
        %v2684 = vpop.xlane.xlu0 %2683
        %v2685 = vsel %vm1408, %v2681, 0.0
        %2686 = vadd.xlane.f32.xlu0 %v2685
        %v2687 = vpop.xlane.xlu0 %2686
        %v2688 = vmul.f32 %v2676, 0.03125
        %v2689 = vmul.f32 %v2679, 0.03125
        %v2690 = vmul.f32 %v2684, 0.03125
        %v2691 = vmul.f32 %v2687, 0.03125
        %v2692 = vmul.f32 %v2688, %v2688
        %v2693 = vmul.f32 %v2689, %v2689
        %v2694 = vsub.f32 %v2690, %v2692
        %v2695 = vsub.f32 %v2691, %v2693
        %v2696 = vsub.f32 %v2672, %v2688
        %v2697 = vsub.f32 %v2673, %v2689
        %v2698 = vadd.f32 %v2694, 1e-06
        %v2699 = vadd.f32 %v2695, 1e-06
        %v2700 = vrsqrt.pop %v2698
        %v2701 = vrsqrt.pop %v2699
        %v2702 = vmul.f32 %v2696, %v2700
        %v2703 = vmul.f32 %v2697, %v2701
        %v2705 = vlaneseq
        %v2706 = vshrl.u32 %v2705, 7
        %v2707 = vsub.s32 0, %v2706
        %v2708 = vrot.slane %v1460, %v2707
        %v2710 = vmul.f32 %v2702, %v2708
        %v2711 = vmul.f32 %v2703, %v2708
        %v2713 = vlaneseq
        %v2714 = vshrl.u32 %v2713, 7
        %v2715 = vsub.s32 0, %v2714
        %v2716 = vrot.slane %v1461, %v2715
        %v2718 = vadd.f32 %v2710, %v2716
        %v2719 = vadd.f32 %v2711, %v2716
        %v2720 = vpack.c.bf16 %v2719, %v2718
        %v2721 = vpack.c.bf16 %v1379, %v1378
        %v2722 = vld [vmem:[%s1337] sm:$0xf]
        %v2723 = vld [vmem:[%s1337 + $0x4] sm:$0xf]
        %v2724 = vld [vmem:[%s1337 + $0x8] sm:$0xf]
        %v2725 = vld [vmem:[%s1337 + $0xc] sm:$0xf]
        %v2726 = vld [vmem:[%s1138] sm:$0x1]
        %v2728 = vlaneseq
        %v2729 = vshrl.u32 %v2728, 7
        %v2730 = vsub.s32 0, %v2729
        %v2731 = vrot.slane %v2726, %v2730
        %v2737 = vunpack.c.l.b16 %v2722
        %v2738 = vunpack.c.l.b16 %v2723
        %v2739 = vunpack.c.l.b16 %v2724
        %v2740 = vunpack.c.l.b16 %v2725
        %v2741 = vpack.c.b16 %v2738, %v2737
        %v2742 = vpack.c.b16 %v2740, %v2739
        %v2746 = vsel %vm1408, %v2720, 0
        %2748 = vmatprep.subr.bf16.mxu0 0
        %2749 = vmatpush1.bf16.msra.mxu0 %v2741
        %2750 = vmatprep.subr.bf16.mxu0 0
        %2751 = vmatpush1.bf16.msra.mxu0 %v2742
        %2752 = vmatprep.subr.bf16.mxu0 0
        %2753 = vmatpush1.bf16.msra.mxu0 0
        %2754 = vmatprep.subr.bf16.mxu0 0
        %2755 = vmatpush1.bf16.msra.mxu0 0
        %2756 = vmatprep.subr.bf16.mxu0 0
        %2757 = vmatpush1.bf16.msra.mxu0 0
        %2758 = vmatprep.subr.bf16.mxu0 0
        %2759 = vmatpush1.bf16.msra.mxu0 0
        %2760 = vmatprep.subr.bf16.mxu0 0
        %2761 = vmatpush1.bf16.msra.mxu0 0
        %2762 = vmatprep.subr.bf16.mxu0 0
        %2763 = vmatpush1.bf16.msra.mxu0 0
        %2764 = vmatprep.subr.bf16.mxu0 0
        %2765 = vmatpush1.bf16.msra.mxu0 0
        %2766 = vmatprep.subr.bf16.mxu0 0
        %2767 = vmatpush1.bf16.msra.mxu0 0
        %2768 = vmatprep.subr.bf16.mxu0 0
        %2769 = vmatpush1.bf16.msra.mxu0 0
        %2770 = vmatprep.subr.bf16.mxu0 0
        %2771 = vmatpush1.bf16.msra.mxu0 0
        %2772 = vmatprep.subr.bf16.mxu0 0
        %2773 = vmatpush1.bf16.msra.mxu0 0
        %2774 = vmatprep.subr.bf16.mxu0 0
        %2775 = vmatpush1.bf16.msra.mxu0 0
        %2776 = vmatprep.subr.bf16.mxu0 0
        %2777 = vmatpush1.bf16.msra.mxu0 0
        %2778 = vmatprep.subr.bf16.mxu0 0
        %2779 = vmatpush1.bf16.msra.mxu0 0
        %2780 = vmatprep.mubr.bf16.mxu0 0
        %2781 = vmatmul.mubr.bf16.gmra.mrb[0].mxu0 %v2746
        %v2782 = vpop.f32.mrb[0].mxu0
        %v2783 = vadd.f32 %v2731, %v2782
        %v2784 = vpop.f32.mrb[0].mxu0
        %v2785 = vpop.f32.mrb[0].mxu0
        %v2786 = vadd.f32 %v2731, %v2785
        %v2787 = vpop.f32.mrb[0].mxu0
        %2788 = vdwg.mxu0
        %v2789 = vmul.f32 %v2783, 0.35355338
        %v2790 = vmul.f32 %v2786, 0.35355338
        %v2791 = vld [vmem:[%s1342] sm:$0xf]
        %v2792 = vld [vmem:[%s1342 + $0x4] sm:$0xf]
        %v2793 = vld [vmem:[%s1342 + $0x8] sm:$0xf]
        %v2794 = vld [vmem:[%s1342 + $0xc] sm:$0xf]
        %v2795 = vld [vmem:[%s1146] sm:$0x1]
        %v2797 = vlaneseq
        %v2798 = vshrl.u32 %v2797, 7
        %v2799 = vsub.s32 0, %v2798
        %v2800 = vrot.slane %v2795, %v2799
        %v2806 = vunpack.c.l.b16 %v2791
        %v2807 = vunpack.c.l.b16 %v2792
        %v2808 = vunpack.c.l.b16 %v2793
        %v2809 = vunpack.c.l.b16 %v2794
        %v2810 = vpack.c.b16 %v2807, %v2806
        %v2811 = vpack.c.b16 %v2809, %v2808
        %v2815 = vsel %vm1408, %v2721, 0
        %2817 = vmatprep.subr.bf16.mxu0 0
        %2818 = vmatpush1.bf16.msra.mxu0 %v2810
        %2819 = vmatprep.subr.bf16.mxu0 0
        %2820 = vmatpush1.bf16.msra.mxu0 %v2811
        %2821 = vmatprep.subr.bf16.mxu0 0
        %2822 = vmatpush1.bf16.msra.mxu0 0
        %2823 = vmatprep.subr.bf16.mxu0 0
        %2824 = vmatpush1.bf16.msra.mxu0 0
        %2825 = vmatprep.subr.bf16.mxu0 0
        %2826 = vmatpush1.bf16.msra.mxu0 0
        %2827 = vmatprep.subr.bf16.mxu0 0
        %2828 = vmatpush1.bf16.msra.mxu0 0
        %2829 = vmatprep.subr.bf16.mxu0 0
        %2830 = vmatpush1.bf16.msra.mxu0 0
        %2831 = vmatprep.subr.bf16.mxu0 0
        %2832 = vmatpush1.bf16.msra.mxu0 0
        %2833 = vmatprep.subr.bf16.mxu0 0
        %2834 = vmatpush1.bf16.msra.mxu0 0
        %2835 = vmatprep.subr.bf16.mxu0 0
        %2836 = vmatpush1.bf16.msra.mxu0 0
        %2837 = vmatprep.subr.bf16.mxu0 0
        %2838 = vmatpush1.bf16.msra.mxu0 0
        %2839 = vmatprep.subr.bf16.mxu0 0
        %2840 = vmatpush1.bf16.msra.mxu0 0
        %2841 = vmatprep.subr.bf16.mxu0 0
        %2842 = vmatpush1.bf16.msra.mxu0 0
        %2843 = vmatprep.subr.bf16.mxu0 0
        %2844 = vmatpush1.bf16.msra.mxu0 0
        %2845 = vmatprep.subr.bf16.mxu0 0
        %2846 = vmatpush1.bf16.msra.mxu0 0
        %2847 = vmatprep.subr.bf16.mxu0 0
        %2848 = vmatpush1.bf16.msra.mxu0 0
        %2849 = vmatprep.mubr.bf16.mxu0 0
        %2850 = vmatmul.mubr.bf16.gmra.mrb[0].mxu0 %v2815
        %v2851 = vpop.f32.mrb[0].mxu0
        %v2852 = vadd.f32 %v2800, %v2851
        %v2853 = vpop.f32.mrb[0].mxu0
        %v2854 = vpop.f32.mrb[0].mxu0
        %v2855 = vadd.f32 %v2800, %v2854
        %v2856 = vpop.f32.mrb[0].mxu0
        %2857 = vdwg.mxu0
        %v2858 = vld [vmem:[%s1155] sm:$0xf]
        %v2859 = vld [vmem:[%s1155 + $0x4] sm:$0xf]
        %v2860 = vld [vmem:[%s1155 + $0x8] sm:$0xf]
        %v2861 = vld [vmem:[%s1155 + $0xc] sm:$0xf]
        %v2862 = vld [vmem:[%s1163] sm:$0x1]
        %v2863 = vld [vmem:[%s1171] sm:$0x1]
        %v2864 = vld [vmem:[%s1345] sm:$0x1]
        %v2865 = vpack.c.bf16 %v2852, %v2852
        %v2866 = vpack.c.bf16 %v2855, %v2855
        %v2868 = vsel %vm1467, %v2789, 0
        %v2871 = vsel %vm1467, %v2852, 0
        %2873 = vmatprep.subr.mxu0 0.0
        %2874 = vmatpush1.xpose.msra.mxu0 %v2871
        %2875 = vmatprep.subr.mxu0 0.0
        %2876 = vmatpush1.xpose.msra.mxu0 0.0
        %2877 = vmatprep.subr.mxu0 0.0
        %2878 = vmatpush1.xpose.msra.mxu0 0.0
        %2879 = vmatprep.subr.mxu0 0.0
        %2880 = vmatpush1.xpose.msra.mxu0 0.0
        %2881 = vmatprep.subr.mxu0 0.0
        %2882 = vmatpush1.xpose.msra.mxu0 0.0
        %2883 = vmatprep.subr.mxu0 0.0
        %2884 = vmatpush1.xpose.msra.mxu0 0.0
        %2885 = vmatprep.subr.mxu0 0.0
        %2886 = vmatpush1.xpose.msra.mxu0 0.0
        %2887 = vmatprep.subr.mxu0 0.0
        %2888 = vmatpush1.xpose.msra.mxu0 0.0
        %2889 = vmatprep.subr.mxu0 0.0
        %2890 = vmatpush1.xpose.msra.mxu0 0.0
        %2891 = vmatprep.subr.mxu0 0.0
        %2892 = vmatpush1.xpose.msra.mxu0 0.0
        %2893 = vmatprep.subr.mxu0 0.0
        %2894 = vmatpush1.xpose.msra.mxu0 0.0
        %2895 = vmatprep.subr.mxu0 0.0
        %2896 = vmatpush1.xpose.msra.mxu0 0.0
        %2897 = vmatprep.subr.mxu0 0.0
        %2898 = vmatpush1.xpose.msra.mxu0 0.0
        %2899 = vmatprep.subr.mxu0 0.0
        %2900 = vmatpush1.xpose.msra.mxu0 0.0
        %2901 = vmatprep.subr.mxu0 0.0
        %2902 = vmatpush1.xpose.msra.mxu0 0.0
        %2903 = vmatprep.subr.mxu0 0.0
        %2904 = vmatpush1.xpose.msra.mxu0 0.0
        %2905 = vmatprep.subr.mxu0 0.0
        %2906 = vmatpush1.xpose.msra.mxu0 0.0
        %2907 = vmatprep.subr.mxu0 0.0
        %2908 = vmatpush1.xpose.msra.mxu0 0.0
        %2909 = vmatprep.subr.mxu0 0.0
        %2910 = vmatpush1.xpose.msra.mxu0 0.0
        %2911 = vmatprep.subr.mxu0 0.0
        %2912 = vmatpush1.xpose.msra.mxu0 0.0
        %2913 = vmatprep.subr.mxu0 0.0
        %2914 = vmatpush1.xpose.msra.mxu0 0.0
        %2915 = vmatprep.subr.mxu0 0.0
        %2916 = vmatpush1.xpose.msra.mxu0 0.0
        %2917 = vmatprep.subr.mxu0 0.0
        %2918 = vmatpush1.xpose.msra.mxu0 0.0
        %2919 = vmatprep.subr.mxu0 0.0
        %2920 = vmatpush1.xpose.msra.mxu0 0.0
        %2921 = vmatprep.subr.mxu0 0.0
        %2922 = vmatpush1.xpose.msra.mxu0 0.0
        %2923 = vmatprep.subr.mxu0 0.0
        %2924 = vmatpush1.xpose.msra.mxu0 0.0
        %2925 = vmatprep.subr.mxu0 0.0
        %2926 = vmatpush1.xpose.msra.mxu0 0.0
        %2927 = vmatprep.subr.mxu0 0.0
        %2928 = vmatpush1.xpose.msra.mxu0 0.0
        %2929 = vmatprep.subr.mxu0 0.0
        %2930 = vmatpush1.xpose.msra.mxu0 0.0
        %2931 = vmatprep.subr.mxu0 0.0
        %2932 = vmatpush1.xpose.msra.mxu0 0.0
        %2933 = vmatprep.subr.mxu0 0.0
        %2934 = vmatpush1.xpose.msra.mxu0 0.0
        %2935 = vmatprep.subr.mxu0 0.0
        %2936 = vmatpush1.xpose.msra.mxu0 0.0
        %2937 = vmatprep.mubr.f32.mxu0 0.0
        %2938 = vmatmul.mubr.f32.gmra.mrb[0].mxu0 %v2868
        %v2939 = vpop.f32.mrb[0].mxu0
        %v2940 = vadd.f32 %v1382, %v2939
        %v2941 = vpop.f32.mrb[0].mxu0
        %2942 = vdwg.mxu0
        %v2944 = vsel %vm1467, %v2790, 0
        %v2947 = vsel %vm1467, %v2855, 0
        %2949 = vmatprep.subr.mxu0 0.0
        %2950 = vmatpush1.xpose.msra.mxu0 %v2947
        %2951 = vmatprep.subr.mxu0 0.0
        %2952 = vmatpush1.xpose.msra.mxu0 0.0
        %2953 = vmatprep.subr.mxu0 0.0
        %2954 = vmatpush1.xpose.msra.mxu0 0.0
        %2955 = vmatprep.subr.mxu0 0.0
        %2956 = vmatpush1.xpose.msra.mxu0 0.0
        %2957 = vmatprep.subr.mxu0 0.0
        %2958 = vmatpush1.xpose.msra.mxu0 0.0
        %2959 = vmatprep.subr.mxu0 0.0
        %2960 = vmatpush1.xpose.msra.mxu0 0.0
        %2961 = vmatprep.subr.mxu0 0.0
        %2962 = vmatpush1.xpose.msra.mxu0 0.0
        %2963 = vmatprep.subr.mxu0 0.0
        %2964 = vmatpush1.xpose.msra.mxu0 0.0
        %2965 = vmatprep.subr.mxu0 0.0
        %2966 = vmatpush1.xpose.msra.mxu0 0.0
        %2967 = vmatprep.subr.mxu0 0.0
        %2968 = vmatpush1.xpose.msra.mxu0 0.0
        %2969 = vmatprep.subr.mxu0 0.0
        %2970 = vmatpush1.xpose.msra.mxu0 0.0
        %2971 = vmatprep.subr.mxu0 0.0
        %2972 = vmatpush1.xpose.msra.mxu0 0.0
        %2973 = vmatprep.subr.mxu0 0.0
        %2974 = vmatpush1.xpose.msra.mxu0 0.0
        %2975 = vmatprep.subr.mxu0 0.0
        %2976 = vmatpush1.xpose.msra.mxu0 0.0
        %2977 = vmatprep.subr.mxu0 0.0
        %2978 = vmatpush1.xpose.msra.mxu0 0.0
        %2979 = vmatprep.subr.mxu0 0.0
        %2980 = vmatpush1.xpose.msra.mxu0 0.0
        %2981 = vmatprep.subr.mxu0 0.0
        %2982 = vmatpush1.xpose.msra.mxu0 0.0
        %2983 = vmatprep.subr.mxu0 0.0
        %2984 = vmatpush1.xpose.msra.mxu0 0.0
        %2985 = vmatprep.subr.mxu0 0.0
        %2986 = vmatpush1.xpose.msra.mxu0 0.0
        %2987 = vmatprep.subr.mxu0 0.0
        %2988 = vmatpush1.xpose.msra.mxu0 0.0
        %2989 = vmatprep.subr.mxu0 0.0
        %2990 = vmatpush1.xpose.msra.mxu0 0.0
        %2991 = vmatprep.subr.mxu0 0.0
        %2992 = vmatpush1.xpose.msra.mxu0 0.0
        %2993 = vmatprep.subr.mxu0 0.0
        %2994 = vmatpush1.xpose.msra.mxu0 0.0
        %2995 = vmatprep.subr.mxu0 0.0
        %2996 = vmatpush1.xpose.msra.mxu0 0.0
        %2997 = vmatprep.subr.mxu0 0.0
        %2998 = vmatpush1.xpose.msra.mxu0 0.0
        %2999 = vmatprep.subr.mxu0 0.0
        %3000 = vmatpush1.xpose.msra.mxu0 0.0
        %3001 = vmatprep.subr.mxu0 0.0
        %3002 = vmatpush1.xpose.msra.mxu0 0.0
        %3003 = vmatprep.subr.mxu0 0.0
        %3004 = vmatpush1.xpose.msra.mxu0 0.0
        %3005 = vmatprep.subr.mxu0 0.0
        %3006 = vmatpush1.xpose.msra.mxu0 0.0
        %3007 = vmatprep.subr.mxu0 0.0
        %3008 = vmatpush1.xpose.msra.mxu0 0.0
        %3009 = vmatprep.subr.mxu0 0.0
        %3010 = vmatpush1.xpose.msra.mxu0 0.0
        %3011 = vmatprep.subr.mxu0 0.0
        %3012 = vmatpush1.xpose.msra.mxu0 0.0
        %3013 = vmatprep.mubr.f32.mxu0 0.0
        %3014 = vmatmul.mubr.f32.gmra.mrb[0].mxu0 %v2944
        %v3015 = vpop.f32.mrb[0].mxu0
        %v3016 = vadd.f32 %v1383, %v3015
        %v3017 = vpop.f32.mrb[0].mxu0
        %3018 = vdwg.mxu0
        %v3019 = vsel %vm1467, %v2940, -inf
        %3020 = vmax.xlane.f32.xlu0 %v3019
        %v3021 = vpop.xlane.xlu0 %3020
        %v3022 = vsel %vm1467, %v3016, -inf
        %3023 = vmax.xlane.f32.xlu0 %v3022
        %v3024 = vpop.xlane.xlu0 %3023
        %v3025 = vsub.f32 %v2940, %v3021
        %v3026 = vsub.f32 %v3016, %v3024
        %v3027 = vmul.f32 %v3025, 1.442695
        %v3028 = vpow.pop %v3027
        %v3029 = vmul.f32 %v3026, 1.442695
        %v3030 = vpow.pop %v3029
        %v3031 = vsel %vm1467, %v3028, 0.0
        %3032 = vadd.xlane.f32.xlu0 %v3031
        %v3033 = vpop.xlane.xlu0 %3032
        %v3034 = vsel %vm1467, %v3030, 0.0
        %3035 = vadd.xlane.f32.xlu0 %v3034
        %v3036 = vpop.xlane.xlu0 %3035
        %v3037 = vrcp.pop %v3033
        %v3038 = vrcp.pop %v3036
        %v3039 = vmul.f32 %v3028, %v3037
        %v3040 = vmul.f32 %v3030, %v3038
        %v3041 = vpack.c.bf16 %v3039, %v3039
        %v3042 = vpack.c.bf16 %v3040, %v3040
        %3044 = vrot.lane.b32.xlu0 %v2865, 96
        %v3045 = vpop.permute.xlu0 %3044
        %v3047 = vsel %vm1467, %v3041, 0
        %v3050 = vsel %vm1651, %v3045, 0
        %3052 = vmatprep.subr.bf16.mxu0 0
        %3053 = vmatpush1.bf16.msra.mxu0 %v3050
        %3054 = vmatprep.subr.bf16.mxu0 0
        %3055 = vmatpush1.bf16.msra.mxu0 0
        %3056 = vmatprep.subr.bf16.mxu0 0
        %3057 = vmatpush1.bf16.msra.mxu0 0
        %3058 = vmatprep.subr.bf16.mxu0 0
        %3059 = vmatpush1.bf16.msra.mxu0 0
        %3060 = vmatprep.subr.bf16.mxu0 0
        %3061 = vmatpush1.bf16.msra.mxu0 0
        %3062 = vmatprep.subr.bf16.mxu0 0
        %3063 = vmatpush1.bf16.msra.mxu0 0
        %3064 = vmatprep.subr.bf16.mxu0 0
        %3065 = vmatpush1.bf16.msra.mxu0 0
        %3066 = vmatprep.subr.bf16.mxu0 0
        %3067 = vmatpush1.bf16.msra.mxu0 0
        %3068 = vmatprep.subr.bf16.mxu0 0
        %3069 = vmatpush1.bf16.msra.mxu0 0
        %3070 = vmatprep.subr.bf16.mxu0 0
        %3071 = vmatpush1.bf16.msra.mxu0 0
        %3072 = vmatprep.subr.bf16.mxu0 0
        %3073 = vmatpush1.bf16.msra.mxu0 0
        %3074 = vmatprep.subr.bf16.mxu0 0
        %3075 = vmatpush1.bf16.msra.mxu0 0
        %3076 = vmatprep.subr.bf16.mxu0 0
        %3077 = vmatpush1.bf16.msra.mxu0 0
        %3078 = vmatprep.subr.bf16.mxu0 0
        %3079 = vmatpush1.bf16.msra.mxu0 0
        %3080 = vmatprep.subr.bf16.mxu0 0
        %3081 = vmatpush1.bf16.msra.mxu0 0
        %3082 = vmatprep.subr.bf16.mxu0 0
        %3083 = vmatpush1.bf16.msra.mxu0 0
        %3084 = vmatprep.mubr.bf16.mxu0 0
        %3085 = vmatmul.mubr.bf16.gmra.mrb[0].mxu0 %v3047
        %v3086 = vpop.f32.mrb[0].mxu0
        %v3087 = vadd.f32 0.0, %v3086
        %v3088 = vpop.f32.mrb[0].mxu0
        %v3089 = vpop.f32.mrb[0].mxu0
        %v3090 = vpop.f32.mrb[0].mxu0
        %3091 = vdwg.mxu0
        %3093 = vrot.lane.b32.xlu0 %v2866, 96
        %v3094 = vpop.permute.xlu0 %3093
        %v3096 = vsel %vm1467, %v3042, 0
        %v3099 = vsel %vm1651, %v3094, 0
        %3101 = vmatprep.subr.bf16.mxu0 0
        %3102 = vmatpush1.bf16.msra.mxu0 %v3099
        %3103 = vmatprep.subr.bf16.mxu0 0
        %3104 = vmatpush1.bf16.msra.mxu0 0
        %3105 = vmatprep.subr.bf16.mxu0 0
        %3106 = vmatpush1.bf16.msra.mxu0 0
        %3107 = vmatprep.subr.bf16.mxu0 0
        %3108 = vmatpush1.bf16.msra.mxu0 0
        %3109 = vmatprep.subr.bf16.mxu0 0
        %3110 = vmatpush1.bf16.msra.mxu0 0
        %3111 = vmatprep.subr.bf16.mxu0 0
        %3112 = vmatpush1.bf16.msra.mxu0 0
        %3113 = vmatprep.subr.bf16.mxu0 0
        %3114 = vmatpush1.bf16.msra.mxu0 0
        %3115 = vmatprep.subr.bf16.mxu0 0
        %3116 = vmatpush1.bf16.msra.mxu0 0
        %3117 = vmatprep.subr.bf16.mxu0 0
        %3118 = vmatpush1.bf16.msra.mxu0 0
        %3119 = vmatprep.subr.bf16.mxu0 0
        %3120 = vmatpush1.bf16.msra.mxu0 0
        %3121 = vmatprep.subr.bf16.mxu0 0
        %3122 = vmatpush1.bf16.msra.mxu0 0
        %3123 = vmatprep.subr.bf16.mxu0 0
        %3124 = vmatpush1.bf16.msra.mxu0 0
        %3125 = vmatprep.subr.bf16.mxu0 0
        %3126 = vmatpush1.bf16.msra.mxu0 0
        %3127 = vmatprep.subr.bf16.mxu0 0
        %3128 = vmatpush1.bf16.msra.mxu0 0
        %3129 = vmatprep.subr.bf16.mxu0 0
        %3130 = vmatpush1.bf16.msra.mxu0 0
        %3131 = vmatprep.subr.bf16.mxu0 0
        %3132 = vmatpush1.bf16.msra.mxu0 0
        %3133 = vmatprep.mubr.bf16.mxu0 0
        %3134 = vmatmul.mubr.bf16.gmra.mrb[0].mxu0 %v3096
        %v3135 = vpop.f32.mrb[0].mxu0
        %v3136 = vadd.f32 0.0, %v3135
        %v3137 = vpop.f32.mrb[0].mxu0
        %v3138 = vpop.f32.mrb[0].mxu0
        %v3139 = vpop.f32.mrb[0].mxu0
        %3140 = vdwg.mxu0
        %3141 = vst.msk [vmem:[#allocation3] sm:$0xff] %vm1467, %v3087
        %3142 = vst.msk [vmem:[#allocation3 + $0x8] sm:$0xff] %vm1467, %v3136
        %3143 = vrot.lane.b32.xlu0 %v2789, 120
        %v3144 = vpop.permute.xlu0 %3143
        %3145 = vrot.lane.b32.xlu0 %v2852, 120
        %v3146 = vpop.permute.xlu0 %3145
        %v3147 = vsel %vm1467, %v3144, 0
        %v3149 = vsel %vm1467, %v3146, 0
        %3151 = vmatprep.subr.mxu0 0.0
        %3152 = vmatpush1.xpose.msra.mxu0 %v3149
        %3153 = vmatprep.subr.mxu0 0.0
        %3154 = vmatpush1.xpose.msra.mxu0 0.0
        %3155 = vmatprep.subr.mxu0 0.0
        %3156 = vmatpush1.xpose.msra.mxu0 0.0
        %3157 = vmatprep.subr.mxu0 0.0
        %3158 = vmatpush1.xpose.msra.mxu0 0.0
        %3159 = vmatprep.subr.mxu0 0.0
        %3160 = vmatpush1.xpose.msra.mxu0 0.0
        %3161 = vmatprep.subr.mxu0 0.0
        %3162 = vmatpush1.xpose.msra.mxu0 0.0
        %3163 = vmatprep.subr.mxu0 0.0
        %3164 = vmatpush1.xpose.msra.mxu0 0.0
        %3165 = vmatprep.subr.mxu0 0.0
        %3166 = vmatpush1.xpose.msra.mxu0 0.0
        %3167 = vmatprep.subr.mxu0 0.0
        %3168 = vmatpush1.xpose.msra.mxu0 0.0
        %3169 = vmatprep.subr.mxu0 0.0
        %3170 = vmatpush1.xpose.msra.mxu0 0.0
        %3171 = vmatprep.subr.mxu0 0.0
        %3172 = vmatpush1.xpose.msra.mxu0 0.0
        %3173 = vmatprep.subr.mxu0 0.0
        %3174 = vmatpush1.xpose.msra.mxu0 0.0
        %3175 = vmatprep.subr.mxu0 0.0
        %3176 = vmatpush1.xpose.msra.mxu0 0.0
        %3177 = vmatprep.subr.mxu0 0.0
        %3178 = vmatpush1.xpose.msra.mxu0 0.0
        %3179 = vmatprep.subr.mxu0 0.0
        %3180 = vmatpush1.xpose.msra.mxu0 0.0
        %3181 = vmatprep.subr.mxu0 0.0
        %3182 = vmatpush1.xpose.msra.mxu0 0.0
        %3183 = vmatprep.subr.mxu0 0.0
        %3184 = vmatpush1.xpose.msra.mxu0 0.0
        %3185 = vmatprep.subr.mxu0 0.0
        %3186 = vmatpush1.xpose.msra.mxu0 0.0
        %3187 = vmatprep.subr.mxu0 0.0
        %3188 = vmatpush1.xpose.msra.mxu0 0.0
        %3189 = vmatprep.subr.mxu0 0.0
        %3190 = vmatpush1.xpose.msra.mxu0 0.0
        %3191 = vmatprep.subr.mxu0 0.0
        %3192 = vmatpush1.xpose.msra.mxu0 0.0
        %3193 = vmatprep.subr.mxu0 0.0
        %3194 = vmatpush1.xpose.msra.mxu0 0.0
        %3195 = vmatprep.subr.mxu0 0.0
        %3196 = vmatpush1.xpose.msra.mxu0 0.0
        %3197 = vmatprep.subr.mxu0 0.0
        %3198 = vmatpush1.xpose.msra.mxu0 0.0
        %3199 = vmatprep.subr.mxu0 0.0
        %3200 = vmatpush1.xpose.msra.mxu0 0.0
        %3201 = vmatprep.subr.mxu0 0.0
        %3202 = vmatpush1.xpose.msra.mxu0 0.0
        %3203 = vmatprep.subr.mxu0 0.0
        %3204 = vmatpush1.xpose.msra.mxu0 0.0
        %3205 = vmatprep.subr.mxu0 0.0
        %3206 = vmatpush1.xpose.msra.mxu0 0.0
        %3207 = vmatprep.subr.mxu0 0.0
        %3208 = vmatpush1.xpose.msra.mxu0 0.0
        %3209 = vmatprep.subr.mxu0 0.0
        %3210 = vmatpush1.xpose.msra.mxu0 0.0
        %3211 = vmatprep.subr.mxu0 0.0
        %3212 = vmatpush1.xpose.msra.mxu0 0.0
        %3213 = vmatprep.subr.mxu0 0.0
        %3214 = vmatpush1.xpose.msra.mxu0 0.0
        %3215 = vmatprep.mubr.f32.mxu0 0.0
        %3216 = vmatmul.mubr.f32.gmra.mrb[0].mxu0 %v3147
        %v3217 = vpop.f32.mrb[0].mxu0
        %v3218 = vadd.f32 %v1382, %v3217
        %v3219 = vpop.f32.mrb[0].mxu0
        %3220 = vdwg.mxu0
        %3221 = vrot.lane.b32.xlu0 %v2790, 120
        %v3222 = vpop.permute.xlu0 %3221
        %3223 = vrot.lane.b32.xlu0 %v2855, 120
        %v3224 = vpop.permute.xlu0 %3223
        %v3225 = vsel %vm1467, %v3222, 0
        %v3227 = vsel %vm1467, %v3224, 0
        %3229 = vmatprep.subr.mxu0 0.0
        %3230 = vmatpush1.xpose.msra.mxu0 %v3227
        %3231 = vmatprep.subr.mxu0 0.0
        %3232 = vmatpush1.xpose.msra.mxu0 0.0
        %3233 = vmatprep.subr.mxu0 0.0
        %3234 = vmatpush1.xpose.msra.mxu0 0.0
        %3235 = vmatprep.subr.mxu0 0.0
        %3236 = vmatpush1.xpose.msra.mxu0 0.0
        %3237 = vmatprep.subr.mxu0 0.0
        %3238 = vmatpush1.xpose.msra.mxu0 0.0
        %3239 = vmatprep.subr.mxu0 0.0
        %3240 = vmatpush1.xpose.msra.mxu0 0.0
        %3241 = vmatprep.subr.mxu0 0.0
        %3242 = vmatpush1.xpose.msra.mxu0 0.0
        %3243 = vmatprep.subr.mxu0 0.0
        %3244 = vmatpush1.xpose.msra.mxu0 0.0
        %3245 = vmatprep.subr.mxu0 0.0
        %3246 = vmatpush1.xpose.msra.mxu0 0.0
        %3247 = vmatprep.subr.mxu0 0.0
        %3248 = vmatpush1.xpose.msra.mxu0 0.0
        %3249 = vmatprep.subr.mxu0 0.0
        %3250 = vmatpush1.xpose.msra.mxu0 0.0
        %3251 = vmatprep.subr.mxu0 0.0
        %3252 = vmatpush1.xpose.msra.mxu0 0.0
        %3253 = vmatprep.subr.mxu0 0.0
        %3254 = vmatpush1.xpose.msra.mxu0 0.0
        %3255 = vmatprep.subr.mxu0 0.0
        %3256 = vmatpush1.xpose.msra.mxu0 0.0
        %3257 = vmatprep.subr.mxu0 0.0
        %3258 = vmatpush1.xpose.msra.mxu0 0.0
        %3259 = vmatprep.subr.mxu0 0.0
        %3260 = vmatpush1.xpose.msra.mxu0 0.0
        %3261 = vmatprep.subr.mxu0 0.0
        %3262 = vmatpush1.xpose.msra.mxu0 0.0
        %3263 = vmatprep.subr.mxu0 0.0
        %3264 = vmatpush1.xpose.msra.mxu0 0.0
        %3265 = vmatprep.subr.mxu0 0.0
        %3266 = vmatpush1.xpose.msra.mxu0 0.0
        %3267 = vmatprep.subr.mxu0 0.0
        %3268 = vmatpush1.xpose.msra.mxu0 0.0
        %3269 = vmatprep.subr.mxu0 0.0
        %3270 = vmatpush1.xpose.msra.mxu0 0.0
        %3271 = vmatprep.subr.mxu0 0.0
        %3272 = vmatpush1.xpose.msra.mxu0 0.0
        %3273 = vmatprep.subr.mxu0 0.0
        %3274 = vmatpush1.xpose.msra.mxu0 0.0
        %3275 = vmatprep.subr.mxu0 0.0
        %3276 = vmatpush1.xpose.msra.mxu0 0.0
        %3277 = vmatprep.subr.mxu0 0.0
        %3278 = vmatpush1.xpose.msra.mxu0 0.0
        %3279 = vmatprep.subr.mxu0 0.0
        %3280 = vmatpush1.xpose.msra.mxu0 0.0
        %3281 = vmatprep.subr.mxu0 0.0
        %3282 = vmatpush1.xpose.msra.mxu0 0.0
        %3283 = vmatprep.subr.mxu0 0.0
        %3284 = vmatpush1.xpose.msra.mxu0 0.0
        %3285 = vmatprep.subr.mxu0 0.0
        %3286 = vmatpush1.xpose.msra.mxu0 0.0
        %3287 = vmatprep.subr.mxu0 0.0
        %3288 = vmatpush1.xpose.msra.mxu0 0.0
        %3289 = vmatprep.subr.mxu0 0.0
        %3290 = vmatpush1.xpose.msra.mxu0 0.0
        %3291 = vmatprep.subr.mxu0 0.0
        %3292 = vmatpush1.xpose.msra.mxu0 0.0
        %3293 = vmatprep.mubr.f32.mxu0 0.0
        %3294 = vmatmul.mubr.f32.gmra.mrb[0].mxu0 %v3225
        %v3295 = vpop.f32.mrb[0].mxu0
        %v3296 = vadd.f32 %v1383, %v3295
        %v3297 = vpop.f32.mrb[0].mxu0
        %3298 = vdwg.mxu0
        %v3299 = vsel %vm1467, %v3218, -inf
        %3300 = vmax.xlane.f32.xlu0 %v3299
        %v3301 = vpop.xlane.xlu0 %3300
        %v3302 = vsel %vm1467, %v3296, -inf
        %3303 = vmax.xlane.f32.xlu0 %v3302
        %v3304 = vpop.xlane.xlu0 %3303
        %v3305 = vsub.f32 %v3218, %v3301
        %v3306 = vsub.f32 %v3296, %v3304
        %v3307 = vmul.f32 %v3305, 1.442695
        %v3308 = vpow.pop %v3307
        %v3309 = vmul.f32 %v3306, 1.442695
        %v3310 = vpow.pop %v3309
        %v3311 = vsel %vm1467, %v3308, 0.0
        %3312 = vadd.xlane.f32.xlu0 %v3311
        %v3313 = vpop.xlane.xlu0 %3312
        %v3314 = vsel %vm1467, %v3310, 0.0
        %3315 = vadd.xlane.f32.xlu0 %v3314
        %v3316 = vpop.xlane.xlu0 %3315
        %v3317 = vrcp.pop %v3313
        %v3318 = vrcp.pop %v3316
        %v3319 = vmul.f32 %v3308, %v3317
        %v3320 = vmul.f32 %v3310, %v3318
        %v3321 = vpack.c.bf16 %v3319, %v3319
        %v3322 = vpack.c.bf16 %v3320, %v3320
        %3323 = vrot.lane.b32.xlu0 %v2865, 88
        %v3324 = vpop.permute.xlu0 %3323
        %v3326 = vsel %vm1467, %v3321, 0
        %v3329 = vsel %vm1651, %v3324, 0
        %3331 = vmatprep.subr.bf16.mxu0 0
        %3332 = vmatpush1.bf16.msra.mxu0 %v3329
        %3333 = vmatprep.subr.bf16.mxu0 0
        %3334 = vmatpush1.bf16.msra.mxu0 0
        %3335 = vmatprep.subr.bf16.mxu0 0
        %3336 = vmatpush1.bf16.msra.mxu0 0
        %3337 = vmatprep.subr.bf16.mxu0 0
        %3338 = vmatpush1.bf16.msra.mxu0 0
        %3339 = vmatprep.subr.bf16.mxu0 0
        %3340 = vmatpush1.bf16.msra.mxu0 0
        %3341 = vmatprep.subr.bf16.mxu0 0
        %3342 = vmatpush1.bf16.msra.mxu0 0
        %3343 = vmatprep.subr.bf16.mxu0 0
        %3344 = vmatpush1.bf16.msra.mxu0 0
        %3345 = vmatprep.subr.bf16.mxu0 0
        %3346 = vmatpush1.bf16.msra.mxu0 0
        %3347 = vmatprep.subr.bf16.mxu0 0
        %3348 = vmatpush1.bf16.msra.mxu0 0
        %3349 = vmatprep.subr.bf16.mxu0 0
        %3350 = vmatpush1.bf16.msra.mxu0 0
        %3351 = vmatprep.subr.bf16.mxu0 0
        %3352 = vmatpush1.bf16.msra.mxu0 0
        %3353 = vmatprep.subr.bf16.mxu0 0
        %3354 = vmatpush1.bf16.msra.mxu0 0
        %3355 = vmatprep.subr.bf16.mxu0 0
        %3356 = vmatpush1.bf16.msra.mxu0 0
        %3357 = vmatprep.subr.bf16.mxu0 0
        %3358 = vmatpush1.bf16.msra.mxu0 0
        %3359 = vmatprep.subr.bf16.mxu0 0
        %3360 = vmatpush1.bf16.msra.mxu0 0
        %3361 = vmatprep.subr.bf16.mxu0 0
        %3362 = vmatpush1.bf16.msra.mxu0 0
        %3363 = vmatprep.mubr.bf16.mxu0 0
        %3364 = vmatmul.mubr.bf16.gmra.mrb[0].mxu0 %v3326
        %v3365 = vpop.f32.mrb[0].mxu0
        %v3366 = vadd.f32 0.0, %v3365
        %v3367 = vpop.f32.mrb[0].mxu0
        %v3368 = vpop.f32.mrb[0].mxu0
        %v3369 = vpop.f32.mrb[0].mxu0
        %3370 = vdwg.mxu0
        %3371 = vrot.lane.b32.xlu0 %v2866, 88
        %v3372 = vpop.permute.xlu0 %3371
        %v3374 = vsel %vm1467, %v3322, 0
        %v3377 = vsel %vm1651, %v3372, 0
        %3379 = vmatprep.subr.bf16.mxu0 0
        %3380 = vmatpush1.bf16.msra.mxu0 %v3377
        %3381 = vmatprep.subr.bf16.mxu0 0
        %3382 = vmatpush1.bf16.msra.mxu0 0
        %3383 = vmatprep.subr.bf16.mxu0 0
        %3384 = vmatpush1.bf16.msra.mxu0 0
        %3385 = vmatprep.subr.bf16.mxu0 0
        %3386 = vmatpush1.bf16.msra.mxu0 0
        %3387 = vmatprep.subr.bf16.mxu0 0
        %3388 = vmatpush1.bf16.msra.mxu0 0
        %3389 = vmatprep.subr.bf16.mxu0 0
        %3390 = vmatpush1.bf16.msra.mxu0 0
        %3391 = vmatprep.subr.bf16.mxu0 0
        %3392 = vmatpush1.bf16.msra.mxu0 0
        %3393 = vmatprep.subr.bf16.mxu0 0
        %3394 = vmatpush1.bf16.msra.mxu0 0
        %3395 = vmatprep.subr.bf16.mxu0 0
        %3396 = vmatpush1.bf16.msra.mxu0 0
        %3397 = vmatprep.subr.bf16.mxu0 0
        %3398 = vmatpush1.bf16.msra.mxu0 0
        %3399 = vmatprep.subr.bf16.mxu0 0
        %3400 = vmatpush1.bf16.msra.mxu0 0
        %3401 = vmatprep.subr.bf16.mxu0 0
        %3402 = vmatpush1.bf16.msra.mxu0 0
        %3403 = vmatprep.subr.bf16.mxu0 0
        %3404 = vmatpush1.bf16.msra.mxu0 0
        %3405 = vmatprep.subr.bf16.mxu0 0
        %3406 = vmatpush1.bf16.msra.mxu0 0
        %3407 = vmatprep.subr.bf16.mxu0 0
        %3408 = vmatpush1.bf16.msra.mxu0 0
        %3409 = vmatprep.subr.bf16.mxu0 0
        %3410 = vmatpush1.bf16.msra.mxu0 0
        %3411 = vmatprep.mubr.bf16.mxu0 0
        %3412 = vmatmul.mubr.bf16.gmra.mrb[0].mxu0 %v3374
        %v3413 = vpop.f32.mrb[0].mxu0
        %v3414 = vadd.f32 0.0, %v3413
        %v3415 = vpop.f32.mrb[0].mxu0
        %v3416 = vpop.f32.mrb[0].mxu0
        %v3417 = vpop.f32.mrb[0].mxu0
        %3418 = vdwg.mxu0
        %3421 = vrot.lane.b32.xlu0 %v3366, 8
        %v3422 = vpop.permute.xlu0 %3421
        %3423 = vrot.lane.b32.xlu0 %v3414, 8
        %v3424 = vpop.permute.xlu0 %3423
        %3427 = vst.msk [vmem:[#allocation3] sm:$0xff] %vm2030, %v3422
        %3428 = vst.msk [vmem:[#allocation3 + $0x8] sm:$0xff] %vm2030, %v3424
        %3429 = vrot.lane.b32.xlu0 %v2789, 112
        %v3430 = vpop.permute.xlu0 %3429
        %3431 = vrot.lane.b32.xlu0 %v2852, 112
        %v3432 = vpop.permute.xlu0 %3431
        %v3433 = vsel %vm1467, %v3430, 0
        %v3435 = vsel %vm1467, %v3432, 0
        %3437 = vmatprep.subr.mxu0 0.0
        %3438 = vmatpush1.xpose.msra.mxu0 %v3435
        %3439 = vmatprep.subr.mxu0 0.0
        %3440 = vmatpush1.xpose.msra.mxu0 0.0
        %3441 = vmatprep.subr.mxu0 0.0
        %3442 = vmatpush1.xpose.msra.mxu0 0.0
        %3443 = vmatprep.subr.mxu0 0.0
        %3444 = vmatpush1.xpose.msra.mxu0 0.0
        %3445 = vmatprep.subr.mxu0 0.0
        %3446 = vmatpush1.xpose.msra.mxu0 0.0
        %3447 = vmatprep.subr.mxu0 0.0
        %3448 = vmatpush1.xpose.msra.mxu0 0.0
        %3449 = vmatprep.subr.mxu0 0.0
        %3450 = vmatpush1.xpose.msra.mxu0 0.0
        %3451 = vmatprep.subr.mxu0 0.0
        %3452 = vmatpush1.xpose.msra.mxu0 0.0
        %3453 = vmatprep.subr.mxu0 0.0
        %3454 = vmatpush1.xpose.msra.mxu0 0.0
        %3455 = vmatprep.subr.mxu0 0.0
        %3456 = vmatpush1.xpose.msra.mxu0 0.0
        %3457 = vmatprep.subr.mxu0 0.0
        %3458 = vmatpush1.xpose.msra.mxu0 0.0
        %3459 = vmatprep.subr.mxu0 0.0
        %3460 = vmatpush1.xpose.msra.mxu0 0.0
        %3461 = vmatprep.subr.mxu0 0.0
        %3462 = vmatpush1.xpose.msra.mxu0 0.0
        %3463 = vmatprep.subr.mxu0 0.0
        %3464 = vmatpush1.xpose.msra.mxu0 0.0
        %3465 = vmatprep.subr.mxu0 0.0
        %3466 = vmatpush1.xpose.msra.mxu0 0.0
        %3467 = vmatprep.subr.mxu0 0.0
        %3468 = vmatpush1.xpose.msra.mxu0 0.0
        %3469 = vmatprep.subr.mxu0 0.0
        %3470 = vmatpush1.xpose.msra.mxu0 0.0
        %3471 = vmatprep.subr.mxu0 0.0
        %3472 = vmatpush1.xpose.msra.mxu0 0.0
        %3473 = vmatprep.subr.mxu0 0.0
        %3474 = vmatpush1.xpose.msra.mxu0 0.0
        %3475 = vmatprep.subr.mxu0 0.0
        %3476 = vmatpush1.xpose.msra.mxu0 0.0
        %3477 = vmatprep.subr.mxu0 0.0
        %3478 = vmatpush1.xpose.msra.mxu0 0.0
        %3479 = vmatprep.subr.mxu0 0.0
        %3480 = vmatpush1.xpose.msra.mxu0 0.0
        %3481 = vmatprep.subr.mxu0 0.0
        %3482 = vmatpush1.xpose.msra.mxu0 0.0
        %3483 = vmatprep.subr.mxu0 0.0
        %3484 = vmatpush1.xpose.msra.mxu0 0.0
        %3485 = vmatprep.subr.mxu0 0.0
        %3486 = vmatpush1.xpose.msra.mxu0 0.0
        %3487 = vmatprep.subr.mxu0 0.0
        %3488 = vmatpush1.xpose.msra.mxu0 0.0
        %3489 = vmatprep.subr.mxu0 0.0
        %3490 = vmatpush1.xpose.msra.mxu0 0.0
        %3491 = vmatprep.subr.mxu0 0.0
        %3492 = vmatpush1.xpose.msra.mxu0 0.0
        %3493 = vmatprep.subr.mxu0 0.0
        %3494 = vmatpush1.xpose.msra.mxu0 0.0
        %3495 = vmatprep.subr.mxu0 0.0
        %3496 = vmatpush1.xpose.msra.mxu0 0.0
        %3497 = vmatprep.subr.mxu0 0.0
        %3498 = vmatpush1.xpose.msra.mxu0 0.0
        %3499 = vmatprep.subr.mxu0 0.0
        %3500 = vmatpush1.xpose.msra.mxu0 0.0
        %3501 = vmatprep.mubr.f32.mxu0 0.0
        %3502 = vmatmul.mubr.f32.gmra.mrb[0].mxu0 %v3433
        %v3503 = vpop.f32.mrb[0].mxu0
        %v3504 = vadd.f32 %v1382, %v3503
        %v3505 = vpop.f32.mrb[0].mxu0
        %3506 = vdwg.mxu0
        %3507 = vrot.lane.b32.xlu0 %v2790, 112
        %v3508 = vpop.permute.xlu0 %3507
        %3509 = vrot.lane.b32.xlu0 %v2855, 112
        %v3510 = vpop.permute.xlu0 %3509
        %v3511 = vsel %vm1467, %v3508, 0
        %v3513 = vsel %vm1467, %v3510, 0
        %3515 = vmatprep.subr.mxu0 0.0
        %3516 = vmatpush1.xpose.msra.mxu0 %v3513
        %3517 = vmatprep.subr.mxu0 0.0
        %3518 = vmatpush1.xpose.msra.mxu0 0.0
        %3519 = vmatprep.subr.mxu0 0.0
        %3520 = vmatpush1.xpose.msra.mxu0 0.0
        %3521 = vmatprep.subr.mxu0 0.0
        %3522 = vmatpush1.xpose.msra.mxu0 0.0
        %3523 = vmatprep.subr.mxu0 0.0
        %3524 = vmatpush1.xpose.msra.mxu0 0.0
        %3525 = vmatprep.subr.mxu0 0.0
        %3526 = vmatpush1.xpose.msra.mxu0 0.0
        %3527 = vmatprep.subr.mxu0 0.0
        %3528 = vmatpush1.xpose.msra.mxu0 0.0
        %3529 = vmatprep.subr.mxu0 0.0
        %3530 = vmatpush1.xpose.msra.mxu0 0.0
        %3531 = vmatprep.subr.mxu0 0.0
        %3532 = vmatpush1.xpose.msra.mxu0 0.0
        %3533 = vmatprep.subr.mxu0 0.0
        %3534 = vmatpush1.xpose.msra.mxu0 0.0
        %3535 = vmatprep.subr.mxu0 0.0
        %3536 = vmatpush1.xpose.msra.mxu0 0.0
        %3537 = vmatprep.subr.mxu0 0.0
        %3538 = vmatpush1.xpose.msra.mxu0 0.0
        %3539 = vmatprep.subr.mxu0 0.0
        %3540 = vmatpush1.xpose.msra.mxu0 0.0
        %3541 = vmatprep.subr.mxu0 0.0
        %3542 = vmatpush1.xpose.msra.mxu0 0.0
        %3543 = vmatprep.subr.mxu0 0.0
        %3544 = vmatpush1.xpose.msra.mxu0 0.0
        %3545 = vmatprep.subr.mxu0 0.0
        %3546 = vmatpush1.xpose.msra.mxu0 0.0
        %3547 = vmatprep.subr.mxu0 0.0
        %3548 = vmatpush1.xpose.msra.mxu0 0.0
        %3549 = vmatprep.subr.mxu0 0.0
        %3550 = vmatpush1.xpose.msra.mxu0 0.0
        %3551 = vmatprep.subr.mxu0 0.0
        %3552 = vmatpush1.xpose.msra.mxu0 0.0
        %3553 = vmatprep.subr.mxu0 0.0
        %3554 = vmatpush1.xpose.msra.mxu0 0.0
        %3555 = vmatprep.subr.mxu0 0.0
        %3556 = vmatpush1.xpose.msra.mxu0 0.0
        %3557 = vmatprep.subr.mxu0 0.0
        %3558 = vmatpush1.xpose.msra.mxu0 0.0
        %3559 = vmatprep.subr.mxu0 0.0
        %3560 = vmatpush1.xpose.msra.mxu0 0.0
        %3561 = vmatprep.subr.mxu0 0.0
        %3562 = vmatpush1.xpose.msra.mxu0 0.0
        %3563 = vmatprep.subr.mxu0 0.0
        %3564 = vmatpush1.xpose.msra.mxu0 0.0
        %3565 = vmatprep.subr.mxu0 0.0
        %3566 = vmatpush1.xpose.msra.mxu0 0.0
        %3567 = vmatprep.subr.mxu0 0.0
        %3568 = vmatpush1.xpose.msra.mxu0 0.0
        %3569 = vmatprep.subr.mxu0 0.0
        %3570 = vmatpush1.xpose.msra.mxu0 0.0
        %3571 = vmatprep.subr.mxu0 0.0
        %3572 = vmatpush1.xpose.msra.mxu0 0.0
        %3573 = vmatprep.subr.mxu0 0.0
        %3574 = vmatpush1.xpose.msra.mxu0 0.0
        %3575 = vmatprep.subr.mxu0 0.0
        %3576 = vmatpush1.xpose.msra.mxu0 0.0
        %3577 = vmatprep.subr.mxu0 0.0
        %3578 = vmatpush1.xpose.msra.mxu0 0.0
        %3579 = vmatprep.mubr.f32.mxu0 0.0
        %3580 = vmatmul.mubr.f32.gmra.mrb[0].mxu0 %v3511
        %v3581 = vpop.f32.mrb[0].mxu0
        %v3582 = vadd.f32 %v1383, %v3581
        %v3583 = vpop.f32.mrb[0].mxu0
        %3584 = vdwg.mxu0
        %v3585 = vsel %vm1467, %v3504, -inf
        %3586 = vmax.xlane.f32.xlu0 %v3585
        %v3587 = vpop.xlane.xlu0 %3586
        %v3588 = vsel %vm1467, %v3582, -inf
        %3589 = vmax.xlane.f32.xlu0 %v3588
        %v3590 = vpop.xlane.xlu0 %3589
        %v3591 = vsub.f32 %v3504, %v3587
        %v3592 = vsub.f32 %v3582, %v3590
        %v3593 = vmul.f32 %v3591, 1.442695
        %v3594 = vpow.pop %v3593
        %v3595 = vmul.f32 %v3592, 1.442695
        %v3596 = vpow.pop %v3595
        %v3597 = vsel %vm1467, %v3594, 0.0
        %3598 = vadd.xlane.f32.xlu0 %v3597
        %v3599 = vpop.xlane.xlu0 %3598
        %v3600 = vsel %vm1467, %v3596, 0.0
        %3601 = vadd.xlane.f32.xlu0 %v3600
        %v3602 = vpop.xlane.xlu0 %3601
        %v3603 = vrcp.pop %v3599
        %v3604 = vrcp.pop %v3602
        %v3605 = vmul.f32 %v3594, %v3603
        %v3606 = vmul.f32 %v3596, %v3604
        %v3607 = vpack.c.bf16 %v3605, %v3605
        %v3608 = vpack.c.bf16 %v3606, %v3606
        %3609 = vrot.lane.b32.xlu0 %v2865, 80
        %v3610 = vpop.permute.xlu0 %3609
        %v3612 = vsel %vm1467, %v3607, 0
        %v3615 = vsel %vm1651, %v3610, 0
        %3617 = vmatprep.subr.bf16.mxu0 0
        %3618 = vmatpush1.bf16.msra.mxu0 %v3615
        %3619 = vmatprep.subr.bf16.mxu0 0
        %3620 = vmatpush1.bf16.msra.mxu0 0
        %3621 = vmatprep.subr.bf16.mxu0 0
        %3622 = vmatpush1.bf16.msra.mxu0 0
        %3623 = vmatprep.subr.bf16.mxu0 0
        %3624 = vmatpush1.bf16.msra.mxu0 0
        %3625 = vmatprep.subr.bf16.mxu0 0
        %3626 = vmatpush1.bf16.msra.mxu0 0
        %3627 = vmatprep.subr.bf16.mxu0 0
        %3628 = vmatpush1.bf16.msra.mxu0 0
        %3629 = vmatprep.subr.bf16.mxu0 0
        %3630 = vmatpush1.bf16.msra.mxu0 0
        %3631 = vmatprep.subr.bf16.mxu0 0
        %3632 = vmatpush1.bf16.msra.mxu0 0
        %3633 = vmatprep.subr.bf16.mxu0 0
        %3634 = vmatpush1.bf16.msra.mxu0 0
        %3635 = vmatprep.subr.bf16.mxu0 0
        %3636 = vmatpush1.bf16.msra.mxu0 0
        %3637 = vmatprep.subr.bf16.mxu0 0
        %3638 = vmatpush1.bf16.msra.mxu0 0
        %3639 = vmatprep.subr.bf16.mxu0 0
        %3640 = vmatpush1.bf16.msra.mxu0 0
        %3641 = vmatprep.subr.bf16.mxu0 0
        %3642 = vmatpush1.bf16.msra.mxu0 0
        %3643 = vmatprep.subr.bf16.mxu0 0
        %3644 = vmatpush1.bf16.msra.mxu0 0
        %3645 = vmatprep.subr.bf16.mxu0 0
        %3646 = vmatpush1.bf16.msra.mxu0 0
        %3647 = vmatprep.subr.bf16.mxu0 0
        %3648 = vmatpush1.bf16.msra.mxu0 0
        %3649 = vmatprep.mubr.bf16.mxu0 0
        %3650 = vmatmul.mubr.bf16.gmra.mrb[0].mxu0 %v3612
        %v3651 = vpop.f32.mrb[0].mxu0
        %v3652 = vadd.f32 0.0, %v3651
        %v3653 = vpop.f32.mrb[0].mxu0
        %v3654 = vpop.f32.mrb[0].mxu0
        %v3655 = vpop.f32.mrb[0].mxu0
        %3656 = vdwg.mxu0
        %3657 = vrot.lane.b32.xlu0 %v2866, 80
        %v3658 = vpop.permute.xlu0 %3657
        %v3660 = vsel %vm1467, %v3608, 0
        %v3663 = vsel %vm1651, %v3658, 0
        %3665 = vmatprep.subr.bf16.mxu0 0
        %3666 = vmatpush1.bf16.msra.mxu0 %v3663
        %3667 = vmatprep.subr.bf16.mxu0 0
        %3668 = vmatpush1.bf16.msra.mxu0 0
        %3669 = vmatprep.subr.bf16.mxu0 0
        %3670 = vmatpush1.bf16.msra.mxu0 0
        %3671 = vmatprep.subr.bf16.mxu0 0
        %3672 = vmatpush1.bf16.msra.mxu0 0
        %3673 = vmatprep.subr.bf16.mxu0 0
        %3674 = vmatpush1.bf16.msra.mxu0 0
        %3675 = vmatprep.subr.bf16.mxu0 0
        %3676 = vmatpush1.bf16.msra.mxu0 0
        %3677 = vmatprep.subr.bf16.mxu0 0
        %3678 = vmatpush1.bf16.msra.mxu0 0
        %3679 = vmatprep.subr.bf16.mxu0 0
        %3680 = vmatpush1.bf16.msra.mxu0 0
        %3681 = vmatprep.subr.bf16.mxu0 0
        %3682 = vmatpush1.bf16.msra.mxu0 0
        %3683 = vmatprep.subr.bf16.mxu0 0
        %3684 = vmatpush1.bf16.msra.mxu0 0
        %3685 = vmatprep.subr.bf16.mxu0 0
        %3686 = vmatpush1.bf16.msra.mxu0 0
        %3687 = vmatprep.subr.bf16.mxu0 0
        %3688 = vmatpush1.bf16.msra.mxu0 0
        %3689 = vmatprep.subr.bf16.mxu0 0
        %3690 = vmatpush1.bf16.msra.mxu0 0
        %3691 = vmatprep.subr.bf16.mxu0 0
        %3692 = vmatpush1.bf16.msra.mxu0 0
        %3693 = vmatprep.subr.bf16.mxu0 0
        %3694 = vmatpush1.bf16.msra.mxu0 0
        %3695 = vmatprep.subr.bf16.mxu0 0
        %3696 = vmatpush1.bf16.msra.mxu0 0
        %3697 = vmatprep.mubr.bf16.mxu0 0
        %3698 = vmatmul.mubr.bf16.gmra.mrb[0].mxu0 %v3660
        %v3699 = vpop.f32.mrb[0].mxu0
        %v3700 = vadd.f32 0.0, %v3699
        %v3701 = vpop.f32.mrb[0].mxu0
        %v3702 = vpop.f32.mrb[0].mxu0
        %v3703 = vpop.f32.mrb[0].mxu0
        %3704 = vdwg.mxu0
        %3707 = vrot.lane.b32.xlu0 %v3652, 16
        %v3708 = vpop.permute.xlu0 %3707
        %3709 = vrot.lane.b32.xlu0 %v3700, 16
        %v3710 = vpop.permute.xlu0 %3709
        %3713 = vst.msk [vmem:[#allocation3] sm:$0xff] %vm2317, %v3708
        %3714 = vst.msk [vmem:[#allocation3 + $0x8] sm:$0xff] %vm2317, %v3710
        %3715 = vrot.lane.b32.xlu0 %v2789, 104
        %v3716 = vpop.permute.xlu0 %3715
        %3717 = vrot.lane.b32.xlu0 %v2852, 104
        %v3718 = vpop.permute.xlu0 %3717
        %v3719 = vsel %vm1467, %v3716, 0
        %v3721 = vsel %vm1467, %v3718, 0
        %3723 = vmatprep.subr.mxu0 0.0
        %3724 = vmatpush1.xpose.msra.mxu0 %v3721
        %3725 = vmatprep.subr.mxu0 0.0
        %3726 = vmatpush1.xpose.msra.mxu0 0.0
        %3727 = vmatprep.subr.mxu0 0.0
        %3728 = vmatpush1.xpose.msra.mxu0 0.0
        %3729 = vmatprep.subr.mxu0 0.0
        %3730 = vmatpush1.xpose.msra.mxu0 0.0
        %3731 = vmatprep.subr.mxu0 0.0
        %3732 = vmatpush1.xpose.msra.mxu0 0.0
        %3733 = vmatprep.subr.mxu0 0.0
        %3734 = vmatpush1.xpose.msra.mxu0 0.0
        %3735 = vmatprep.subr.mxu0 0.0
        %3736 = vmatpush1.xpose.msra.mxu0 0.0
        %3737 = vmatprep.subr.mxu0 0.0
        %3738 = vmatpush1.xpose.msra.mxu0 0.0
        %3739 = vmatprep.subr.mxu0 0.0
        %3740 = vmatpush1.xpose.msra.mxu0 0.0
        %3741 = vmatprep.subr.mxu0 0.0
        %3742 = vmatpush1.xpose.msra.mxu0 0.0
        %3743 = vmatprep.subr.mxu0 0.0
        %3744 = vmatpush1.xpose.msra.mxu0 0.0
        %3745 = vmatprep.subr.mxu0 0.0
        %3746 = vmatpush1.xpose.msra.mxu0 0.0
        %3747 = vmatprep.subr.mxu0 0.0
        %3748 = vmatpush1.xpose.msra.mxu0 0.0
        %3749 = vmatprep.subr.mxu0 0.0
        %3750 = vmatpush1.xpose.msra.mxu0 0.0
        %3751 = vmatprep.subr.mxu0 0.0
        %3752 = vmatpush1.xpose.msra.mxu0 0.0
        %3753 = vmatprep.subr.mxu0 0.0
        %3754 = vmatpush1.xpose.msra.mxu0 0.0
        %3755 = vmatprep.subr.mxu0 0.0
        %3756 = vmatpush1.xpose.msra.mxu0 0.0
        %3757 = vmatprep.subr.mxu0 0.0
        %3758 = vmatpush1.xpose.msra.mxu0 0.0
        %3759 = vmatprep.subr.mxu0 0.0
        %3760 = vmatpush1.xpose.msra.mxu0 0.0
        %3761 = vmatprep.subr.mxu0 0.0
        %3762 = vmatpush1.xpose.msra.mxu0 0.0
        %3763 = vmatprep.subr.mxu0 0.0
        %3764 = vmatpush1.xpose.msra.mxu0 0.0
        %3765 = vmatprep.subr.mxu0 0.0
        %3766 = vmatpush1.xpose.msra.mxu0 0.0
        %3767 = vmatprep.subr.mxu0 0.0
        %3768 = vmatpush1.xpose.msra.mxu0 0.0
        %3769 = vmatprep.subr.mxu0 0.0
        %3770 = vmatpush1.xpose.msra.mxu0 0.0
        %3771 = vmatprep.subr.mxu0 0.0
        %3772 = vmatpush1.xpose.msra.mxu0 0.0
        %3773 = vmatprep.subr.mxu0 0.0
        %3774 = vmatpush1.xpose.msra.mxu0 0.0
        %3775 = vmatprep.subr.mxu0 0.0
        %3776 = vmatpush1.xpose.msra.mxu0 0.0
        %3777 = vmatprep.subr.mxu0 0.0
        %3778 = vmatpush1.xpose.msra.mxu0 0.0
        %3779 = vmatprep.subr.mxu0 0.0
        %3780 = vmatpush1.xpose.msra.mxu0 0.0
        %3781 = vmatprep.subr.mxu0 0.0
        %3782 = vmatpush1.xpose.msra.mxu0 0.0
        %3783 = vmatprep.subr.mxu0 0.0
        %3784 = vmatpush1.xpose.msra.mxu0 0.0
        %3785 = vmatprep.subr.mxu0 0.0
        %3786 = vmatpush1.xpose.msra.mxu0 0.0
        %3787 = vmatprep.mubr.f32.mxu0 0.0
        %3788 = vmatmul.mubr.f32.gmra.mrb[0].mxu0 %v3719
        %v3789 = vpop.f32.mrb[0].mxu0
        %v3790 = vadd.f32 %v1382, %v3789
        %v3791 = vpop.f32.mrb[0].mxu0
        %3792 = vdwg.mxu0
        %3793 = vrot.lane.b32.xlu0 %v2790, 104
        %v3794 = vpop.permute.xlu0 %3793
        %3795 = vrot.lane.b32.xlu0 %v2855, 104
        %v3796 = vpop.permute.xlu0 %3795
        %v3797 = vsel %vm1467, %v3794, 0
        %v3799 = vsel %vm1467, %v3796, 0
        %3801 = vmatprep.subr.mxu0 0.0
        %3802 = vmatpush1.xpose.msra.mxu0 %v3799
        %3803 = vmatprep.subr.mxu0 0.0
        %3804 = vmatpush1.xpose.msra.mxu0 0.0
        %3805 = vmatprep.subr.mxu0 0.0
        %3806 = vmatpush1.xpose.msra.mxu0 0.0
        %3807 = vmatprep.subr.mxu0 0.0
        %3808 = vmatpush1.xpose.msra.mxu0 0.0
        %3809 = vmatprep.subr.mxu0 0.0
        %3810 = vmatpush1.xpose.msra.mxu0 0.0
        %3811 = vmatprep.subr.mxu0 0.0
        %3812 = vmatpush1.xpose.msra.mxu0 0.0
        %3813 = vmatprep.subr.mxu0 0.0
        %3814 = vmatpush1.xpose.msra.mxu0 0.0
        %3815 = vmatprep.subr.mxu0 0.0
        %3816 = vmatpush1.xpose.msra.mxu0 0.0
        %3817 = vmatprep.subr.mxu0 0.0
        %3818 = vmatpush1.xpose.msra.mxu0 0.0
        %3819 = vmatprep.subr.mxu0 0.0
        %3820 = vmatpush1.xpose.msra.mxu0 0.0
        %3821 = vmatprep.subr.mxu0 0.0
        %3822 = vmatpush1.xpose.msra.mxu0 0.0
        %3823 = vmatprep.subr.mxu0 0.0
        %3824 = vmatpush1.xpose.msra.mxu0 0.0
        %3825 = vmatprep.subr.mxu0 0.0
        %3826 = vmatpush1.xpose.msra.mxu0 0.0
        %3827 = vmatprep.subr.mxu0 0.0
        %3828 = vmatpush1.xpose.msra.mxu0 0.0
        %3829 = vmatprep.subr.mxu0 0.0
        %3830 = vmatpush1.xpose.msra.mxu0 0.0
        %3831 = vmatprep.subr.mxu0 0.0
        %3832 = vmatpush1.xpose.msra.mxu0 0.0
        %3833 = vmatprep.subr.mxu0 0.0
        %3834 = vmatpush1.xpose.msra.mxu0 0.0
        %3835 = vmatprep.subr.mxu0 0.0
        %3836 = vmatpush1.xpose.msra.mxu0 0.0
        %3837 = vmatprep.subr.mxu0 0.0
        %3838 = vmatpush1.xpose.msra.mxu0 0.0
        %3839 = vmatprep.subr.mxu0 0.0
        %3840 = vmatpush1.xpose.msra.mxu0 0.0
        %3841 = vmatprep.subr.mxu0 0.0
        %3842 = vmatpush1.xpose.msra.mxu0 0.0
        %3843 = vmatprep.subr.mxu0 0.0
        %3844 = vmatpush1.xpose.msra.mxu0 0.0
        %3845 = vmatprep.subr.mxu0 0.0
        %3846 = vmatpush1.xpose.msra.mxu0 0.0
        %3847 = vmatprep.subr.mxu0 0.0
        %3848 = vmatpush1.xpose.msra.mxu0 0.0
        %3849 = vmatprep.subr.mxu0 0.0
        %3850 = vmatpush1.xpose.msra.mxu0 0.0
        %3851 = vmatprep.subr.mxu0 0.0
        %3852 = vmatpush1.xpose.msra.mxu0 0.0
        %3853 = vmatprep.subr.mxu0 0.0
        %3854 = vmatpush1.xpose.msra.mxu0 0.0
        %3855 = vmatprep.subr.mxu0 0.0
        %3856 = vmatpush1.xpose.msra.mxu0 0.0
        %3857 = vmatprep.subr.mxu0 0.0
        %3858 = vmatpush1.xpose.msra.mxu0 0.0
        %3859 = vmatprep.subr.mxu0 0.0
        %3860 = vmatpush1.xpose.msra.mxu0 0.0
        %3861 = vmatprep.subr.mxu0 0.0
        %3862 = vmatpush1.xpose.msra.mxu0 0.0
        %3863 = vmatprep.subr.mxu0 0.0
        %3864 = vmatpush1.xpose.msra.mxu0 0.0
        %3865 = vmatprep.mubr.f32.mxu0 0.0
        %3866 = vmatmul.mubr.f32.gmra.mrb[0].mxu0 %v3797
        %v3867 = vpop.f32.mrb[0].mxu0
        %v3868 = vadd.f32 %v1383, %v3867
        %v3869 = vpop.f32.mrb[0].mxu0
        %3870 = vdwg.mxu0
        %v3871 = vsel %vm1467, %v3790, -inf
        %3872 = vmax.xlane.f32.xlu0 %v3871
        %v3873 = vpop.xlane.xlu0 %3872
        %v3874 = vsel %vm1467, %v3868, -inf
        %3875 = vmax.xlane.f32.xlu0 %v3874
        %v3876 = vpop.xlane.xlu0 %3875
        %v3877 = vsub.f32 %v3790, %v3873
        %v3878 = vsub.f32 %v3868, %v3876
        %v3879 = vmul.f32 %v3877, 1.442695
        %v3880 = vpow.pop %v3879
        %v3881 = vmul.f32 %v3878, 1.442695
        %v3882 = vpow.pop %v3881
        %v3883 = vsel %vm1467, %v3880, 0.0
        %3884 = vadd.xlane.f32.xlu0 %v3883
        %v3885 = vpop.xlane.xlu0 %3884
        %v3886 = vsel %vm1467, %v3882, 0.0
        %3887 = vadd.xlane.f32.xlu0 %v3886
        %v3888 = vpop.xlane.xlu0 %3887
        %v3889 = vrcp.pop %v3885
        %v3890 = vrcp.pop %v3888
        %v3891 = vmul.f32 %v3880, %v3889
        %v3892 = vmul.f32 %v3882, %v3890
        %v3893 = vpack.c.bf16 %v3891, %v3891
        %v3894 = vpack.c.bf16 %v3892, %v3892
        %3895 = vrot.lane.b32.xlu0 %v2865, 72
        %v3896 = vpop.permute.xlu0 %3895
        %v3898 = vsel %vm1467, %v3893, 0
        %v3901 = vsel %vm1651, %v3896, 0
        %3903 = vmatprep.subr.bf16.mxu0 0
        %3904 = vmatpush1.bf16.msra.mxu0 %v3901
        %3905 = vmatprep.subr.bf16.mxu0 0
        %3906 = vmatpush1.bf16.msra.mxu0 0
        %3907 = vmatprep.subr.bf16.mxu0 0
        %3908 = vmatpush1.bf16.msra.mxu0 0
        %3909 = vmatprep.subr.bf16.mxu0 0
        %3910 = vmatpush1.bf16.msra.mxu0 0
        %3911 = vmatprep.subr.bf16.mxu0 0
        %3912 = vmatpush1.bf16.msra.mxu0 0
        %3913 = vmatprep.subr.bf16.mxu0 0
        %3914 = vmatpush1.bf16.msra.mxu0 0
        %3915 = vmatprep.subr.bf16.mxu0 0
        %3916 = vmatpush1.bf16.msra.mxu0 0
        %3917 = vmatprep.subr.bf16.mxu0 0
        %3918 = vmatpush1.bf16.msra.mxu0 0
        %3919 = vmatprep.subr.bf16.mxu0 0
        %3920 = vmatpush1.bf16.msra.mxu0 0
        %3921 = vmatprep.subr.bf16.mxu0 0
        %3922 = vmatpush1.bf16.msra.mxu0 0
        %3923 = vmatprep.subr.bf16.mxu0 0
        %3924 = vmatpush1.bf16.msra.mxu0 0
        %3925 = vmatprep.subr.bf16.mxu0 0
        %3926 = vmatpush1.bf16.msra.mxu0 0
        %3927 = vmatprep.subr.bf16.mxu0 0
        %3928 = vmatpush1.bf16.msra.mxu0 0
        %3929 = vmatprep.subr.bf16.mxu0 0
        %3930 = vmatpush1.bf16.msra.mxu0 0
        %3931 = vmatprep.subr.bf16.mxu0 0
        %3932 = vmatpush1.bf16.msra.mxu0 0
        %3933 = vmatprep.subr.bf16.mxu0 0
        %3934 = vmatpush1.bf16.msra.mxu0 0
        %3935 = vmatprep.mubr.bf16.mxu0 0
        %3936 = vmatmul.mubr.bf16.gmra.mrb[0].mxu0 %v3898
        %v3937 = vpop.f32.mrb[0].mxu0
        %v3938 = vadd.f32 0.0, %v3937
        %v3939 = vpop.f32.mrb[0].mxu0
        %v3940 = vpop.f32.mrb[0].mxu0
        %v3941 = vpop.f32.mrb[0].mxu0
        %3942 = vdwg.mxu0
        %3943 = vrot.lane.b32.xlu0 %v2866, 72
        %v3944 = vpop.permute.xlu0 %3943
        %v3946 = vsel %vm1467, %v3894, 0
        %v3949 = vsel %vm1651, %v3944, 0
        %3951 = vmatprep.subr.bf16.mxu0 0
        %3952 = vmatpush1.bf16.msra.mxu0 %v3949
        %3953 = vmatprep.subr.bf16.mxu0 0
        %3954 = vmatpush1.bf16.msra.mxu0 0
        %3955 = vmatprep.subr.bf16.mxu0 0
        %3956 = vmatpush1.bf16.msra.mxu0 0
        %3957 = vmatprep.subr.bf16.mxu0 0
        %3958 = vmatpush1.bf16.msra.mxu0 0
        %3959 = vmatprep.subr.bf16.mxu0 0
        %3960 = vmatpush1.bf16.msra.mxu0 0
        %3961 = vmatprep.subr.bf16.mxu0 0
        %3962 = vmatpush1.bf16.msra.mxu0 0
        %3963 = vmatprep.subr.bf16.mxu0 0
        %3964 = vmatpush1.bf16.msra.mxu0 0
        %3965 = vmatprep.subr.bf16.mxu0 0
        %3966 = vmatpush1.bf16.msra.mxu0 0
        %3967 = vmatprep.subr.bf16.mxu0 0
        %3968 = vmatpush1.bf16.msra.mxu0 0
        %3969 = vmatprep.subr.bf16.mxu0 0
        %3970 = vmatpush1.bf16.msra.mxu0 0
        %3971 = vmatprep.subr.bf16.mxu0 0
        %3972 = vmatpush1.bf16.msra.mxu0 0
        %3973 = vmatprep.subr.bf16.mxu0 0
        %3974 = vmatpush1.bf16.msra.mxu0 0
        %3975 = vmatprep.subr.bf16.mxu0 0
        %3976 = vmatpush1.bf16.msra.mxu0 0
        %3977 = vmatprep.subr.bf16.mxu0 0
        %3978 = vmatpush1.bf16.msra.mxu0 0
        %3979 = vmatprep.subr.bf16.mxu0 0
        %3980 = vmatpush1.bf16.msra.mxu0 0
        %3981 = vmatprep.subr.bf16.mxu0 0
        %3982 = vmatpush1.bf16.msra.mxu0 0
        %3983 = vmatprep.mubr.bf16.mxu0 0
        %3984 = vmatmul.mubr.bf16.gmra.mrb[0].mxu0 %v3946
        %v3985 = vpop.f32.mrb[0].mxu0
        %v3986 = vadd.f32 0.0, %v3985
        %v3987 = vpop.f32.mrb[0].mxu0
        %v3988 = vpop.f32.mrb[0].mxu0
        %v3989 = vpop.f32.mrb[0].mxu0
        %3990 = vdwg.mxu0
        %3993 = vrot.lane.b32.xlu0 %v3938, 24
        %v3994 = vpop.permute.xlu0 %3993
        %3995 = vrot.lane.b32.xlu0 %v3986, 24
        %v3996 = vpop.permute.xlu0 %3995
        %3999 = vst.msk [vmem:[#allocation3] sm:$0xff] %vm2604, %v3994
        %4000 = vst.msk [vmem:[#allocation3 + $0x8] sm:$0xff] %vm2604, %v3996
        %v4001 = vld [vmem:[#allocation3] sm:$0xff]
        %v4002 = vld [vmem:[#allocation3 + $0x8] sm:$0xff]
        %v4003 = vpack.c.bf16 %v4002, %v4001
        %v4005 = vlaneseq
        %v4006 = vshrl.u32 %v4005, 7
        %v4007 = vsub.s32 0, %v4006
        %v4008 = vrot.slane %v2862, %v4007
        %v4014 = vunpack.c.l.b16 %v2858
        %v4015 = vunpack.c.l.b16 %v2859
        %v4016 = vunpack.c.l.b16 %v2860
        %v4017 = vunpack.c.l.b16 %v2861
        %v4018 = vpack.c.b16 %v4015, %v4014
        %v4019 = vpack.c.b16 %v4017, %v4016
        %v4023 = vsel %vm1408, %v4003, 0
        %4025 = vmatprep.subr.bf16.mxu0 0
        %4026 = vmatpush1.bf16.msra.mxu0 %v4018
        %4027 = vmatprep.subr.bf16.mxu0 0
        %4028 = vmatpush1.bf16.msra.mxu0 %v4019
        %4029 = vmatprep.subr.bf16.mxu0 0
        %4030 = vmatpush1.bf16.msra.mxu0 0
        %4031 = vmatprep.subr.bf16.mxu0 0
        %4032 = vmatpush1.bf16.msra.mxu0 0
        %4033 = vmatprep.subr.bf16.mxu0 0
        %4034 = vmatpush1.bf16.msra.mxu0 0
        %4035 = vmatprep.subr.bf16.mxu0 0
        %4036 = vmatpush1.bf16.msra.mxu0 0
        %4037 = vmatprep.subr.bf16.mxu0 0
        %4038 = vmatpush1.bf16.msra.mxu0 0
        %4039 = vmatprep.subr.bf16.mxu0 0
        %4040 = vmatpush1.bf16.msra.mxu0 0
        %4041 = vmatprep.subr.bf16.mxu0 0
        %4042 = vmatpush1.bf16.msra.mxu0 0
        %4043 = vmatprep.subr.bf16.mxu0 0
        %4044 = vmatpush1.bf16.msra.mxu0 0
        %4045 = vmatprep.subr.bf16.mxu0 0
        %4046 = vmatpush1.bf16.msra.mxu0 0
        %4047 = vmatprep.subr.bf16.mxu0 0
        %4048 = vmatpush1.bf16.msra.mxu0 0
        %4049 = vmatprep.subr.bf16.mxu0 0
        %4050 = vmatpush1.bf16.msra.mxu0 0
        %4051 = vmatprep.subr.bf16.mxu0 0
        %4052 = vmatpush1.bf16.msra.mxu0 0
        %4053 = vmatprep.subr.bf16.mxu0 0
        %4054 = vmatpush1.bf16.msra.mxu0 0
        %4055 = vmatprep.subr.bf16.mxu0 0
        %4056 = vmatpush1.bf16.msra.mxu0 0
        %4057 = vmatprep.mubr.bf16.mxu0 0
        %4058 = vmatmul.mubr.bf16.gmra.mrb[0].mxu0 %v4023
        %v4059 = vpop.f32.mrb[0].mxu0
        %v4060 = vadd.f32 %v4008, %v4059
        %v4061 = vpop.f32.mrb[0].mxu0
        %v4062 = vpop.f32.mrb[0].mxu0
        %v4063 = vadd.f32 %v4008, %v4062
        %v4064 = vpop.f32.mrb[0].mxu0
        %4065 = vdwg.mxu0
        %v4066 = vadd.f32 %v4060, %v2718
        %v4067 = vadd.f32 %v4063, %v2719
        %v4068 = vsel %vm1408, %v4066, 0.0
        %4069 = vadd.xlane.f32.xlu0 %v4068
        %v4070 = vpop.xlane.xlu0 %4069
        %v4071 = vsel %vm1408, %v4067, 0.0
        %4072 = vadd.xlane.f32.xlu0 %v4071
        %v4073 = vpop.xlane.xlu0 %4072
        %v4074 = vmul.f32 %v4066, %v4066
        %v4075 = vmul.f32 %v4067, %v4067
        %v4076 = vsel %vm1408, %v4074, 0.0
        %4077 = vadd.xlane.f32.xlu0 %v4076
        %v4078 = vpop.xlane.xlu0 %4077
        %v4079 = vsel %vm1408, %v4075, 0.0
        %4080 = vadd.xlane.f32.xlu0 %v4079
        %v4081 = vpop.xlane.xlu0 %4080
        %v4082 = vmul.f32 %v4070, 0.03125
        %v4083 = vmul.f32 %v4073, 0.03125
        %v4084 = vmul.f32 %v4078, 0.03125
        %v4085 = vmul.f32 %v4081, 0.03125
        %v4086 = vmul.f32 %v4082, %v4082
        %v4087 = vmul.f32 %v4083, %v4083
        %v4088 = vsub.f32 %v4084, %v4086
        %v4089 = vsub.f32 %v4085, %v4087
        %v4090 = vsub.f32 %v4066, %v4082
        %v4091 = vsub.f32 %v4067, %v4083
        %v4092 = vadd.f32 %v4088, 1e-06
        %v4093 = vadd.f32 %v4089, 1e-06
        %v4094 = vrsqrt.pop %v4092
        %v4095 = vrsqrt.pop %v4093
        %v4096 = vmul.f32 %v4090, %v4094
        %v4097 = vmul.f32 %v4091, %v4095
        %v4099 = vlaneseq
        %v4100 = vshrl.u32 %v4099, 7
        %v4101 = vsub.s32 0, %v4100
        %v4102 = vrot.slane %v2863, %v4101
        %v4104 = vmul.f32 %v4096, %v4102
        %v4105 = vmul.f32 %v4097, %v4102
        %v4107 = vlaneseq
        %v4108 = vshrl.u32 %v4107, 7
        %v4109 = vsub.s32 0, %v4108
        %v4110 = vrot.slane %v2864, %v4109
        %v4112 = vadd.f32 %v4104, %v4110
        %v4113 = vadd.f32 %v4105, %v4110
        %v4114 = vld [vmem:[%s1180] sm:$0xf]
        %v4115 = vld [vmem:[%s1180 + $0x4] sm:$0xf]
        %v4116 = vld [vmem:[%s1180 + $0x8] sm:$0xf]
        %v4117 = vld [vmem:[%s1180 + $0xc] sm:$0xf]
        %v4118 = vld [vmem:[%s1348] sm:$0x1]
        %v4119 = vld [vmem:[%s1353] sm:$0xf]
        %v4120 = vld [vmem:[%s1353 + $0x4] sm:$0xf]
        %v4121 = vld [vmem:[%s1353 + $0x8] sm:$0xf]
        %v4122 = vld [vmem:[%s1353 + $0xc] sm:$0xf]
        %v4123 = vld [vmem:[%s1353 + $0x10] sm:$0xf]
        %v4124 = vld [vmem:[%s1353 + $0x14] sm:$0xf]
        %v4125 = vld [vmem:[%s1353 + $0x18] sm:$0xf]
        %v4126 = vld [vmem:[%s1353 + $0x1c] sm:$0xf]
        %v4127 = vld [vmem:[%s1356] sm:$0x1]
        %v4128 = vld [vmem:[%s1359] sm:$0x1]
        %v4129 = vld [vmem:[%s1362] sm:$0x1]
        %v4130 = vpack.c.bf16 %v4113, %v4112
        %v4132 = vlaneseq
        %v4133 = vshrl.u32 %v4132, 7
        %v4134 = vsub.s32 0, %v4133
        %v4135 = vrot.slane %v4118, %v4134
        %v4141 = vunpack.c.l.b16 %v4114
        %v4142 = vunpack.c.l.b16 %v4115
        %v4143 = vunpack.c.l.b16 %v4116
        %v4144 = vunpack.c.l.b16 %v4117
        %v4145 = vpack.c.b16 %v4142, %v4141
        %v4146 = vpack.c.b16 %v4144, %v4143
        %v4150 = vsel %vm1408, %v4130, 0
        %4152 = vmatprep.subr.bf16.mxu0 0
        %4153 = vmatpush1.bf16.msra.mxu0 %v4145
        %4154 = vmatprep.subr.bf16.mxu0 0
        %4155 = vmatpush1.bf16.msra.mxu0 %v4146
        %4156 = vmatprep.subr.bf16.mxu0 0
        %4157 = vmatpush1.bf16.msra.mxu0 0
        %4158 = vmatprep.subr.bf16.mxu0 0
        %4159 = vmatpush1.bf16.msra.mxu0 0
        %4160 = vmatprep.subr.bf16.mxu0 0
        %4161 = vmatpush1.bf16.msra.mxu0 0
        %4162 = vmatprep.subr.bf16.mxu0 0
        %4163 = vmatpush1.bf16.msra.mxu0 0
        %4164 = vmatprep.subr.bf16.mxu0 0
        %4165 = vmatpush1.bf16.msra.mxu0 0
        %4166 = vmatprep.subr.bf16.mxu0 0
        %4167 = vmatpush1.bf16.msra.mxu0 0
        %4168 = vmatprep.subr.bf16.mxu0 0
        %4169 = vmatpush1.bf16.msra.mxu0 0
        %4170 = vmatprep.subr.bf16.mxu0 0
        %4171 = vmatpush1.bf16.msra.mxu0 0
        %4172 = vmatprep.subr.bf16.mxu0 0
        %4173 = vmatpush1.bf16.msra.mxu0 0
        %4174 = vmatprep.subr.bf16.mxu0 0
        %4175 = vmatpush1.bf16.msra.mxu0 0
        %4176 = vmatprep.subr.bf16.mxu0 0
        %4177 = vmatpush1.bf16.msra.mxu0 0
        %4178 = vmatprep.subr.bf16.mxu0 0
        %4179 = vmatpush1.bf16.msra.mxu0 0
        %4180 = vmatprep.subr.bf16.mxu0 0
        %4181 = vmatpush1.bf16.msra.mxu0 0
        %4182 = vmatprep.subr.bf16.mxu0 0
        %4183 = vmatpush1.bf16.msra.mxu0 0
        %4184 = vmatprep.mubr.bf16.mxu0 0
        %4185 = vmatmul.mubr.bf16.gmra.mrb[0].mxu0 %v4150
        %v4186 = vpop.f32.mrb[0].mxu0
        %v4187 = vadd.f32 %v4135, %v4186
        %v4188 = vpop.f32.mrb[0].mxu0
        %v4189 = vpop.f32.mrb[0].mxu0
        %v4190 = vadd.f32 %v4135, %v4189
        %v4191 = vpop.f32.mrb[0].mxu0
        %4192 = vdwg.mxu0
        %v4193 = vmax.f32 %v4187, 0.0
        %v4194 = vmax.f32 %v4190, 0.0
        %v4195 = vpack.c.bf16 %v4194, %v4193
        %v4197 = vlaneseq
        %v4198 = vshrl.u32 %v4197, 7
        %v4199 = vsub.s32 0, %v4198
        %v4200 = vrot.slane %v4127, %v4199
        %v4210 = vunpack.c.l.b16 %v4119
        %v4211 = vunpack.c.l.b16 %v4120
        %v4212 = vunpack.c.l.b16 %v4121
        %v4213 = vunpack.c.l.b16 %v4122
        %v4214 = vunpack.c.l.b16 %v4123
        %v4215 = vunpack.c.l.b16 %v4124
        %v4216 = vunpack.c.l.b16 %v4125
        %v4217 = vunpack.c.l.b16 %v4126
        %v4218 = vpack.c.b16 %v4211, %v4210
        %v4219 = vpack.c.b16 %v4213, %v4212
        %v4220 = vpack.c.b16 %v4215, %v4214
        %v4221 = vpack.c.b16 %v4217, %v4216
        %vm4226 = vcmask 523264
        %v4228 = vsel %vm4226, %v4195, 0
        %4230 = vmatprep.subr.bf16.mxu0 0
        %4231 = vmatpush1.bf16.msra.mxu0 %v4218
        %4232 = vmatprep.subr.bf16.mxu0 0
        %4233 = vmatpush1.bf16.msra.mxu0 %v4219
        %4234 = vmatprep.subr.bf16.mxu0 0
        %4235 = vmatpush1.bf16.msra.mxu0 %v4220
        %4236 = vmatprep.subr.bf16.mxu0 0
        %4237 = vmatpush1.bf16.msra.mxu0 %v4221
        %4238 = vmatprep.subr.bf16.mxu0 0
        %4239 = vmatpush1.bf16.msra.mxu0 0
        %4240 = vmatprep.subr.bf16.mxu0 0
        %4241 = vmatpush1.bf16.msra.mxu0 0
        %4242 = vmatprep.subr.bf16.mxu0 0
        %4243 = vmatpush1.bf16.msra.mxu0 0
        %4244 = vmatprep.subr.bf16.mxu0 0
        %4245 = vmatpush1.bf16.msra.mxu0 0
        %4246 = vmatprep.subr.bf16.mxu0 0
        %4247 = vmatpush1.bf16.msra.mxu0 0
        %4248 = vmatprep.subr.bf16.mxu0 0
        %4249 = vmatpush1.bf16.msra.mxu0 0
        %4250 = vmatprep.subr.bf16.mxu0 0
        %4251 = vmatpush1.bf16.msra.mxu0 0
        %4252 = vmatprep.subr.bf16.mxu0 0
        %4253 = vmatpush1.bf16.msra.mxu0 0
        %4254 = vmatprep.subr.bf16.mxu0 0
        %4255 = vmatpush1.bf16.msra.mxu0 0
        %4256 = vmatprep.subr.bf16.mxu0 0
        %4257 = vmatpush1.bf16.msra.mxu0 0
        %4258 = vmatprep.subr.bf16.mxu0 0
        %4259 = vmatpush1.bf16.msra.mxu0 0
        %4260 = vmatprep.subr.bf16.mxu0 0
        %4261 = vmatpush1.bf16.msra.mxu0 0
        %4262 = vmatprep.mubr.bf16.mxu0 0
        %4263 = vmatmul.mubr.bf16.gmra.mrb[0].mxu0 %v4228
        %v4264 = vpop.f32.mrb[0].mxu0
        %v4265 = vadd.f32 %v4200, %v4264
        %v4266 = vpop.f32.mrb[0].mxu0
        %v4267 = vpop.f32.mrb[0].mxu0
        %v4268 = vadd.f32 %v4200, %v4267
        %v4269 = vpop.f32.mrb[0].mxu0
        %4270 = vdwg.mxu0
        %v4271 = vadd.f32 %v4265, %v4112
        %v4272 = vadd.f32 %v4268, %v4113
        %v4273 = vsel %vm1408, %v4271, 0.0
        %4274 = vadd.xlane.f32.xlu0 %v4273
        %v4275 = vpop.xlane.xlu0 %4274
        %v4276 = vsel %vm1408, %v4272, 0.0
        %4277 = vadd.xlane.f32.xlu0 %v4276
        %v4278 = vpop.xlane.xlu0 %4277
        %v4279 = vmul.f32 %v4271, %v4271
        %v4280 = vmul.f32 %v4272, %v4272
        %v4281 = vsel %vm1408, %v4279, 0.0
        %4282 = vadd.xlane.f32.xlu0 %v4281
        %v4283 = vpop.xlane.xlu0 %4282
        %v4284 = vsel %vm1408, %v4280, 0.0
        %4285 = vadd.xlane.f32.xlu0 %v4284
        %v4286 = vpop.xlane.xlu0 %4285
        %v4287 = vmul.f32 %v4275, 0.03125
        %v4288 = vmul.f32 %v4278, 0.03125
        %v4289 = vmul.f32 %v4283, 0.03125
        %v4290 = vmul.f32 %v4286, 0.03125
        %v4291 = vmul.f32 %v4287, %v4287
        %v4292 = vmul.f32 %v4288, %v4288
        %v4293 = vsub.f32 %v4289, %v4291
        %v4294 = vsub.f32 %v4290, %v4292
        %v4295 = vsub.f32 %v4271, %v4287
        %v4296 = vsub.f32 %v4272, %v4288
        %v4297 = vadd.f32 %v4293, 1e-06
        %v4298 = vadd.f32 %v4294, 1e-06
        %v4299 = vrsqrt.pop %v4297
        %v4300 = vrsqrt.pop %v4298
        %v4301 = vmul.f32 %v4295, %v4299
        %v4302 = vmul.f32 %v4296, %v4300
        %v4304 = vlaneseq
        %v4305 = vshrl.u32 %v4304, 7
        %v4306 = vsub.s32 0, %v4305
        %v4307 = vrot.slane %v4128, %v4306
        %v4309 = vmul.f32 %v4301, %v4307
        %v4310 = vmul.f32 %v4302, %v4307
        %v4312 = vlaneseq
        %v4313 = vshrl.u32 %v4312, 7
        %v4314 = vsub.s32 0, %v4313
        %v4315 = vrot.slane %v4129, %v4314
        %v4317 = vadd.f32 %v4309, %v4315
        %v4318 = vadd.f32 %v4310, %v4315
        %4319 = vst.msk [vmem:[#allocation2] sm:$0xff] %vm1408, %v4317
        %4320 = vst.msk [vmem:[#allocation2 + $0x8] sm:$0xff] %vm1408, %v4318
        %p4321 = scmp.eq.s32.totalorder %s57, 1
        // Predicated region
        $region193: #{tpu_custom_call.1} parent=127 // pred_check
          %p4322 = pneg %p4321
        $region194: #{tpu_custom_call.1} parent=127 // pred_check_branch
          %4324 = sbr.rel (%p4322) target = $region196
        $region195: #{tpu_custom_call.1} parent=127 // pred_region
          %v4325 = vld [vmem:[%s25] sm:$0x1]
          %v4326 = vld [vmem:[%s26] sm:$0x1]
          %v4327 = vsel %vm1408, %v4317, 0.0
          %4328 = vadd.xlane.f32.xlu0 %v4327
          %v4329 = vpop.xlane.xlu0 %4328
          %v4330 = vsel %vm1408, %v4318, 0.0
          %4331 = vadd.xlane.f32.xlu0 %v4330
          %v4332 = vpop.xlane.xlu0 %4331
          %v4333 = vmul.f32 %v4317, %v4317
          %v4334 = vmul.f32 %v4318, %v4318
          %v4335 = vsel %vm1408, %v4333, 0.0
          %4336 = vadd.xlane.f32.xlu0 %v4335
          %v4337 = vpop.xlane.xlu0 %4336
          %v4338 = vsel %vm1408, %v4334, 0.0
          %4339 = vadd.xlane.f32.xlu0 %v4338
          %v4340 = vpop.xlane.xlu0 %4339
          %v4341 = vmul.f32 %v4329, 0.03125
          %v4342 = vmul.f32 %v4332, 0.03125
          %v4343 = vmul.f32 %v4337, 0.03125
          %v4344 = vmul.f32 %v4340, 0.03125
          %v4345 = vmul.f32 %v4341, %v4341
          %v4346 = vmul.f32 %v4342, %v4342
          %v4347 = vsub.f32 %v4343, %v4345
          %v4348 = vsub.f32 %v4344, %v4346
          %v4349 = vsub.f32 %v4317, %v4341
          %v4350 = vsub.f32 %v4318, %v4342
          %v4351 = vadd.f32 %v4347, 1e-06
          %v4352 = vadd.f32 %v4348, 1e-06
          %v4353 = vrsqrt.pop %v4351
          %v4354 = vrsqrt.pop %v4352
          %v4355 = vmul.f32 %v4349, %v4353
          %v4356 = vmul.f32 %v4350, %v4354
          %v4358 = vlaneseq
          %v4359 = vshrl.u32 %v4358, 7
          %v4360 = vsub.s32 0, %v4359
          %v4361 = vrot.slane %v4325, %v4360
          %v4363 = vmul.f32 %v4355, %v4361
          %v4364 = vmul.f32 %v4356, %v4361
          %v4366 = vlaneseq
          %v4367 = vshrl.u32 %v4366, 7
          %v4368 = vsub.s32 0, %v4367
          %v4369 = vrot.slane %v4326, %v4368
          %v4371 = vadd.f32 %v4363, %v4369
          %v4372 = vadd.f32 %v4364, %v4369
          %4373 = vst.msk [vmem:[#allocation28] sm:$0xff] %vm1408, %v4371
          %4374 = vst.msk [vmem:[#allocation28 + $0x8] sm:$0xff] %vm1408, %v4372
        $region196: #{tpu_custom_call.1} parent=127 // pred_fallthru
          _
        // Predicated region
        $region197: #{tpu_custom_call.1} parent=127 // pred_check
          %p4375 = pneg %p737
        $region198: #{tpu_custom_call.1} parent=127 // pred_check_branch
          %4377 = sbr.rel (%p4375) target = $region200
        $region199: #{tpu_custom_call.1} parent=127 // pred_region
          %s4379 = ssub.s32 256, 256
          %4380 = vsyncadd [#allocation6], %s4379
          %s4381 = sshll.u32 [#allocation28], 4
          %s4382 = int_to_ptr.vmem [resolvable:$true] %s4381
          %4387 = dma.vmem_to_hbm [thread:$0]  %s4382, 256, %s27, [#allocation6], 128, 128, 8
        $region200: #{tpu_custom_call.1} parent=127 // pred_fallthru
          _
        // Predicated region
        $region201: #{tpu_custom_call.1} parent=127 // pred_check
          %p4388 = pneg %p737
        $region202: #{tpu_custom_call.1} parent=127 // pred_check_branch
          %4390 = sbr.rel (%p4388) target = $region204
        $region203: #{tpu_custom_call.1} parent=127 // pred_region
          %4391 = dma.done [#allocation6], 256
        $region204: #{tpu_custom_call.1} parent=127 // pred_fallthru
          _
      $region128: #{tpu_custom_call.1} parent=5 // pred_fallthru
        _
      %p4392 = scmp.le.s32.totalorder 2, %s52
      // Predicated region
      $region205: #{tpu_custom_call.1} parent=5 // pred_check
        %p4393 = pneg %p4392
      $region206: #{tpu_custom_call.1} parent=5 // pred_check_branch
        %4395 = sbr.rel (%p4393) target = $region208
      $region207: #{tpu_custom_call.1} parent=5 // pred_region
        %s4396 = ssub.s32 %s52, 2
      $region208: #{tpu_custom_call.1} parent=5 // pred_fallthru
        _
    $region6: #{tpu_custom_call.1} parent=1 // loop_footer
      %s56 = sadd.s32 1, %s52
    $region7: #{tpu_custom_call.1} parent=1 // loop_footer_branch
      %51 = sbr.rel target = $region3
    $region8: #{tpu_custom_call.1} parent=1 // loop_exit
      _
    %4397 = vsyncpa [#allocation5], 1
    %s4398 = scalar_lea.sflag [#allocation5], 1
    %4399 = vsyncpa %s4398, 1
    %4400 = vsyncpa [#allocation8], 1
    %4401 = vsyncpa [#allocation11], 1
    %4402 = vsyncpa [#allocation14], 1
    %s4403 = scalar_lea.sflag [#allocation14], 1
    %4404 = vsyncpa %s4403, 1
    %4405 = vsyncpa [#allocation17], 1
    %s4406 = scalar_lea.sflag [#allocation17], 1
    %4407 = vsyncpa %s4406, 1
    %4408 = vsyncpa [#allocation20], 1
    %s4409 = scalar_lea.sflag [#allocation20], 1
    %4410 = vsyncpa %s4409, 1
    %4411 = vsyncpa [#allocation23], 1
    %s4412 = scalar_lea.sflag [#allocation23], 1
    %4413 = vsyncpa %s4412, 1
    %4414 = vsyncpa [#allocation26], 1
    %s4415 = scalar_lea.sflag [#allocation26], 1
    %4416 = vsyncpa %s4415, 1
    %4417 = vsyncpa [#allocation6], 1
    %s4418 = scalar_lea.sflag [#allocation6], 1
    %4419 = vsyncpa %s4418, 1

</llo_original>
